<compile_context>
chip_gen: v7x
topology: tpu7x:2x2x1
jax: 0.10.0
libtpu: 0.0.40
codegen_flags: <defaults>
</compile_context>

<pallas_src>
import functools
import math

import jax
import jax.numpy as jnp
from jax.experimental import pallas as pl
from jax.experimental.pallas import tpu as pltpu

# MXU operand dtype (accumulation is always f32).  Set to jnp.float32 for bit-exact
# f32 matmuls; bf16 halves weight DMA/VMEM and feeds the v6e/v7x MXU at full rate.
MXU_DTYPE = jnp.bfloat16


def _round_up(n, m):
    return ((n + m - 1) // m) * m


# ---------------------------------------------------------------------------
# Fused kernel: one grid step == one (batch_block, layer) pair.
# ---------------------------------------------------------------------------
def _transformer_stack_kernel(num_heads, head_dim, d_real, batch_block,
                              x_ref,
                              wq_ref, bq_ref, wk_ref, bk_ref, wv_ref, bv_ref,
                              wo_ref, bo_ref, ln1_g_ref, ln1_b_ref,
                              w1_ref, b1_ref, w2_ref, b2_ref,
                              ln2_g_ref, ln2_b_ref,
                              o_ref):
    eps = 1e-6                      # nn.LayerNorm(embed_dim, eps=1e-06) in the reference
    H, hd = num_heads, head_dim
    _, L, DP = x_ref.shape

    # Layer 0: load the (padded) input activation into the resident output block.
    @pl.when(pl.program_id(1) == 0)
    def _():
        o_ref[...] = x_ref[...]

    # This layer's parameters (leading layer-block dim of size 1 stripped).
    wq, bq = wq_ref[0], bq_ref[0]          # (H, DP, hd) bf16 / (H, 1, hd) f32
    wk, bk = wk_ref[0], bk_ref[0]
    wv, bv = wv_ref[0], bv_ref[0]
    wo, bo = wo_ref[0], bo_ref[0]          # (H, hd, DP) bf16 / (1, DP) f32
    g1, be1 = ln1_g_ref[0], ln1_b_ref[0]   # (1, DP) f32
    w1, b1 = w1_ref[0], b1_ref[0]          # (DP, MP) bf16 / (1, MP) f32
    w2, b2 = w2_ref[0], b2_ref[0]          # (MP, DP) bf16 / (1, DP) f32
    g2, be2 = ln2_g_ref[0], ln2_b_ref[0]

    # Mask selecting the real (non-padding) embed columns.  Padding columns of the
    # activation are exactly zero, so sums over the full padded width are correct.
    lane_mask = (jax.lax.broadcasted_iota(jnp.int32, (1, DP), 1) < d_real
                 ).astype(jnp.float32)
    inv_d = 1.0 / d_real
    scale = 1.0 / math.sqrt(hd)

    def layer_norm(t, gamma, beta):        # t: (L, DP) f32, stats over real d_real cols
        mu = jnp.sum(t, axis=-1, keepdims=True) * inv_d
        diff = (t - mu) * lane_mask
        var = jnp.sum(diff * diff, axis=-1, keepdims=True) * inv_d
        return diff * jax.lax.rsqrt(var + eps) * gamma + beta

    for bi in range(batch_block):          # static unroll; batch_block is small
        xb = o_ref[bi]                                            # (L, DP) f32
        xb_h = jnp.broadcast_to(xb.astype(MXU_DTYPE), (H, L, DP))

        # Per-head QKV projections as head-batched matmuls (no lane-axis slicing;
        # total FLOPs equal the fused (L,D)x(D,D) projection).
        q = jnp.einsum('hld,hdf->hlf', xb_h, wq,
                       preferred_element_type=jnp.float32) + bq   # (H, L, hd)
        k = jnp.einsum('hld,hdf->hlf', xb_h, wk,
                       preferred_element_type=jnp.float32) + bk
        v = jnp.einsum('hld,hdf->hlf', xb_h, wv,
                       preferred_element_type=jnp.float32) + bv

        # GeneralizedDotProductAttention (defaults): scale queries by 1/sqrt(head_dim),
        # softmax over keys.  Logits / PV stay f32: the contraction dims are only
        # head_dim / L, so bf16 buys nothing here and would add softmax error.
        logits = jnp.einsum('hqd,hkd->hqk', q * scale, k,
                            preferred_element_type=jnp.float32)   # (H, L, L)
        m = jnp.max(logits, axis=-1, keepdims=True)
        p = jnp.exp(logits - m)
        denom = jnp.sum(p, axis=-1, keepdims=True)
        attn = p * pl.reciprocal(denom, approx=True)
        upd = jnp.einsum('hqk,hkd->hqd', attn, v,
                         preferred_element_type=jnp.float32)      # (H, L, hd)

        # dense_o applied to the concatenated heads == sum over heads of
        # upd[h] @ Wo[h*hd:(h+1)*hd, :]  (avoids any (H,L,hd)->(L,H*hd) relayout).
        proj = jnp.einsum('hld,hdf->hlf', upd.astype(MXU_DTYPE), wo,
                          preferred_element_type=jnp.float32)     # (H, L, DP)
        attn_out = jnp.sum(proj, axis=0) + bo                     # (L, DP)

        # Post-norm path: residual -> LayerNorm -> MLP -> residual -> LayerNorm.
        x1 = attn_out + xb
        y = layer_norm(x1, g1, be1)

        # TODO(synk): misc.MLP is not provided; assuming Linear -> ReLU -> Linear.
        h1 = jnp.dot(y.astype(MXU_DTYPE), w1,
                     preferred_element_type=jnp.float32) + b1     # (L, MP)
        h1 = jnp.maximum(h1, 0.0)
        z = jnp.dot(h1.astype(MXU_DTYPE), w2,
                    preferred_element_type=jnp.float32) + b2      # (L, DP)
        z = z + y
        o_ref[bi] = layer_norm(z, g2, be2)


# ---------------------------------------------------------------------------
# Parameter packing: per-head split, lane-dense zero padding, layer stacking.
# ---------------------------------------------------------------------------
def pack_params(params, num_heads, embed_dim, mlp_size, mxu_dtype=None):
    if mxu_dtype is None:
        mxu_dtype = MXU_DTYPE
    D, H = embed_dim, num_heads
    assert D % H == 0
    hd = D // H
    DP = max(128, _round_up(D, 128))        # lane-dense padded embed / qkv dim
    MP = max(128, _round_up(mlp_size, 128))  # lane-dense padded MLP hidden dim

    def head_split_in(w):    # [in=D, out=D] -> (H, DP, hd): per-head out cols, padded in-rows
        w = w.reshape(D, H, hd).transpose(1, 0, 2)
        return jnp.pad(w, ((0, 0), (0, DP - D), (0, 0))).astype(mxu_dtype)

    def head_split_out(w):   # [in=D, out=D] -> (H, hd, DP): per-head in rows, padded out-cols
        w = w.reshape(H, hd, D)
        return jnp.pad(w, ((0, 0), (0, 0), (0, DP - D))).astype(mxu_dtype)

    def vec_pad(v, n):       # (m,) -> (1, n) zero padded, f32
        return jnp.pad(v, (0, n - v.shape[0])).reshape(1, n).astype(jnp.float32)

    keys = ("wq", "bq", "wk", "bk", "wv", "bv", "wo", "bo",
            "ln1_g", "ln1_b", "w1", "b1", "w2", "b2", "ln2_g", "ln2_b")
    out = {k: [] for k in keys}
    eye = jnp.eye(D, dtype=jnp.float32)

    for p in params:
        out["wq"].append(head_split_in(p["wq"]))
        out["bq"].append(p["bq"].reshape(H, 1, hd).astype(jnp.float32))
        out["wk"].append(head_split_in(p["wk"]))
        out["bk"].append(p["bk"].reshape(H, 1, hd).astype(jnp.float32))
        out["wv"].append(head_split_in(p["wv"]))
        out["bv"].append(p["bv"].reshape(H, 1, hd).astype(jnp.float32))
        if H > 1:                      # multi_head == True: real dense_o
            wo_w, bo_b = p["wo"], p["bo"]
        else:                          # multi_head == False: squeeze == identity projection
            wo_w, bo_b = eye, jnp.zeros((D,), jnp.float32)
        out["wo"].append(head_split_out(wo_w))
        out["bo"].append(vec_pad(bo_b, DP))
        out["ln1_g"].append(vec_pad(p["ln1_g"], DP))
        out["ln1_b"].append(vec_pad(p["ln1_b"], DP))
        out["w1"].append(jnp.pad(p["w1"], ((0, DP - D), (0, MP - mlp_size))).astype(mxu_dtype))
        out["b1"].append(vec_pad(p["b1"], MP))
        out["w2"].append(jnp.pad(p["w2"], ((0, MP - mlp_size), (0, DP - D))).astype(mxu_dtype))
        out["b2"].append(vec_pad(p["b2"], DP))
        out["ln2_g"].append(vec_pad(p["ln2_g"], DP))
        out["ln2_b"].append(vec_pad(p["ln2_b"], DP))

    return {k: jnp.stack(v) for k, v in out.items()}


# ---------------------------------------------------------------------------
# Wrapper: single fused pallas_call over (batch_blocks, num_layers).
# ---------------------------------------------------------------------------
def transformer_forward(x, packed, batch_block=None):
    """Transformer.forward: queries pass sequentially through all blocks.

    Note: the torch Transformer forwards (inputs, padding_mask, train) into each block
    but TransformerBlock.forward only consumes the queries; we match that behaviour.
    """
    B, L, D = x.shape
    num_layers, H = int(packed["wq"].shape[0]), int(packed["wq"].shape[1])
    DP, hd = int(packed["wq"].shape[2]), int(packed["wq"].shape[3])
    MP = int(packed["w1"].shape[-1])
    assert D == H * hd, "embed_dim must equal num_heads * head_dim"

    if batch_block is None:
        batch_block = B if B <= 8 else 8   # whole (small) batch per grid step
    assert B % batch_block == 0
    nb = B // batch_block

    # Lane-dense activation: zero-pad the embed dim to DP (multiple of 128).
    xp = jnp.pad(x.astype(jnp.float32), ((0, 0), (0, 0), (0, DP - D)))

    names = ("wq", "bq", "wk", "bk", "wv", "bv", "wo", "bo",
             "ln1_g", "ln1_b", "w1", "b1", "w2", "b2", "ln2_g", "ln2_b")
    weights = [packed[n] for n in names]

    # Activation / output block: whole batch block, lane-dense last dim, constant
    # block index over the layer axis -> resident in VMEM across all layers.
    act_spec = pl.BlockSpec((batch_block, L, DP), lambda b, l: (b, 0, 0))

    def w_spec(arr):
        zeros = (0,) * (arr.ndim - 1)
        return pl.BlockSpec((1,) + arr.shape[1:],
                            lambda b, l, _z=zeros: (l,) + _z)

    kernel = functools.partial(_transformer_stack_kernel, H, hd, D, batch_block)

    # Advisory cost estimate (helps XLA schedule around the fused call).
    flops = int(num_layers * B * (
        3 * 2 * L * DP * D              # QKV projections
        + 2 * 2 * H * L * L * hd        # logits + attn @ V
        + 2 * L * D * DP                # output projection
        + 2 * L * DP * MP + 2 * L * MP * DP))   # MLP
    transcendentals = int(num_layers * B * (H * L * L + 4 * L))
    bytes_accessed = int(xp.size * 4 + B * L * DP * 4 +
                         nb * sum(int(w.size) * w.dtype.itemsize for w in weights))

    out_padded = pl.pallas_call(
        kernel,
        out_shape=jax.ShapeDtypeStruct((B, L, DP), jnp.float32),
        grid_spec=pltpu.PrefetchScalarGridSpec(
            num_scalar_prefetch=0,
            grid=(nb, num_layers),           # batch blocks (parallel) x layers (sequential)
            in_specs=[act_spec] + [w_spec(w) for w in weights],
            out_specs=act_spec,
        ),
        compiler_params=pltpu.CompilerParams(
            dimension_semantics=("parallel", "arbitrary"),
            vmem_limit_bytes=64 * 1024 * 1024,   # headroom; fits every chip's VMEM
        ),
        cost_estimate=pl.CostEstimate(flops=flops,
                                      transcendentals=transcendentals,
                                      bytes_accessed=bytes_accessed),
    )(xp, *weights)

    return out_padded[..., :D]


# ---------------------------------------------------------------------------
# Pure-JAX f32 reference (matches the torch module, post-norm path).
# ---------------------------------------------------------------------------
def _layer_norm_ref(x, g, b, eps=1e-6):
    mu = jnp.mean(x, axis=-1, keepdims=True)
    var = jnp.mean(jnp.square(x - mu), axis=-1, keepdims=True)
    return (x - mu) * jax.lax.rsqrt(var + eps) * g + b


def transformer_reference(x, params, num_heads):
    B, L, D = x.shape
    hd = D // num_heads
    for p in params:
        q = (x @ p["wq"] + p["bq"]).reshape(B, L, num_heads, hd)
        k = (x @ p["wk"] + p["bk"]).reshape(B, L, num_heads, hd)
        v = (x @ p["wv"] + p["bv"]).reshape(B, L, num_heads, hd)
        q = q / math.sqrt(hd)
        logits = jnp.einsum('bqhd,bkhd->bhqk', q, k)
        attn = jax.nn.softmax(logits, axis=-1)
        upd = jnp.einsum('bhqk,bkhd->bqhd', attn, v).reshape(B, L, D)
        attn_out = upd @ p["wo"] + p["bo"] if num_heads > 1 else upd
        x1 = attn_out + x
        y = _layer_norm_ref(x1, p["ln1_g"], p["ln1_b"])
        h = jnp.maximum(y @ p["w1"] + p["b1"], 0.0)
        z = h @ p["w2"] + p["b2"] + y
        x = _layer_norm_ref(z, p["ln2_g"], p["ln2_b"])
    return x


def init_params(key, embed_dim, qkv_size, mlp_size, num_layers):
    """Deterministic synthetic parameters (canonical [in, out] weight layout)."""
    assert embed_dim == qkv_size, "TransformerBlock.forward's .view requires qkv_size == embed_dim"
    params = []
    for _ in range(num_layers):
        key, *ks = jax.random.split(key, 10)

        def nrm(k, shape):
            return 0.02 * jax.random.normal(k, shape, dtype=jnp.float32)

        params.append({
            "wq": nrm(ks[0], (embed_dim, qkv_size)), "bq": nrm(ks[1], (qkv_size,)),
            "wk": nrm(ks[2], (embed_dim, qkv_size)), "bk": nrm(ks[3], (qkv_size,)),
            "wv": nrm(ks[4], (embed_dim, qkv_size)), "bv": nrm(ks[5], (qkv_size,)),
            "wo": nrm(ks[6], (qkv_size, embed_dim)),
            "bo": jnp.zeros((embed_dim,), jnp.float32),
            "ln1_g": jnp.ones((embed_dim,), jnp.float32),
            "ln1_b": jnp.zeros((embed_dim,), jnp.float32),
            "w1": nrm(ks[7], (embed_dim, mlp_size)),
            "b1": jnp.zeros((mlp_size,), jnp.float32),
            "w2": nrm(ks[8], (mlp_size, embed_dim)),
            "b2": jnp.zeros((embed_dim,), jnp.float32),
            "ln2_g": jnp.ones((embed_dim,), jnp.float32),
            "ln2_b": jnp.zeros((embed_dim,), jnp.float32),
        })
    return params


if __name__ == "__main__":
    # Small config consistent with the module: embed_dim == qkv_size == 32, 4 heads,
    # mlp hidden 64, 2 layers, batch 2, sequence 8.
    B, L = 2, 8
    embed_dim = qkv_size = 32
    num_heads = 4
    mlp_size = 64
    num_layers = 2

    key = jax.random.PRNGKey(0)
    k_x, k_p = jax.random.split(key)
    queries = jax.random.normal(k_x, (B, L, embed_dim), dtype=jnp.float32)
    params = init_params(k_p, embed_dim, qkv_size, mlp_size, num_layers)
    packed = pack_params(params, num_heads, embed_dim, mlp_size)

    out = transformer_forward(queries, packed)
    out = jax.block_until_ready(out)

    assert out.shape == (B, L, embed_dim)
    assert bool(jnp.all(jnp.isfinite(out)))

    # Check against the pure-JAX f32 reference (tolerance covers bf16 MXU operands and
    # the approximate-reciprocal softmax denominator).
    ref = transformer_reference(queries, params, num_heads)
    err = float(jnp.max(jnp.abs(out - ref)))
    assert err < 2e-2, f"max abs error vs reference: {err}"

    print("KERNEL_OK")
</pallas_src>

<mosaic_0001>
module attributes {stable_mosaic.version = 11 : i64} {
  func.func @_transformer_stack_kernel(%arg0: i32, %arg1: i32, %arg2: memref<2x8x128xf32, #tpu.memory_space<vmem>>, %arg3: memref<1x4x128x8xbf16, #tpu.memory_space<vmem>>, %arg4: memref<1x4x1x8xf32, #tpu.memory_space<vmem>>, %arg5: memref<1x4x128x8xbf16, #tpu.memory_space<vmem>>, %arg6: memref<1x4x1x8xf32, #tpu.memory_space<vmem>>, %arg7: memref<1x4x128x8xbf16, #tpu.memory_space<vmem>>, %arg8: memref<1x4x1x8xf32, #tpu.memory_space<vmem>>, %arg9: memref<1x4x8x128xbf16, #tpu.memory_space<vmem>>, %arg10: memref<1x1x128xf32, #tpu.memory_space<vmem>>, %arg11: memref<1x1x128xf32, #tpu.memory_space<vmem>>, %arg12: memref<1x1x128xf32, #tpu.memory_space<vmem>>, %arg13: memref<1x128x128xbf16, #tpu.memory_space<vmem>>, %arg14: memref<1x1x128xf32, #tpu.memory_space<vmem>>, %arg15: memref<1x128x128xbf16, #tpu.memory_space<vmem>>, %arg16: memref<1x1x128xf32, #tpu.memory_space<vmem>>, %arg17: memref<1x1x128xf32, #tpu.memory_space<vmem>>, %arg18: memref<1x1x128xf32, #tpu.memory_space<vmem>>, %arg19: memref<2x8x128xf32, #tpu.memory_space<vmem>>) attributes {dimension_semantics = [#tpu.dimension_semantics<parallel>, #tpu.dimension_semantics<arbitrary>], iteration_bounds = array<i64: 1, 2>, scalar_prefetch = 0 : i64, scratch_operands = 0 : i64, tpu.core_type = #tpu.core_type<tc>, window_params = [{transform_indices = @transform_0, window_bounds = array<i64: 2, 8, 128>}, {transform_indices = @transform_1, window_bounds = array<i64: 1, 4, 128, 8>}, {transform_indices = @transform_2, window_bounds = array<i64: 1, 4, 1, 8>}, {transform_indices = @transform_3, window_bounds = array<i64: 1, 4, 128, 8>}, {transform_indices = @transform_4, window_bounds = array<i64: 1, 4, 1, 8>}, {transform_indices = @transform_5, window_bounds = array<i64: 1, 4, 128, 8>}, {transform_indices = @transform_6, window_bounds = array<i64: 1, 4, 1, 8>}, {transform_indices = @transform_7, window_bounds = array<i64: 1, 4, 8, 128>}, {transform_indices = @transform_8, window_bounds = array<i64: 1, 1, 128>}, {transform_indices = @transform_9, window_bounds = array<i64: 1, 1, 128>}, {transform_indices = @transform_10, window_bounds = array<i64: 1, 1, 128>}, {transform_indices = @transform_11, window_bounds = array<i64: 1, 128, 128>}, {transform_indices = @transform_12, window_bounds = array<i64: 1, 1, 128>}, {transform_indices = @transform_13, window_bounds = array<i64: 1, 128, 128>}, {transform_indices = @transform_14, window_bounds = array<i64: 1, 1, 128>}, {transform_indices = @transform_15, window_bounds = array<i64: 1, 1, 128>}, {transform_indices = @transform_16, window_bounds = array<i64: 1, 1, 128>}, {transform_indices = @transform_17, window_bounds = array<i64: 2, 8, 128>}]} {
    %c0_i32 = arith.constant 0 : i32
    %0 = arith.cmpi eq, %arg1, %c0_i32 : i32
    %1 = arith.extui %0 : i1 to i32
    %c0_i32_0 = arith.constant 0 : i32
    %2 = arith.cmpi ne, %1, %c0_i32_0 : i32
    scf.if %2 {
      %c0_111 = arith.constant 0 : index
      %c0_112 = arith.constant 0 : index
      %c0_113 = arith.constant 0 : index
      %224 = vector.load %arg2[%c0_111, %c0_112, %c0_113] : memref<2x8x128xf32, #tpu.memory_space<vmem>>, vector<2x8x128xf32>
      %c0_114 = arith.constant 0 : index
      %c0_115 = arith.constant 0 : index
      %c0_116 = arith.constant 0 : index
      %225 = vector.load %arg19[%c0_114, %c0_115, %c0_116] : memref<2x8x128xf32, #tpu.memory_space<vmem>>, vector<2x8x128xf32>
      tpu.vector_store %arg19[%c0_114, %c0_115, %c0_116], %224 {strides = array<i32>} : memref<2x8x128xf32, #tpu.memory_space<vmem>>, vector<2x8x128xf32>,
    } else {
    }
    %c0 = arith.constant 0 : index
    %c0_1 = arith.constant 0 : index
    %c0_2 = arith.constant 0 : index
    %c0_3 = arith.constant 0 : index
    %3 = vector.load %arg3[%c0, %c0_1, %c0_2, %c0_3] : memref<1x4x128x8xbf16, #tpu.memory_space<vmem>>, vector<1x4x128x8xbf16>
    %4 = vector.shape_cast %3 : vector<1x4x128x8xbf16> to vector<4x128x8xbf16>
    %c0_4 = arith.constant 0 : index
    %c0_5 = arith.constant 0 : index
    %c0_6 = arith.constant 0 : index
    %c0_7 = arith.constant 0 : index
    %5 = vector.load %arg4[%c0_4, %c0_5, %c0_6, %c0_7] : memref<1x4x1x8xf32, #tpu.memory_space<vmem>>, vector<1x4x1x8xf32>
    %6 = vector.shape_cast %5 : vector<1x4x1x8xf32> to vector<4x1x8xf32>
    %c0_8 = arith.constant 0 : index
    %c0_9 = arith.constant 0 : index
    %c0_10 = arith.constant 0 : index
    %c0_11 = arith.constant 0 : index
    %7 = vector.load %arg5[%c0_8, %c0_9, %c0_10, %c0_11] : memref<1x4x128x8xbf16, #tpu.memory_space<vmem>>, vector<1x4x128x8xbf16>
    %8 = vector.shape_cast %7 : vector<1x4x128x8xbf16> to vector<4x128x8xbf16>
    %c0_12 = arith.constant 0 : index
    %c0_13 = arith.constant 0 : index
    %c0_14 = arith.constant 0 : index
    %c0_15 = arith.constant 0 : index
    %9 = vector.load %arg6[%c0_12, %c0_13, %c0_14, %c0_15] : memref<1x4x1x8xf32, #tpu.memory_space<vmem>>, vector<1x4x1x8xf32>
    %10 = vector.shape_cast %9 : vector<1x4x1x8xf32> to vector<4x1x8xf32>
    %c0_16 = arith.constant 0 : index
    %c0_17 = arith.constant 0 : index
    %c0_18 = arith.constant 0 : index
    %c0_19 = arith.constant 0 : index
    %11 = vector.load %arg7[%c0_16, %c0_17, %c0_18, %c0_19] : memref<1x4x128x8xbf16, #tpu.memory_space<vmem>>, vector<1x4x128x8xbf16>
    %12 = vector.shape_cast %11 : vector<1x4x128x8xbf16> to vector<4x128x8xbf16>
    %c0_20 = arith.constant 0 : index
    %c0_21 = arith.constant 0 : index
    %c0_22 = arith.constant 0 : index
    %c0_23 = arith.constant 0 : index
    %13 = vector.load %arg8[%c0_20, %c0_21, %c0_22, %c0_23] : memref<1x4x1x8xf32, #tpu.memory_space<vmem>>, vector<1x4x1x8xf32>
    %14 = vector.shape_cast %13 : vector<1x4x1x8xf32> to vector<4x1x8xf32>
    %c0_24 = arith.constant 0 : index
    %c0_25 = arith.constant 0 : index
    %c0_26 = arith.constant 0 : index
    %c0_27 = arith.constant 0 : index
    %15 = vector.load %arg9[%c0_24, %c0_25, %c0_26, %c0_27] : memref<1x4x8x128xbf16, #tpu.memory_space<vmem>>, vector<1x4x8x128xbf16>
    %16 = vector.shape_cast %15 : vector<1x4x8x128xbf16> to vector<4x8x128xbf16>
    %c0_28 = arith.constant 0 : index
    %c0_29 = arith.constant 0 : index
    %c0_30 = arith.constant 0 : index
    %17 = vector.load %arg10[%c0_28, %c0_29, %c0_30] : memref<1x1x128xf32, #tpu.memory_space<vmem>>, vector<1x1x128xf32>
    %18 = vector.shape_cast %17 : vector<1x1x128xf32> to vector<1x128xf32>
    %c0_31 = arith.constant 0 : index
    %c0_32 = arith.constant 0 : index
    %c0_33 = arith.constant 0 : index
    %19 = vector.load %arg11[%c0_31, %c0_32, %c0_33] : memref<1x1x128xf32, #tpu.memory_space<vmem>>, vector<1x1x128xf32>
    %20 = vector.shape_cast %19 : vector<1x1x128xf32> to vector<1x128xf32>
    %c0_34 = arith.constant 0 : index
    %c0_35 = arith.constant 0 : index
    %c0_36 = arith.constant 0 : index
    %21 = vector.load %arg12[%c0_34, %c0_35, %c0_36] : memref<1x1x128xf32, #tpu.memory_space<vmem>>, vector<1x1x128xf32>
    %22 = vector.shape_cast %21 : vector<1x1x128xf32> to vector<1x128xf32>
    %c0_37 = arith.constant 0 : index
    %c0_38 = arith.constant 0 : index
    %c0_39 = arith.constant 0 : index
    %23 = vector.load %arg13[%c0_37, %c0_38, %c0_39] : memref<1x128x128xbf16, #tpu.memory_space<vmem>>, vector<1x128x128xbf16>
    %24 = vector.shape_cast %23 : vector<1x128x128xbf16> to vector<128x128xbf16>
    %c0_40 = arith.constant 0 : index
    %c0_41 = arith.constant 0 : index
    %c0_42 = arith.constant 0 : index
    %25 = vector.load %arg14[%c0_40, %c0_41, %c0_42] : memref<1x1x128xf32, #tpu.memory_space<vmem>>, vector<1x1x128xf32>
    %26 = vector.shape_cast %25 : vector<1x1x128xf32> to vector<1x128xf32>
    %c0_43 = arith.constant 0 : index
    %c0_44 = arith.constant 0 : index
    %c0_45 = arith.constant 0 : index
    %27 = vector.load %arg15[%c0_43, %c0_44, %c0_45] : memref<1x128x128xbf16, #tpu.memory_space<vmem>>, vector<1x128x128xbf16>
    %28 = vector.shape_cast %27 : vector<1x128x128xbf16> to vector<128x128xbf16>
    %c0_46 = arith.constant 0 : index
    %c0_47 = arith.constant 0 : index
    %c0_48 = arith.constant 0 : index
    %29 = vector.load %arg16[%c0_46, %c0_47, %c0_48] : memref<1x1x128xf32, #tpu.memory_space<vmem>>, vector<1x1x128xf32>
    %30 = vector.shape_cast %29 : vector<1x1x128xf32> to vector<1x128xf32>
    %c0_49 = arith.constant 0 : index
    %c0_50 = arith.constant 0 : index
    %c0_51 = arith.constant 0 : index
    %31 = vector.load %arg17[%c0_49, %c0_50, %c0_51] : memref<1x1x128xf32, #tpu.memory_space<vmem>>, vector<1x1x128xf32>
    %32 = vector.shape_cast %31 : vector<1x1x128xf32> to vector<1x128xf32>
    %c0_52 = arith.constant 0 : index
    %c0_53 = arith.constant 0 : index
    %c0_54 = arith.constant 0 : index
    %33 = vector.load %arg18[%c0_52, %c0_53, %c0_54] : memref<1x1x128xf32, #tpu.memory_space<vmem>>, vector<1x1x128xf32>
    %34 = vector.shape_cast %33 : vector<1x1x128xf32> to vector<1x128xf32>
    %35 = tpu.iota {dimensions = array<i32: 1>} : vector<1x128xi32>
    %c32_i32 = arith.constant 32 : i32
    %36 = vector.broadcast %c32_i32 : i32 to vector<1x128xi32>
    %37 = arith.cmpi slt, %35, %36 : vector<1x128xi32>
    %38 = arith.extui %37 : vector<1x128xi1> to vector<1x128xi32>
    %39 = arith.sitofp %38 : vector<1x128xi32> to vector<1x128xf32>
    %c0_55 = arith.constant 0 : index
    %c0_56 = arith.constant 0 : index
    %c0_57 = arith.constant 0 : index
    %40 = vector.load %arg19[%c0_55, %c0_56, %c0_57] : memref<2x8x128xf32, #tpu.memory_space<vmem>>, vector<1x8x128xf32>
    %41 = vector.shape_cast %40 : vector<1x8x128xf32> to vector<8x128xf32>
    %42 = arith.truncf %41 : vector<8x128xf32> to vector<8x128xbf16>
    %43 = vector.shape_cast %42 : vector<8x128xbf16> to vector<1x8x128xbf16>
    %44 = vector.broadcast %43 : vector<1x8x128xbf16> to vector<4x8x128xbf16>
    "tpu.trace_start"() <{level = 10 : i32, message = "hld,hdf->hlf"}> : () -> ()
    %cst = arith.constant dense<0.000000e+00> : vector<4x8x8xf32>
    %45 = tpu.matmul %44, %4, %cst {dimension_numbers = #tpu.dot_dimension_numbers<[2], [1], [1], [2], [0, 0, 0, 1, 1, 2], [0], [0]>} : vector<4x8x128xbf16>, vector<4x128x8xbf16>, vector<4x8x8xf32> -> vector<4x8x8xf32>
    "tpu.trace_stop"() : () -> ()
    %46 = vector.broadcast %6 : vector<4x1x8xf32> to vector<4x8x8xf32>
    %47 = arith.addf %45, %46 : vector<4x8x8xf32>
    "tpu.trace_start"() <{level = 10 : i32, message = "hld,hdf->hlf"}> : () -> ()
    %cst_58 = arith.constant dense<0.000000e+00> : vector<4x8x8xf32>
    %48 = tpu.matmul %44, %8, %cst_58 {dimension_numbers = #tpu.dot_dimension_numbers<[2], [1], [1], [2], [0, 0, 0, 1, 1, 2], [0], [0]>} : vector<4x8x128xbf16>, vector<4x128x8xbf16>, vector<4x8x8xf32> -> vector<4x8x8xf32>
    "tpu.trace_stop"() : () -> ()
    %49 = vector.broadcast %10 : vector<4x1x8xf32> to vector<4x8x8xf32>
    %50 = arith.addf %48, %49 : vector<4x8x8xf32>
    "tpu.trace_start"() <{level = 10 : i32, message = "hld,hdf->hlf"}> : () -> ()
    %cst_59 = arith.constant dense<0.000000e+00> : vector<4x8x8xf32>
    %51 = tpu.matmul %44, %12, %cst_59 {dimension_numbers = #tpu.dot_dimension_numbers<[2], [1], [1], [2], [0, 0, 0, 1, 1, 2], [0], [0]>} : vector<4x8x128xbf16>, vector<4x128x8xbf16>, vector<4x8x8xf32> -> vector<4x8x8xf32>
    "tpu.trace_stop"() : () -> ()
    %52 = vector.broadcast %14 : vector<4x1x8xf32> to vector<4x8x8xf32>
    %53 = arith.addf %51, %52 : vector<4x8x8xf32>
    %cst_60 = arith.constant 0.353553385 : f32
    %54 = vector.broadcast %cst_60 : f32 to vector<4x8x8xf32>
    %55 = arith.mulf %47, %54 : vector<4x8x8xf32>
    "tpu.trace_start"() <{level = 10 : i32, message = "hqd,hkd->hqk"}> : () -> ()
    %cst_61 = arith.constant dense<0.000000e+00> : vector<4x8x8xf32>
    %56 = tpu.matmul %55, %50, %cst_61 {dimension_numbers = #tpu.dot_dimension_numbers<[2], [2], [1], [1], [0, 0, 0, 1, 1, 1], [0], [0]>} : vector<4x8x8xf32>, vector<4x8x8xf32>, vector<4x8x8xf32> -> vector<4x8x8xf32>
    "tpu.trace_stop"() : () -> ()
    %cst_62 = arith.constant dense<0xFF800000> : vector<4x8xf32>
    %57 = vector.multi_reduction <maximumf>, %56, %cst_62 [2] : vector<4x8x8xf32> to vector<4x8xf32>
    %58 = vector.shape_cast %57 : vector<4x8xf32> to vector<4x8x1xf32>
    %59 = vector.broadcast %58 : vector<4x8x1xf32> to vector<4x8x8xf32>
    %60 = arith.subf %56, %59 : vector<4x8x8xf32>
    %61 = math.exp %60 : vector<4x8x8xf32>
    %cst_63 = arith.constant dense<0.000000e+00> : vector<4x8xf32>
    %62 = vector.multi_reduction <add>, %61, %cst_63 [2] : vector<4x8x8xf32> to vector<4x8xf32>
    %63 = vector.shape_cast %62 : vector<4x8xf32> to vector<4x8x1xf32>
    %64 = tpu.reciprocal %63 {approx = true} : vector<4x8x1xf32> -> vector<4x8x1xf32>
    %65 = vector.broadcast %64 : vector<4x8x1xf32> to vector<4x8x8xf32>
    %66 = arith.mulf %61, %65 : vector<4x8x8xf32>
    "tpu.trace_start"() <{level = 10 : i32, message = "hqk,hkd->hqd"}> : () -> ()
    %cst_64 = arith.constant dense<0.000000e+00> : vector<4x8x8xf32>
    %67 = tpu.matmul %66, %53, %cst_64 {dimension_numbers = #tpu.dot_dimension_numbers<[2], [1], [1], [2], [0, 0, 0, 1, 1, 2], [0], [0]>} : vector<4x8x8xf32>, vector<4x8x8xf32>, vector<4x8x8xf32> -> vector<4x8x8xf32>
    "tpu.trace_stop"() : () -> ()
    %68 = arith.truncf %67 : vector<4x8x8xf32> to vector<4x8x8xbf16>
    "tpu.trace_start"() <{level = 10 : i32, message = "hld,hdf->hlf"}> : () -> ()
    %cst_65 = arith.constant dense<0.000000e+00> : vector<4x8x128xf32>
    %69 = tpu.matmul %68, %16, %cst_65 {dimension_numbers = #tpu.dot_dimension_numbers<[2], [1], [1], [2], [0, 0, 0, 1, 1, 2], [0], [0]>} : vector<4x8x8xbf16>, vector<4x8x128xbf16>, vector<4x8x128xf32> -> vector<4x8x128xf32>
    "tpu.trace_stop"() : () -> ()
    %cst_66 = arith.constant dense<0.000000e+00> : vector<8x128xf32>
    %70 = vector.multi_reduction <add>, %69, %cst_66 [0] : vector<4x8x128xf32> to vector<8x128xf32>
    %71 = vector.broadcast %18 : vector<1x128xf32> to vector<8x128xf32>
    %72 = arith.addf %70, %71 : vector<8x128xf32>
    %73 = arith.addf %72, %41 : vector<8x128xf32>
    %cst_67 = arith.constant dense<0.000000e+00> : vector<8xf32>
    %74 = vector.multi_reduction <add>, %73, %cst_67 [1] : vector<8x128xf32> to vector<8xf32>
    %75 = vector.shape_cast %74 : vector<8xf32> to vector<8x1xf32>
    %cst_68 = arith.constant 3.125000e-02 : f32
    %76 = vector.broadcast %cst_68 : f32 to vector<8x1xf32>
    %77 = arith.mulf %75, %76 : vector<8x1xf32>
    %78 = vector.broadcast %77 : vector<8x1xf32> to vector<8x128xf32>
    %79 = arith.subf %73, %78 : vector<8x128xf32>
    %80 = vector.broadcast %39 : vector<1x128xf32> to vector<8x128xf32>
    %81 = arith.mulf %79, %80 : vector<8x128xf32>
    %82 = arith.mulf %81, %81 : vector<8x128xf32>
    %cst_69 = arith.constant dense<0.000000e+00> : vector<8xf32>
    %83 = vector.multi_reduction <add>, %82, %cst_69 [1] : vector<8x128xf32> to vector<8xf32>
    %84 = vector.shape_cast %83 : vector<8xf32> to vector<8x1xf32>
    %cst_70 = arith.constant 3.125000e-02 : f32
    %85 = vector.broadcast %cst_70 : f32 to vector<8x1xf32>
    %86 = arith.mulf %84, %85 : vector<8x1xf32>
    %cst_71 = arith.constant 9.99999997E-7 : f32
    %87 = vector.broadcast %cst_71 : f32 to vector<8x1xf32>
    %88 = arith.addf %86, %87 : vector<8x1xf32>
    %89 = math.rsqrt %88 : vector<8x1xf32>
    %90 = vector.broadcast %89 : vector<8x1xf32> to vector<8x128xf32>
    %91 = arith.mulf %81, %90 : vector<8x128xf32>
    %92 = vector.broadcast %20 : vector<1x128xf32> to vector<8x128xf32>
    %93 = arith.mulf %91, %92 : vector<8x128xf32>
    %94 = vector.broadcast %22 : vector<1x128xf32> to vector<8x128xf32>
    %95 = arith.addf %93, %94 : vector<8x128xf32>
    %96 = arith.truncf %95 : vector<8x128xf32> to vector<8x128xbf16>
    %cst_72 = arith.constant dense<0.000000e+00> : vector<8x128xf32>
    %97 = tpu.matmul %96, %24, %cst_72 {dimension_numbers = #tpu.dot_dimension_numbers<[1], [0], [0], [1], [0, 0, 1, 1], [], []>} : vector<8x128xbf16>, vector<128x128xbf16>, vector<8x128xf32> -> vector<8x128xf32>
    %98 = vector.broadcast %26 : vector<1x128xf32> to vector<8x128xf32>
    %99 = arith.addf %97, %98 : vector<8x128xf32>
    %cst_73 = arith.constant 0.000000e+00 : f32
    %100 = vector.broadcast %cst_73 : f32 to vector<8x128xf32>
    %101 = arith.maximumf %99, %100 : vector<8x128xf32>
    %102 = arith.truncf %101 : vector<8x128xf32> to vector<8x128xbf16>
    %cst_74 = arith.constant dense<0.000000e+00> : vector<8x128xf32>
    %103 = tpu.matmul %102, %28, %cst_74 {dimension_numbers = #tpu.dot_dimension_numbers<[1], [0], [0], [1], [0, 0, 1, 1], [], []>} : vector<8x128xbf16>, vector<128x128xbf16>, vector<8x128xf32> -> vector<8x128xf32>
    %104 = vector.broadcast %30 : vector<1x128xf32> to vector<8x128xf32>
    %105 = arith.addf %103, %104 : vector<8x128xf32>
    %106 = arith.addf %105, %95 : vector<8x128xf32>
    %cst_75 = arith.constant dense<0.000000e+00> : vector<8xf32>
    %107 = vector.multi_reduction <add>, %106, %cst_75 [1] : vector<8x128xf32> to vector<8xf32>
    %108 = vector.shape_cast %107 : vector<8xf32> to vector<8x1xf32>
    %cst_76 = arith.constant 3.125000e-02 : f32
    %109 = vector.broadcast %cst_76 : f32 to vector<8x1xf32>
    %110 = arith.mulf %108, %109 : vector<8x1xf32>
    %111 = vector.broadcast %110 : vector<8x1xf32> to vector<8x128xf32>
    %112 = arith.subf %106, %111 : vector<8x128xf32>
    %113 = vector.broadcast %39 : vector<1x128xf32> to vector<8x128xf32>
    %114 = arith.mulf %112, %113 : vector<8x128xf32>
    %115 = arith.mulf %114, %114 : vector<8x128xf32>
    %cst_77 = arith.constant dense<0.000000e+00> : vector<8xf32>
    %116 = vector.multi_reduction <add>, %115, %cst_77 [1] : vector<8x128xf32> to vector<8xf32>
    %117 = vector.shape_cast %116 : vector<8xf32> to vector<8x1xf32>
    %cst_78 = arith.constant 3.125000e-02 : f32
    %118 = vector.broadcast %cst_78 : f32 to vector<8x1xf32>
    %119 = arith.mulf %117, %118 : vector<8x1xf32>
    %cst_79 = arith.constant 9.99999997E-7 : f32
    %120 = vector.broadcast %cst_79 : f32 to vector<8x1xf32>
    %121 = arith.addf %119, %120 : vector<8x1xf32>
    %122 = math.rsqrt %121 : vector<8x1xf32>
    %123 = vector.broadcast %122 : vector<8x1xf32> to vector<8x128xf32>
    %124 = arith.mulf %114, %123 : vector<8x128xf32>
    %125 = vector.broadcast %32 : vector<1x128xf32> to vector<8x128xf32>
    %126 = arith.mulf %124, %125 : vector<8x128xf32>
    %127 = vector.broadcast %34 : vector<1x128xf32> to vector<8x128xf32>
    %128 = arith.addf %126, %127 : vector<8x128xf32>
    %c0_80 = arith.constant 0 : index
    %c0_81 = arith.constant 0 : index
    %c0_82 = arith.constant 0 : index
    %129 = vector.load %arg19[%c0_80, %c0_81, %c0_82] : memref<2x8x128xf32, #tpu.memory_space<vmem>>, vector<1x8x128xf32>
    %130 = vector.shape_cast %129 : vector<1x8x128xf32> to vector<8x128xf32>
    %131 = vector.shape_cast %128 : vector<8x128xf32> to vector<1x8x128xf32>
    tpu.vector_store %arg19[%c0_80, %c0_81, %c0_82], %131 {strides = array<i32>} : memref<2x8x128xf32, #tpu.memory_space<vmem>>, vector<1x8x128xf32>,
    %c1 = arith.constant 1 : index
    %c0_83 = arith.constant 0 : index
    %c0_84 = arith.constant 0 : index
    %132 = vector.load %arg19[%c1, %c0_83, %c0_84] : memref<2x8x128xf32, #tpu.memory_space<vmem>>, vector<1x8x128xf32>
    %133 = vector.shape_cast %132 : vector<1x8x128xf32> to vector<8x128xf32>
    %134 = arith.truncf %133 : vector<8x128xf32> to vector<8x128xbf16>
    %135 = vector.shape_cast %134 : vector<8x128xbf16> to vector<1x8x128xbf16>
    %136 = vector.broadcast %135 : vector<1x8x128xbf16> to vector<4x8x128xbf16>
    "tpu.trace_start"() <{level = 10 : i32, message = "hld,hdf->hlf"}> : () -> ()
    %cst_85 = arith.constant dense<0.000000e+00> : vector<4x8x8xf32>
    %137 = tpu.matmul %136, %4, %cst_85 {dimension_numbers = #tpu.dot_dimension_numbers<[2], [1], [1], [2], [0, 0, 0, 1, 1, 2], [0], [0]>} : vector<4x8x128xbf16>, vector<4x128x8xbf16>, vector<4x8x8xf32> -> vector<4x8x8xf32>
    "tpu.trace_stop"() : () -> ()
    %138 = vector.broadcast %6 : vector<4x1x8xf32> to vector<4x8x8xf32>
    %139 = arith.addf %137, %138 : vector<4x8x8xf32>
    "tpu.trace_start"() <{level = 10 : i32, message = "hld,hdf->hlf"}> : () -> ()
    %cst_86 = arith.constant dense<0.000000e+00> : vector<4x8x8xf32>
    %140 = tpu.matmul %136, %8, %cst_86 {dimension_numbers = #tpu.dot_dimension_numbers<[2], [1], [1], [2], [0, 0, 0, 1, 1, 2], [0], [0]>} : vector<4x8x128xbf16>, vector<4x128x8xbf16>, vector<4x8x8xf32> -> vector<4x8x8xf32>
    "tpu.trace_stop"() : () -> ()
    %141 = vector.broadcast %10 : vector<4x1x8xf32> to vector<4x8x8xf32>
    %142 = arith.addf %140, %141 : vector<4x8x8xf32>
    "tpu.trace_start"() <{level = 10 : i32, message = "hld,hdf->hlf"}> : () -> ()
    %cst_87 = arith.constant dense<0.000000e+00> : vector<4x8x8xf32>
    %143 = tpu.matmul %136, %12, %cst_87 {dimension_numbers = #tpu.dot_dimension_numbers<[2], [1], [1], [2], [0, 0, 0, 1, 1, 2], [0], [0]>} : vector<4x8x128xbf16>, vector<4x128x8xbf16>, vector<4x8x8xf32> -> vector<4x8x8xf32>
    "tpu.trace_stop"() : () -> ()
    %144 = vector.broadcast %14 : vector<4x1x8xf32> to vector<4x8x8xf32>
    %145 = arith.addf %143, %144 : vector<4x8x8xf32>
    %cst_88 = arith.constant 0.353553385 : f32
    %146 = vector.broadcast %cst_88 : f32 to vector<4x8x8xf32>
    %147 = arith.mulf %139, %146 : vector<4x8x8xf32>
    "tpu.trace_start"() <{level = 10 : i32, message = "hqd,hkd->hqk"}> : () -> ()
    %cst_89 = arith.constant dense<0.000000e+00> : vector<4x8x8xf32>
    %148 = tpu.matmul %147, %142, %cst_89 {dimension_numbers = #tpu.dot_dimension_numbers<[2], [2], [1], [1], [0, 0, 0, 1, 1, 1], [0], [0]>} : vector<4x8x8xf32>, vector<4x8x8xf32>, vector<4x8x8xf32> -> vector<4x8x8xf32>
    "tpu.trace_stop"() : () -> ()
    %cst_90 = arith.constant dense<0xFF800000> : vector<4x8xf32>
    %149 = vector.multi_reduction <maximumf>, %148, %cst_90 [2] : vector<4x8x8xf32> to vector<4x8xf32>
    %150 = vector.shape_cast %149 : vector<4x8xf32> to vector<4x8x1xf32>
    %151 = vector.broadcast %150 : vector<4x8x1xf32> to vector<4x8x8xf32>
    %152 = arith.subf %148, %151 : vector<4x8x8xf32>
    %153 = math.exp %152 : vector<4x8x8xf32>
    %cst_91 = arith.constant dense<0.000000e+00> : vector<4x8xf32>
    %154 = vector.multi_reduction <add>, %153, %cst_91 [2] : vector<4x8x8xf32> to vector<4x8xf32>
    %155 = vector.shape_cast %154 : vector<4x8xf32> to vector<4x8x1xf32>
    %156 = tpu.reciprocal %155 {approx = true} : vector<4x8x1xf32> -> vector<4x8x1xf32>
    %157 = vector.broadcast %156 : vector<4x8x1xf32> to vector<4x8x8xf32>
    %158 = arith.mulf %153, %157 : vector<4x8x8xf32>
    "tpu.trace_start"() <{level = 10 : i32, message = "hqk,hkd->hqd"}> : () -> ()
    %cst_92 = arith.constant dense<0.000000e+00> : vector<4x8x8xf32>
    %159 = tpu.matmul %158, %145, %cst_92 {dimension_numbers = #tpu.dot_dimension_numbers<[2], [1], [1], [2], [0, 0, 0, 1, 1, 2], [0], [0]>} : vector<4x8x8xf32>, vector<4x8x8xf32>, vector<4x8x8xf32> -> vector<4x8x8xf32>
    "tpu.trace_stop"() : () -> ()
    %160 = arith.truncf %159 : vector<4x8x8xf32> to vector<4x8x8xbf16>
    "tpu.trace_start"() <{level = 10 : i32, message = "hld,hdf->hlf"}> : () -> ()
    %cst_93 = arith.constant dense<0.000000e+00> : vector<4x8x128xf32>
    %161 = tpu.matmul %160, %16, %cst_93 {dimension_numbers = #tpu.dot_dimension_numbers<[2], [1], [1], [2], [0, 0, 0, 1, 1, 2], [0], [0]>} : vector<4x8x8xbf16>, vector<4x8x128xbf16>, vector<4x8x128xf32> -> vector<4x8x128xf32>
    "tpu.trace_stop"() : () -> ()
    %cst_94 = arith.constant dense<0.000000e+00> : vector<8x128xf32>
    %162 = vector.multi_reduction <add>, %161, %cst_94 [0] : vector<4x8x128xf32> to vector<8x128xf32>
    %163 = vector.broadcast %18 : vector<1x128xf32> to vector<8x128xf32>
    %164 = arith.addf %162, %163 : vector<8x128xf32>
    %165 = arith.addf %164, %133 : vector<8x128xf32>
    %cst_95 = arith.constant dense<0.000000e+00> : vector<8xf32>
    %166 = vector.multi_reduction <add>, %165, %cst_95 [1] : vector<8x128xf32> to vector<8xf32>
    %167 = vector.shape_cast %166 : vector<8xf32> to vector<8x1xf32>
    %cst_96 = arith.constant 3.125000e-02 : f32
    %168 = vector.broadcast %cst_96 : f32 to vector<8x1xf32>
    %169 = arith.mulf %167, %168 : vector<8x1xf32>
    %170 = vector.broadcast %169 : vector<8x1xf32> to vector<8x128xf32>
    %171 = arith.subf %165, %170 : vector<8x128xf32>
    %172 = vector.broadcast %39 : vector<1x128xf32> to vector<8x128xf32>
    %173 = arith.mulf %171, %172 : vector<8x128xf32>
    %174 = arith.mulf %173, %173 : vector<8x128xf32>
    %cst_97 = arith.constant dense<0.000000e+00> : vector<8xf32>
    %175 = vector.multi_reduction <add>, %174, %cst_97 [1] : vector<8x128xf32> to vector<8xf32>
    %176 = vector.shape_cast %175 : vector<8xf32> to vector<8x1xf32>
    %cst_98 = arith.constant 3.125000e-02 : f32
    %177 = vector.broadcast %cst_98 : f32 to vector<8x1xf32>
    %178 = arith.mulf %176, %177 : vector<8x1xf32>
    %cst_99 = arith.constant 9.99999997E-7 : f32
    %179 = vector.broadcast %cst_99 : f32 to vector<8x1xf32>
    %180 = arith.addf %178, %179 : vector<8x1xf32>
    %181 = math.rsqrt %180 : vector<8x1xf32>
    %182 = vector.broadcast %181 : vector<8x1xf32> to vector<8x128xf32>
    %183 = arith.mulf %173, %182 : vector<8x128xf32>
    %184 = vector.broadcast %20 : vector<1x128xf32> to vector<8x128xf32>
    %185 = arith.mulf %183, %184 : vector<8x128xf32>
    %186 = vector.broadcast %22 : vector<1x128xf32> to vector<8x128xf32>
    %187 = arith.addf %185, %186 : vector<8x128xf32>
    %188 = arith.truncf %187 : vector<8x128xf32> to vector<8x128xbf16>
    %cst_100 = arith.constant dense<0.000000e+00> : vector<8x128xf32>
    %189 = tpu.matmul %188, %24, %cst_100 {dimension_numbers = #tpu.dot_dimension_numbers<[1], [0], [0], [1], [0, 0, 1, 1], [], []>} : vector<8x128xbf16>, vector<128x128xbf16>, vector<8x128xf32> -> vector<8x128xf32>
    %190 = vector.broadcast %26 : vector<1x128xf32> to vector<8x128xf32>
    %191 = arith.addf %189, %190 : vector<8x128xf32>
    %cst_101 = arith.constant 0.000000e+00 : f32
    %192 = vector.broadcast %cst_101 : f32 to vector<8x128xf32>
    %193 = arith.maximumf %191, %192 : vector<8x128xf32>
    %194 = arith.truncf %193 : vector<8x128xf32> to vector<8x128xbf16>
    %cst_102 = arith.constant dense<0.000000e+00> : vector<8x128xf32>
    %195 = tpu.matmul %194, %28, %cst_102 {dimension_numbers = #tpu.dot_dimension_numbers<[1], [0], [0], [1], [0, 0, 1, 1], [], []>} : vector<8x128xbf16>, vector<128x128xbf16>, vector<8x128xf32> -> vector<8x128xf32>
    %196 = vector.broadcast %30 : vector<1x128xf32> to vector<8x128xf32>
    %197 = arith.addf %195, %196 : vector<8x128xf32>
    %198 = arith.addf %197, %187 : vector<8x128xf32>
    %cst_103 = arith.constant dense<0.000000e+00> : vector<8xf32>
    %199 = vector.multi_reduction <add>, %198, %cst_103 [1] : vector<8x128xf32> to vector<8xf32>
    %200 = vector.shape_cast %199 : vector<8xf32> to vector<8x1xf32>
    %cst_104 = arith.constant 3.125000e-02 : f32
    %201 = vector.broadcast %cst_104 : f32 to vector<8x1xf32>
    %202 = arith.mulf %200, %201 : vector<8x1xf32>
    %203 = vector.broadcast %202 : vector<8x1xf32> to vector<8x128xf32>
    %204 = arith.subf %198, %203 : vector<8x128xf32>
    %205 = vector.broadcast %39 : vector<1x128xf32> to vector<8x128xf32>
    %206 = arith.mulf %204, %205 : vector<8x128xf32>
    %207 = arith.mulf %206, %206 : vector<8x128xf32>
    %cst_105 = arith.constant dense<0.000000e+00> : vector<8xf32>
    %208 = vector.multi_reduction <add>, %207, %cst_105 [1] : vector<8x128xf32> to vector<8xf32>
    %209 = vector.shape_cast %208 : vector<8xf32> to vector<8x1xf32>
    %cst_106 = arith.constant 3.125000e-02 : f32
    %210 = vector.broadcast %cst_106 : f32 to vector<8x1xf32>
    %211 = arith.mulf %209, %210 : vector<8x1xf32>
    %cst_107 = arith.constant 9.99999997E-7 : f32
    %212 = vector.broadcast %cst_107 : f32 to vector<8x1xf32>
    %213 = arith.addf %211, %212 : vector<8x1xf32>
    %214 = math.rsqrt %213 : vector<8x1xf32>
    %215 = vector.broadcast %214 : vector<8x1xf32> to vector<8x128xf32>
    %216 = arith.mulf %206, %215 : vector<8x128xf32>
    %217 = vector.broadcast %32 : vector<1x128xf32> to vector<8x128xf32>
    %218 = arith.mulf %216, %217 : vector<8x128xf32>
    %219 = vector.broadcast %34 : vector<1x128xf32> to vector<8x128xf32>
    %220 = arith.addf %218, %219 : vector<8x128xf32>
    %c1_108 = arith.constant 1 : index
    %c0_109 = arith.constant 0 : index
    %c0_110 = arith.constant 0 : index
    %221 = vector.load %arg19[%c1_108, %c0_109, %c0_110] : memref<2x8x128xf32, #tpu.memory_space<vmem>>, vector<1x8x128xf32>
    %222 = vector.shape_cast %221 : vector<1x8x128xf32> to vector<8x128xf32>
    %223 = vector.shape_cast %220 : vector<8x128xf32> to vector<1x8x128xf32>
    tpu.vector_store %arg19[%c1_108, %c0_109, %c0_110], %223 {strides = array<i32>} : memref<2x8x128xf32, #tpu.memory_space<vmem>>, vector<1x8x128xf32>,
    return
  }
  func.func @transform_0(%arg0: i32, %arg1: i32) -> (i32, i32, i32) {
    %c0_i32 = arith.constant 0 : i32
    %c0_i32_0 = arith.constant 0 : i32
    %c0_i32_1 = arith.constant 0 : i32
    return %arg0, %c0_i32, %c0_i32_0 : i32, i32, i32
  }
  func.func @transform_1(%arg0: i32, %arg1: i32) -> (i32, i32, i32, i32) {
    %c0_i32 = arith.constant 0 : i32
    %c0_i32_0 = arith.constant 0 : i32
    %c0_i32_1 = arith.constant 0 : i32
    %c0_i32_2 = arith.constant 0 : i32
    return %arg1, %c0_i32, %c0_i32_0, %c0_i32_1 : i32, i32, i32, i32
  }
  func.func @transform_2(%arg0: i32, %arg1: i32) -> (i32, i32, i32, i32) {
    %c0_i32 = arith.constant 0 : i32
    %c0_i32_0 = arith.constant 0 : i32
    %c0_i32_1 = arith.constant 0 : i32
    %c0_i32_2 = arith.constant 0 : i32
    return %arg1, %c0_i32, %c0_i32_0, %c0_i32_1 : i32, i32, i32, i32
  }
  func.func @transform_3(%arg0: i32, %arg1: i32) -> (i32, i32, i32, i32) {
    %c0_i32 = arith.constant 0 : i32
    %c0_i32_0 = arith.constant 0 : i32
    %c0_i32_1 = arith.constant 0 : i32
    %c0_i32_2 = arith.constant 0 : i32
    return %arg1, %c0_i32, %c0_i32_0, %c0_i32_1 : i32, i32, i32, i32
  }
  func.func @transform_4(%arg0: i32, %arg1: i32) -> (i32, i32, i32, i32) {
    %c0_i32 = arith.constant 0 : i32
    %c0_i32_0 = arith.constant 0 : i32
    %c0_i32_1 = arith.constant 0 : i32
    %c0_i32_2 = arith.constant 0 : i32
    return %arg1, %c0_i32, %c0_i32_0, %c0_i32_1 : i32, i32, i32, i32
  }
  func.func @transform_5(%arg0: i32, %arg1: i32) -> (i32, i32, i32, i32) {
    %c0_i32 = arith.constant 0 : i32
    %c0_i32_0 = arith.constant 0 : i32
    %c0_i32_1 = arith.constant 0 : i32
    %c0_i32_2 = arith.constant 0 : i32
    return %arg1, %c0_i32, %c0_i32_0, %c0_i32_1 : i32, i32, i32, i32
  }
  func.func @transform_6(%arg0: i32, %arg1: i32) -> (i32, i32, i32, i32) {
    %c0_i32 = arith.constant 0 : i32
    %c0_i32_0 = arith.constant 0 : i32
    %c0_i32_1 = arith.constant 0 : i32
    %c0_i32_2 = arith.constant 0 : i32
    return %arg1, %c0_i32, %c0_i32_0, %c0_i32_1 : i32, i32, i32, i32
  }
  func.func @transform_7(%arg0: i32, %arg1: i32) -> (i32, i32, i32, i32) {
    %c0_i32 = arith.constant 0 : i32
    %c0_i32_0 = arith.constant 0 : i32
    %c0_i32_1 = arith.constant 0 : i32
    %c0_i32_2 = arith.constant 0 : i32
    return %arg1, %c0_i32, %c0_i32_0, %c0_i32_1 : i32, i32, i32, i32
  }
  func.func @transform_8(%arg0: i32, %arg1: i32) -> (i32, i32, i32) {
    %c0_i32 = arith.constant 0 : i32
    %c0_i32_0 = arith.constant 0 : i32
    %c0_i32_1 = arith.constant 0 : i32
    return %arg1, %c0_i32, %c0_i32_0 : i32, i32, i32
  }
  func.func @transform_9(%arg0: i32, %arg1: i32) -> (i32, i32, i32) {
    %c0_i32 = arith.constant 0 : i32
    %c0_i32_0 = arith.constant 0 : i32
    %c0_i32_1 = arith.constant 0 : i32
    return %arg1, %c0_i32, %c0_i32_0 : i32, i32, i32
  }
  func.func @transform_10(%arg0: i32, %arg1: i32) -> (i32, i32, i32) {
    %c0_i32 = arith.constant 0 : i32
    %c0_i32_0 = arith.constant 0 : i32
    %c0_i32_1 = arith.constant 0 : i32
    return %arg1, %c0_i32, %c0_i32_0 : i32, i32, i32
  }
  func.func @transform_11(%arg0: i32, %arg1: i32) -> (i32, i32, i32) {
    %c0_i32 = arith.constant 0 : i32
    %c0_i32_0 = arith.constant 0 : i32
    %c0_i32_1 = arith.constant 0 : i32
    return %arg1, %c0_i32, %c0_i32_0 : i32, i32, i32
  }
  func.func @transform_12(%arg0: i32, %arg1: i32) -> (i32, i32, i32) {
    %c0_i32 = arith.constant 0 : i32
    %c0_i32_0 = arith.constant 0 : i32
    %c0_i32_1 = arith.constant 0 : i32
    return %arg1, %c0_i32, %c0_i32_0 : i32, i32, i32
  }
  func.func @transform_13(%arg0: i32, %arg1: i32) -> (i32, i32, i32) {
    %c0_i32 = arith.constant 0 : i32
    %c0_i32_0 = arith.constant 0 : i32
    %c0_i32_1 = arith.constant 0 : i32
    return %arg1, %c0_i32, %c0_i32_0 : i32, i32, i32
  }
  func.func @transform_14(%arg0: i32, %arg1: i32) -> (i32, i32, i32) {
    %c0_i32 = arith.constant 0 : i32
    %c0_i32_0 = arith.constant 0 : i32
    %c0_i32_1 = arith.constant 0 : i32
    return %arg1, %c0_i32, %c0_i32_0 : i32, i32, i32
  }
  func.func @transform_15(%arg0: i32, %arg1: i32) -> (i32, i32, i32) {
    %c0_i32 = arith.constant 0 : i32
    %c0_i32_0 = arith.constant 0 : i32
    %c0_i32_1 = arith.constant 0 : i32
    return %arg1, %c0_i32, %c0_i32_0 : i32, i32, i32
  }
  func.func @transform_16(%arg0: i32, %arg1: i32) -> (i32, i32, i32) {
    %c0_i32 = arith.constant 0 : i32
    %c0_i32_0 = arith.constant 0 : i32
    %c0_i32_1 = arith.constant 0 : i32
    return %arg1, %c0_i32, %c0_i32_0 : i32, i32, i32
  }
  func.func @transform_17(%arg0: i32, %arg1: i32) -> (i32, i32, i32) {
    %c0_i32 = arith.constant 0 : i32
    %c0_i32_0 = arith.constant 0 : i32
    %c0_i32_1 = arith.constant 0 : i32
    return %arg0, %c0_i32, %c0_i32_0 : i32, i32, i32
  }
}

</mosaic_0001>

<llo_original>
// kernel: tpu_custom_call.1
$region0: #{tpu_custom_call.1}
  #allocation0 [shape = 'u32[]', space=smem, size = 0x4, offset = 0x4, fixed_abs, tag = 'smem constant byte address 0x4 - core index']
  #allocation1 [shape = 'u32[144,128]{1,0:T(1,128)}', space=vmem, size = 0x12000, scoped, tag = 'internal scratch']
  %s0 = inlined_call_operand.hbm [shape: f32[2,8,128], index: 0, kind: input, shape index: {}]
  %s1 = inlined_call_operand.hbm [shape: bf16[2,4,128,8], index: 1, kind: input, shape index: {}]
  %s2 = inlined_call_operand.hbm [shape: f32[2,4,1,8], index: 2, kind: input, shape index: {}]
  %s3 = inlined_call_operand.hbm [shape: bf16[2,4,128,8], index: 3, kind: input, shape index: {}]
  %s4 = inlined_call_operand.hbm [shape: f32[2,4,1,8], index: 4, kind: input, shape index: {}]
  %s5 = inlined_call_operand.hbm [shape: bf16[2,4,128,8], index: 5, kind: input, shape index: {}]
  %s6 = inlined_call_operand.hbm [shape: f32[2,4,1,8], index: 6, kind: input, shape index: {}]
  %s7 = inlined_call_operand.hbm [shape: bf16[2,4,8,128], index: 7, kind: input, shape index: {}]
  %s8 = inlined_call_operand.hbm [shape: f32[2,1,128], index: 8, kind: input, shape index: {}]
  %s9 = inlined_call_operand.hbm [shape: f32[2,1,128], index: 9, kind: input, shape index: {}]
  %s10 = inlined_call_operand.hbm [shape: f32[2,1,128], index: 10, kind: input, shape index: {}]
  %s11 = inlined_call_operand.hbm [shape: bf16[2,128,128], index: 11, kind: input, shape index: {}]
  %s12 = inlined_call_operand.hbm [shape: f32[2,1,128], index: 12, kind: input, shape index: {}]
  %s13 = inlined_call_operand.hbm [shape: bf16[2,128,128], index: 13, kind: input, shape index: {}]
  %s14 = inlined_call_operand.hbm [shape: f32[2,1,128], index: 14, kind: input, shape index: {}]
  %s15 = inlined_call_operand.hbm [shape: f32[2,1,128], index: 15, kind: input, shape index: {}]
  %s16 = inlined_call_operand.hbm [shape: f32[2,1,128], index: 16, kind: input, shape index: {}]
  %s17 = inlined_call_operand.hbm [shape: f32[2,8,128], index: 17, kind: output, shape index: {}]
  %s18 = sld [smem:[#allocation0]]
  $region173: #{tpu_custom_call.1} parent=0
    _
  %s20 = ssub.s32 1, %s18
  %s21 = scalar_select 0, %s20, %s18
  $region1: #{tpu_custom_call.1} parent=0
    #allocation2 [shape = 'u8[8192]{0}', space=vmem, size = 0x2000, scoped, tag = 'input window, operand 0, single buffered']
    #allocation3 [shape = 's32[2]{0}', space=sflag, size = 0x8, scoped, tag = 'scoped memory for tpu_custom_call.1']
    #allocation4 [shape = 's32[2]{0}', space=sflag, size = 0x8, scoped, tag = 'scoped memory for tpu_custom_call.1']
    #allocation5 [shape = 'u8[262144]{0}', space=vmem, size = 0x40000, scoped, tag = 'input window, operand 1']
    #allocation6 [shape = 's32[2]{0}', space=sflag, size = 0x8, scoped, tag = 'scoped memory for tpu_custom_call.1']
    #allocation7 [shape = 'u8[4096]{0}', space=vmem, size = 0x1000, scoped, tag = 'input window, operand 2']
    #allocation8 [shape = 'u8[262144]{0}', space=vmem, size = 0x40000, scoped, tag = 'input window, operand 3']
    #allocation9 [shape = 's32[2]{0}', space=sflag, size = 0x8, scoped, tag = 'scoped memory for tpu_custom_call.1']
    #allocation10 [shape = 'u8[4096]{0}', space=vmem, size = 0x1000, scoped, tag = 'input window, operand 4']
    #allocation11 [shape = 'u8[262144]{0}', space=vmem, size = 0x40000, scoped, tag = 'input window, operand 5']
    #allocation12 [shape = 's32[2]{0}', space=sflag, size = 0x8, scoped, tag = 'scoped memory for tpu_custom_call.1']
    #allocation13 [shape = 'u8[4096]{0}', space=vmem, size = 0x1000, scoped, tag = 'input window, operand 6']
    #allocation14 [shape = 'u8[16384]{0}', space=vmem, size = 0x4000, scoped, tag = 'input window, operand 7']
    #allocation15 [shape = 's32[2]{0}', space=sflag, size = 0x8, scoped, tag = 'scoped memory for tpu_custom_call.1']
    #allocation16 [shape = 'u8[1024]{0}', space=vmem, size = 0x400, scoped, tag = 'input window, operand 8']
    #allocation17 [shape = 'u8[1024]{0}', space=vmem, size = 0x400, scoped, tag = 'input window, operand 9']
    #allocation18 [shape = 's32[2]{0}', space=sflag, size = 0x8, scoped, tag = 'scoped memory for tpu_custom_call.1']
    #allocation19 [shape = 'u8[1024]{0}', space=vmem, size = 0x400, scoped, tag = 'input window, operand 10']
    #allocation20 [shape = 'u8[65536]{0}', space=vmem, size = 0x10000, scoped, tag = 'input window, operand 11']
    #allocation21 [shape = 's32[2]{0}', space=sflag, size = 0x8, scoped, tag = 'scoped memory for tpu_custom_call.1']
    #allocation22 [shape = 'u8[1024]{0}', space=vmem, size = 0x400, scoped, tag = 'input window, operand 12']
    #allocation23 [shape = 'u8[65536]{0}', space=vmem, size = 0x10000, scoped, tag = 'input window, operand 13']
    #allocation24 [shape = 's32[2]{0}', space=sflag, size = 0x8, scoped, tag = 'scoped memory for tpu_custom_call.1']
    #allocation25 [shape = 'u8[1024]{0}', space=vmem, size = 0x400, scoped, tag = 'input window, operand 14']
    #allocation26 [shape = 'u8[1024]{0}', space=vmem, size = 0x400, scoped, tag = 'input window, operand 15']
    #allocation27 [shape = 's32[2]{0}', space=sflag, size = 0x8, scoped, tag = 'scoped memory for tpu_custom_call.1']
    #allocation28 [shape = 'u8[1024]{0}', space=vmem, size = 0x400, scoped, tag = 'input window, operand 16']
    #allocation29 [shape = 'u8[8192]{0}', space=vmem, size = 0x2000, scoped, tag = 'output window, operand 0, single buffered']
    %22 = vsyncpa [#allocation3], 0
    %23 = vsyncpa [#allocation6], 0
    %s24 = scalar_lea.sflag [#allocation6], 1
    %25 = vsyncpa %s24, 0
    %26 = vsyncpa [#allocation9], 0
    %s27 = scalar_lea.sflag [#allocation9], 1
    %28 = vsyncpa %s27, 0
    %29 = vsyncpa [#allocation12], 0
    %s30 = scalar_lea.sflag [#allocation12], 1
    %31 = vsyncpa %s30, 0
    %32 = vsyncpa [#allocation15], 0
    %s33 = scalar_lea.sflag [#allocation15], 1
    %34 = vsyncpa %s33, 0
    %35 = vsyncpa [#allocation18], 0
    %s36 = scalar_lea.sflag [#allocation18], 1
    %37 = vsyncpa %s36, 0
    %38 = vsyncpa [#allocation21], 0
    %s39 = scalar_lea.sflag [#allocation21], 1
    %40 = vsyncpa %s39, 0
    %41 = vsyncpa [#allocation24], 0
    %s42 = scalar_lea.sflag [#allocation24], 1
    %43 = vsyncpa %s42, 0
    %44 = vsyncpa [#allocation27], 0
    %s45 = scalar_lea.sflag [#allocation27], 1
    %46 = vsyncpa %s45, 0
    %47 = vsyncpa [#allocation4], 0
    loop: start=0, step=1, limit=4
    $region2: #{tpu_custom_call.1} parent=1 // loop_pre_header
      _
    $region3: #{tpu_custom_call.1} parent=1 // loop_header
      %s49 = sphi 0, %s53
      %p50 = scmp.ge.s32.totalorder %s49, 4
      %s56 = sphi 0, %s68
      %s57 = sphi 0, %s64
      %s58 = sphi 0, %s56
      %s59 = sphi 0, %s57
      %s60 = sphi 0, %s58
      %s61 = sphi 0, %s59
      %s71 = sphi 0, %s73
      %s74 = sphi 0, %s71
      %s75 = sphi 0, %s74
      %s91 = sphi 0, %s75
      %s97 = sphi 0, %s99
      %s100 = sphi 0, %s97
      %s101 = sphi 0, %s100
      %s117 = sphi 0, %s101
      %s123 = sphi 0, %s125
      %s126 = sphi 0, %s123
      %s127 = sphi 0, %s126
      %s143 = sphi 0, %s127
      %s149 = sphi 0, %s151
      %s152 = sphi 0, %s149
      %s153 = sphi 0, %s152
      %s169 = sphi 0, %s153
      %s175 = sphi 0, %s177
      %s178 = sphi 0, %s175
      %s179 = sphi 0, %s178
      %s195 = sphi 0, %s179
      %s201 = sphi 0, %s203
      %s204 = sphi 0, %s201
      %s205 = sphi 0, %s204
      %s221 = sphi 0, %s205
      %s227 = sphi 0, %s229
      %s230 = sphi 0, %s227
      %s231 = sphi 0, %s230
      %s247 = sphi 0, %s231
      %s253 = sphi 0, %s255
      %s256 = sphi 0, %s253
      %s257 = sphi 0, %s256
      %s273 = sphi 0, %s257
      %s279 = sphi 0, %s281
      %s282 = sphi 0, %s279
      %s283 = sphi 0, %s282
      %s299 = sphi 0, %s283
      %s305 = sphi 0, %s307
      %s308 = sphi 0, %s305
      %s309 = sphi 0, %s308
      %s325 = sphi 0, %s309
      %s331 = sphi 0, %s333
      %s334 = sphi 0, %s331
      %s335 = sphi 0, %s334
      %s351 = sphi 0, %s335
      %s357 = sphi 0, %s359
      %s360 = sphi 0, %s357
      %s361 = sphi 0, %s360
      %s377 = sphi 0, %s361
      %s383 = sphi 0, %s385
      %s386 = sphi 0, %s383
      %s387 = sphi 0, %s386
      %s403 = sphi 0, %s387
      %s409 = sphi 0, %s411
      %s412 = sphi 0, %s409
      %s413 = sphi 0, %s412
      %s429 = sphi 0, %s413
      %s435 = sphi 0, %s437
      %s438 = sphi 0, %s435
      %s439 = sphi 0, %s438
      %s455 = sphi 0, %s439
      %s461 = sphi 0, %s463
      %s464 = sphi 0, %s461
      %s465 = sphi 0, %s464
      %s481 = sphi 0, %s465
      %s487 = sphi 0, %s489
      %s490 = sphi 0, %s487
      %s491 = sphi 0, %s490
      %s507 = sphi 0, %s491
      %s513 = sphi 0, %s515
      %s516 = sphi 0, %s513
      %s517 = sphi 0, %s516
      %s533 = sphi 0, %s517
    $region4: #{tpu_custom_call.1} parent=1 // loop_header_branch
      %52 = sbr.rel (%p50) target = $region8
    $region5: #{tpu_custom_call.1} parent=1 // loop_body
      %s54 = ssub.s32 %s49, 1
      %s55 = ssub.s32 %s49, 2
      %s62 = sadd.s32 1, %s57
      %p63 = scmp.ge.s32.totalorder %s62, 2
      %s64 = scalar_select %p63, 0, %s62
      %s65 = sadd.s32 1, %s56
      %s66 = scalar_select %p63, %s65, %s56
      %p67 = scmp.ge.s32.totalorder %s66, 1
      %s68 = scalar_select %p67, 0, %s66
      %s69 = ssub.s32 %s56, %s68
      %p70 = scmp.eq.s32.totalorder %s69, 0
      %s72 = sadd.s32 %s71, 1
      %s73 = scalar_select %p70, %s71, %s72
      %p76 = pneg %p70
      %p77 = scmp.eq.s32.totalorder %s49, 1
      %p78 = por %p76, %p77
      %p79 = scmp.ne.s32.totalorder %s71, %s74
      %p80 = scmp.eq.s32.totalorder %s49, 0
      %p81 = por %p79, %p80
      %p82 = scmp.ne.s32.totalorder %s71, %s74
      %p83 = scmp.eq.s32.totalorder %s54, 1
      %p84 = por %p82, %p83
      %p85 = scmp.ne.s32.totalorder %s74, %s75
      %p86 = scmp.eq.s32.totalorder %s54, 0
      %p87 = por %p85, %p86
      %p88 = scmp.ne.s32.totalorder %s74, %s75
      %p89 = scmp.eq.s32.totalorder %s55, 1
      %p90 = por %p88, %p89
      %p92 = scmp.ne.s32.totalorder %s75, %s91
      %p93 = scmp.eq.s32.totalorder %s55, 0
      %p94 = por %p92, %p93
      %s95 = ssub.s32 %s57, %s64
      %p96 = scmp.eq.s32.totalorder %s95, 0
      %s98 = sadd.s32 %s97, 1
      %s99 = scalar_select %p96, %s97, %s98
      %p102 = pneg %p96
      %p103 = scmp.eq.s32.totalorder %s49, 1
      %p104 = por %p102, %p103
      %p105 = scmp.ne.s32.totalorder %s97, %s100
      %p106 = scmp.eq.s32.totalorder %s49, 0
      %p107 = por %p105, %p106
      %p108 = scmp.ne.s32.totalorder %s97, %s100
      %p109 = scmp.eq.s32.totalorder %s54, 1
      %p110 = por %p108, %p109
      %p111 = scmp.ne.s32.totalorder %s100, %s101
      %p112 = scmp.eq.s32.totalorder %s54, 0
      %p113 = por %p111, %p112
      %p114 = scmp.ne.s32.totalorder %s100, %s101
      %p115 = scmp.eq.s32.totalorder %s55, 1
      %p116 = por %p114, %p115
      %p118 = scmp.ne.s32.totalorder %s101, %s117
      %p119 = scmp.eq.s32.totalorder %s55, 0
      %p120 = por %p118, %p119
      %s121 = ssub.s32 %s57, %s64
      %p122 = scmp.eq.s32.totalorder %s121, 0
      %s124 = sadd.s32 %s123, 1
      %s125 = scalar_select %p122, %s123, %s124
      %p128 = pneg %p122
      %p129 = scmp.eq.s32.totalorder %s49, 1
      %p130 = por %p128, %p129
      %p131 = scmp.ne.s32.totalorder %s123, %s126
      %p132 = scmp.eq.s32.totalorder %s49, 0
      %p133 = por %p131, %p132
      %p134 = scmp.ne.s32.totalorder %s123, %s126
      %p135 = scmp.eq.s32.totalorder %s54, 1
      %p136 = por %p134, %p135
      %p137 = scmp.ne.s32.totalorder %s126, %s127
      %p138 = scmp.eq.s32.totalorder %s54, 0
      %p139 = por %p137, %p138
      %p140 = scmp.ne.s32.totalorder %s126, %s127
      %p141 = scmp.eq.s32.totalorder %s55, 1
      %p142 = por %p140, %p141
      %p144 = scmp.ne.s32.totalorder %s127, %s143
      %p145 = scmp.eq.s32.totalorder %s55, 0
      %p146 = por %p144, %p145
      %s147 = ssub.s32 %s57, %s64
      %p148 = scmp.eq.s32.totalorder %s147, 0
      %s150 = sadd.s32 %s149, 1
      %s151 = scalar_select %p148, %s149, %s150
      %p154 = pneg %p148
      %p155 = scmp.eq.s32.totalorder %s49, 1
      %p156 = por %p154, %p155
      %p157 = scmp.ne.s32.totalorder %s149, %s152
      %p158 = scmp.eq.s32.totalorder %s49, 0
      %p159 = por %p157, %p158
      %p160 = scmp.ne.s32.totalorder %s149, %s152
      %p161 = scmp.eq.s32.totalorder %s54, 1
      %p162 = por %p160, %p161
      %p163 = scmp.ne.s32.totalorder %s152, %s153
      %p164 = scmp.eq.s32.totalorder %s54, 0
      %p165 = por %p163, %p164
      %p166 = scmp.ne.s32.totalorder %s152, %s153
      %p167 = scmp.eq.s32.totalorder %s55, 1
      %p168 = por %p166, %p167
      %p170 = scmp.ne.s32.totalorder %s153, %s169
      %p171 = scmp.eq.s32.totalorder %s55, 0
      %p172 = por %p170, %p171
      %s173 = ssub.s32 %s57, %s64
      %p174 = scmp.eq.s32.totalorder %s173, 0
      %s176 = sadd.s32 %s175, 1
      %s177 = scalar_select %p174, %s175, %s176
      %p180 = pneg %p174
      %p181 = scmp.eq.s32.totalorder %s49, 1
      %p182 = por %p180, %p181
      %p183 = scmp.ne.s32.totalorder %s175, %s178
      %p184 = scmp.eq.s32.totalorder %s49, 0
      %p185 = por %p183, %p184
      %p186 = scmp.ne.s32.totalorder %s175, %s178
      %p187 = scmp.eq.s32.totalorder %s54, 1
      %p188 = por %p186, %p187
      %p189 = scmp.ne.s32.totalorder %s178, %s179
      %p190 = scmp.eq.s32.totalorder %s54, 0
      %p191 = por %p189, %p190
      %p192 = scmp.ne.s32.totalorder %s178, %s179
      %p193 = scmp.eq.s32.totalorder %s55, 1
      %p194 = por %p192, %p193
      %p196 = scmp.ne.s32.totalorder %s179, %s195
      %p197 = scmp.eq.s32.totalorder %s55, 0
      %p198 = por %p196, %p197
      %s199 = ssub.s32 %s57, %s64
      %p200 = scmp.eq.s32.totalorder %s199, 0
      %s202 = sadd.s32 %s201, 1
      %s203 = scalar_select %p200, %s201, %s202
      %p206 = pneg %p200
      %p207 = scmp.eq.s32.totalorder %s49, 1
      %p208 = por %p206, %p207
      %p209 = scmp.ne.s32.totalorder %s201, %s204
      %p210 = scmp.eq.s32.totalorder %s49, 0
      %p211 = por %p209, %p210
      %p212 = scmp.ne.s32.totalorder %s201, %s204
      %p213 = scmp.eq.s32.totalorder %s54, 1
      %p214 = por %p212, %p213
      %p215 = scmp.ne.s32.totalorder %s204, %s205
      %p216 = scmp.eq.s32.totalorder %s54, 0
      %p217 = por %p215, %p216
      %p218 = scmp.ne.s32.totalorder %s204, %s205
      %p219 = scmp.eq.s32.totalorder %s55, 1
      %p220 = por %p218, %p219
      %p222 = scmp.ne.s32.totalorder %s205, %s221
      %p223 = scmp.eq.s32.totalorder %s55, 0
      %p224 = por %p222, %p223
      %s225 = ssub.s32 %s57, %s64
      %p226 = scmp.eq.s32.totalorder %s225, 0
      %s228 = sadd.s32 %s227, 1
      %s229 = scalar_select %p226, %s227, %s228
      %p232 = pneg %p226
      %p233 = scmp.eq.s32.totalorder %s49, 1
      %p234 = por %p232, %p233
      %p235 = scmp.ne.s32.totalorder %s227, %s230
      %p236 = scmp.eq.s32.totalorder %s49, 0
      %p237 = por %p235, %p236
      %p238 = scmp.ne.s32.totalorder %s227, %s230
      %p239 = scmp.eq.s32.totalorder %s54, 1
      %p240 = por %p238, %p239
      %p241 = scmp.ne.s32.totalorder %s230, %s231
      %p242 = scmp.eq.s32.totalorder %s54, 0
      %p243 = por %p241, %p242
      %p244 = scmp.ne.s32.totalorder %s230, %s231
      %p245 = scmp.eq.s32.totalorder %s55, 1
      %p246 = por %p244, %p245
      %p248 = scmp.ne.s32.totalorder %s231, %s247
      %p249 = scmp.eq.s32.totalorder %s55, 0
      %p250 = por %p248, %p249
      %s251 = ssub.s32 %s57, %s64
      %p252 = scmp.eq.s32.totalorder %s251, 0
      %s254 = sadd.s32 %s253, 1
      %s255 = scalar_select %p252, %s253, %s254
      %p258 = pneg %p252
      %p259 = scmp.eq.s32.totalorder %s49, 1
      %p260 = por %p258, %p259
      %p261 = scmp.ne.s32.totalorder %s253, %s256
      %p262 = scmp.eq.s32.totalorder %s49, 0
      %p263 = por %p261, %p262
      %p264 = scmp.ne.s32.totalorder %s253, %s256
      %p265 = scmp.eq.s32.totalorder %s54, 1
      %p266 = por %p264, %p265
      %p267 = scmp.ne.s32.totalorder %s256, %s257
      %p268 = scmp.eq.s32.totalorder %s54, 0
      %p269 = por %p267, %p268
      %p270 = scmp.ne.s32.totalorder %s256, %s257
      %p271 = scmp.eq.s32.totalorder %s55, 1
      %p272 = por %p270, %p271
      %p274 = scmp.ne.s32.totalorder %s257, %s273
      %p275 = scmp.eq.s32.totalorder %s55, 0
      %p276 = por %p274, %p275
      %s277 = ssub.s32 %s57, %s64
      %p278 = scmp.eq.s32.totalorder %s277, 0
      %s280 = sadd.s32 %s279, 1
      %s281 = scalar_select %p278, %s279, %s280
      %p284 = pneg %p278
      %p285 = scmp.eq.s32.totalorder %s49, 1
      %p286 = por %p284, %p285
      %p287 = scmp.ne.s32.totalorder %s279, %s282
      %p288 = scmp.eq.s32.totalorder %s49, 0
      %p289 = por %p287, %p288
      %p290 = scmp.ne.s32.totalorder %s279, %s282
      %p291 = scmp.eq.s32.totalorder %s54, 1
      %p292 = por %p290, %p291
      %p293 = scmp.ne.s32.totalorder %s282, %s283
      %p294 = scmp.eq.s32.totalorder %s54, 0
      %p295 = por %p293, %p294
      %p296 = scmp.ne.s32.totalorder %s282, %s283
      %p297 = scmp.eq.s32.totalorder %s55, 1
      %p298 = por %p296, %p297
      %p300 = scmp.ne.s32.totalorder %s283, %s299
      %p301 = scmp.eq.s32.totalorder %s55, 0
      %p302 = por %p300, %p301
      %s303 = ssub.s32 %s57, %s64
      %p304 = scmp.eq.s32.totalorder %s303, 0
      %s306 = sadd.s32 %s305, 1
      %s307 = scalar_select %p304, %s305, %s306
      %p310 = pneg %p304
      %p311 = scmp.eq.s32.totalorder %s49, 1
      %p312 = por %p310, %p311
      %p313 = scmp.ne.s32.totalorder %s305, %s308
      %p314 = scmp.eq.s32.totalorder %s49, 0
      %p315 = por %p313, %p314
      %p316 = scmp.ne.s32.totalorder %s305, %s308
      %p317 = scmp.eq.s32.totalorder %s54, 1
      %p318 = por %p316, %p317
      %p319 = scmp.ne.s32.totalorder %s308, %s309
      %p320 = scmp.eq.s32.totalorder %s54, 0
      %p321 = por %p319, %p320
      %p322 = scmp.ne.s32.totalorder %s308, %s309
      %p323 = scmp.eq.s32.totalorder %s55, 1
      %p324 = por %p322, %p323
      %p326 = scmp.ne.s32.totalorder %s309, %s325
      %p327 = scmp.eq.s32.totalorder %s55, 0
      %p328 = por %p326, %p327
      %s329 = ssub.s32 %s57, %s64
      %p330 = scmp.eq.s32.totalorder %s329, 0
      %s332 = sadd.s32 %s331, 1
      %s333 = scalar_select %p330, %s331, %s332
      %p336 = pneg %p330
      %p337 = scmp.eq.s32.totalorder %s49, 1
      %p338 = por %p336, %p337
      %p339 = scmp.ne.s32.totalorder %s331, %s334
      %p340 = scmp.eq.s32.totalorder %s49, 0
      %p341 = por %p339, %p340
      %p342 = scmp.ne.s32.totalorder %s331, %s334
      %p343 = scmp.eq.s32.totalorder %s54, 1
      %p344 = por %p342, %p343
      %p345 = scmp.ne.s32.totalorder %s334, %s335
      %p346 = scmp.eq.s32.totalorder %s54, 0
      %p347 = por %p345, %p346
      %p348 = scmp.ne.s32.totalorder %s334, %s335
      %p349 = scmp.eq.s32.totalorder %s55, 1
      %p350 = por %p348, %p349
      %p352 = scmp.ne.s32.totalorder %s335, %s351
      %p353 = scmp.eq.s32.totalorder %s55, 0
      %p354 = por %p352, %p353
      %s355 = ssub.s32 %s57, %s64
      %p356 = scmp.eq.s32.totalorder %s355, 0
      %s358 = sadd.s32 %s357, 1
      %s359 = scalar_select %p356, %s357, %s358
      %p362 = pneg %p356
      %p363 = scmp.eq.s32.totalorder %s49, 1
      %p364 = por %p362, %p363
      %p365 = scmp.ne.s32.totalorder %s357, %s360
      %p366 = scmp.eq.s32.totalorder %s49, 0
      %p367 = por %p365, %p366
      %p368 = scmp.ne.s32.totalorder %s357, %s360
      %p369 = scmp.eq.s32.totalorder %s54, 1
      %p370 = por %p368, %p369
      %p371 = scmp.ne.s32.totalorder %s360, %s361
      %p372 = scmp.eq.s32.totalorder %s54, 0
      %p373 = por %p371, %p372
      %p374 = scmp.ne.s32.totalorder %s360, %s361
      %p375 = scmp.eq.s32.totalorder %s55, 1
      %p376 = por %p374, %p375
      %p378 = scmp.ne.s32.totalorder %s361, %s377
      %p379 = scmp.eq.s32.totalorder %s55, 0
      %p380 = por %p378, %p379
      %s381 = ssub.s32 %s57, %s64
      %p382 = scmp.eq.s32.totalorder %s381, 0
      %s384 = sadd.s32 %s383, 1
      %s385 = scalar_select %p382, %s383, %s384
      %p388 = pneg %p382
      %p389 = scmp.eq.s32.totalorder %s49, 1
      %p390 = por %p388, %p389
      %p391 = scmp.ne.s32.totalorder %s383, %s386
      %p392 = scmp.eq.s32.totalorder %s49, 0
      %p393 = por %p391, %p392
      %p394 = scmp.ne.s32.totalorder %s383, %s386
      %p395 = scmp.eq.s32.totalorder %s54, 1
      %p396 = por %p394, %p395
      %p397 = scmp.ne.s32.totalorder %s386, %s387
      %p398 = scmp.eq.s32.totalorder %s54, 0
      %p399 = por %p397, %p398
      %p400 = scmp.ne.s32.totalorder %s386, %s387
      %p401 = scmp.eq.s32.totalorder %s55, 1
      %p402 = por %p400, %p401
      %p404 = scmp.ne.s32.totalorder %s387, %s403
      %p405 = scmp.eq.s32.totalorder %s55, 0
      %p406 = por %p404, %p405
      %s407 = ssub.s32 %s57, %s64
      %p408 = scmp.eq.s32.totalorder %s407, 0
      %s410 = sadd.s32 %s409, 1
      %s411 = scalar_select %p408, %s409, %s410
      %p414 = pneg %p408
      %p415 = scmp.eq.s32.totalorder %s49, 1
      %p416 = por %p414, %p415
      %p417 = scmp.ne.s32.totalorder %s409, %s412
      %p418 = scmp.eq.s32.totalorder %s49, 0
      %p419 = por %p417, %p418
      %p420 = scmp.ne.s32.totalorder %s409, %s412
      %p421 = scmp.eq.s32.totalorder %s54, 1
      %p422 = por %p420, %p421
      %p423 = scmp.ne.s32.totalorder %s412, %s413
      %p424 = scmp.eq.s32.totalorder %s54, 0
      %p425 = por %p423, %p424
      %p426 = scmp.ne.s32.totalorder %s412, %s413
      %p427 = scmp.eq.s32.totalorder %s55, 1
      %p428 = por %p426, %p427
      %p430 = scmp.ne.s32.totalorder %s413, %s429
      %p431 = scmp.eq.s32.totalorder %s55, 0
      %p432 = por %p430, %p431
      %s433 = ssub.s32 %s57, %s64
      %p434 = scmp.eq.s32.totalorder %s433, 0
      %s436 = sadd.s32 %s435, 1
      %s437 = scalar_select %p434, %s435, %s436
      %p440 = pneg %p434
      %p441 = scmp.eq.s32.totalorder %s49, 1
      %p442 = por %p440, %p441
      %p443 = scmp.ne.s32.totalorder %s435, %s438
      %p444 = scmp.eq.s32.totalorder %s49, 0
      %p445 = por %p443, %p444
      %p446 = scmp.ne.s32.totalorder %s435, %s438
      %p447 = scmp.eq.s32.totalorder %s54, 1
      %p448 = por %p446, %p447
      %p449 = scmp.ne.s32.totalorder %s438, %s439
      %p450 = scmp.eq.s32.totalorder %s54, 0
      %p451 = por %p449, %p450
      %p452 = scmp.ne.s32.totalorder %s438, %s439
      %p453 = scmp.eq.s32.totalorder %s55, 1
      %p454 = por %p452, %p453
      %p456 = scmp.ne.s32.totalorder %s439, %s455
      %p457 = scmp.eq.s32.totalorder %s55, 0
      %p458 = por %p456, %p457
      %s459 = ssub.s32 %s57, %s64
      %p460 = scmp.eq.s32.totalorder %s459, 0
      %s462 = sadd.s32 %s461, 1
      %s463 = scalar_select %p460, %s461, %s462
      %p466 = pneg %p460
      %p467 = scmp.eq.s32.totalorder %s49, 1
      %p468 = por %p466, %p467
      %p469 = scmp.ne.s32.totalorder %s461, %s464
      %p470 = scmp.eq.s32.totalorder %s49, 0
      %p471 = por %p469, %p470
      %p472 = scmp.ne.s32.totalorder %s461, %s464
      %p473 = scmp.eq.s32.totalorder %s54, 1
      %p474 = por %p472, %p473
      %p475 = scmp.ne.s32.totalorder %s464, %s465
      %p476 = scmp.eq.s32.totalorder %s54, 0
      %p477 = por %p475, %p476
      %p478 = scmp.ne.s32.totalorder %s464, %s465
      %p479 = scmp.eq.s32.totalorder %s55, 1
      %p480 = por %p478, %p479
      %p482 = scmp.ne.s32.totalorder %s465, %s481
      %p483 = scmp.eq.s32.totalorder %s55, 0
      %p484 = por %p482, %p483
      %s485 = ssub.s32 %s57, %s64
      %p486 = scmp.eq.s32.totalorder %s485, 0
      %s488 = sadd.s32 %s487, 1
      %s489 = scalar_select %p486, %s487, %s488
      %p492 = pneg %p486
      %p493 = scmp.eq.s32.totalorder %s49, 1
      %p494 = por %p492, %p493
      %p495 = scmp.ne.s32.totalorder %s487, %s490
      %p496 = scmp.eq.s32.totalorder %s49, 0
      %p497 = por %p495, %p496
      %p498 = scmp.ne.s32.totalorder %s487, %s490
      %p499 = scmp.eq.s32.totalorder %s54, 1
      %p500 = por %p498, %p499
      %p501 = scmp.ne.s32.totalorder %s490, %s491
      %p502 = scmp.eq.s32.totalorder %s54, 0
      %p503 = por %p501, %p502
      %p504 = scmp.ne.s32.totalorder %s490, %s491
      %p505 = scmp.eq.s32.totalorder %s55, 1
      %p506 = por %p504, %p505
      %p508 = scmp.ne.s32.totalorder %s491, %s507
      %p509 = scmp.eq.s32.totalorder %s55, 0
      %p510 = por %p508, %p509
      %s511 = ssub.s32 %s56, %s68
      %p512 = scmp.eq.s32.totalorder %s511, 0
      %s514 = sadd.s32 %s513, 1
      %s515 = scalar_select %p512, %s513, %s514
      %p518 = pneg %p512
      %p519 = scmp.eq.s32.totalorder %s49, 1
      %p520 = por %p518, %p519
      %p521 = scmp.ne.s32.totalorder %s513, %s516
      %p522 = scmp.eq.s32.totalorder %s49, 0
      %p523 = por %p521, %p522
      %p524 = scmp.ne.s32.totalorder %s513, %s516
      %p525 = scmp.eq.s32.totalorder %s54, 1
      %p526 = por %p524, %p525
      %p527 = scmp.ne.s32.totalorder %s516, %s517
      %p528 = scmp.eq.s32.totalorder %s54, 0
      %p529 = por %p527, %p528
      %p530 = scmp.ne.s32.totalorder %s516, %s517
      %p531 = scmp.eq.s32.totalorder %s55, 1
      %p532 = por %p530, %p531
      %p534 = scmp.ne.s32.totalorder %s517, %s533
      %p535 = scmp.eq.s32.totalorder %s55, 0
      %p536 = por %p534, %p535
      %p537 = scmp.le.s32.totalorder 1, %s49
      %p538 = scmp.lt.s32.totalorder %s49, 3
      %p539 = pnand %p537, %p538
      %p540 = pneg %p539
      // Predicated region
      $region9: #{tpu_custom_call.1} parent=5 // pred_check
        _
      $region10: #{tpu_custom_call.1} parent=5 // pred_check_branch
        %542 = sbr.rel (%p539) target = $region12
      $region11: #{tpu_custom_call.1} parent=5 // pred_region
        %s543 = ssub.s32 %s49, 1
        // Predicated region
        $region13: #{tpu_custom_call.1} parent=11 // pred_check
          %p544 = pneg %p87
        $region14: #{tpu_custom_call.1} parent=11 // pred_check_branch
          %546 = sbr.rel (%p544) target = $region16
        $region15: #{tpu_custom_call.1} parent=11 // pred_region
          %s547 = smul.u32 2, %s58
          %s549 = ssub.s32 256, 256
          %550 = vsyncadd [#allocation3], %s549
          %s551 = smul.addr %s547, 128
          %s552 = scalar_lea.hbm %s0, %s551
          %s553 = sshll.u32 [#allocation2], 4
          %s554 = int_to_ptr.vmem [resolvable:$true] %s553
          %559 = dma.hbm_to_vmem [thread:$0]  %s552, 256, %s554, [#allocation3], 128, 128, 8
        $region16: #{tpu_custom_call.1} parent=11 // pred_fallthru
          _
      $region12: #{tpu_custom_call.1} parent=5 // pred_fallthru
        _
      %p560 = scmp.lt.s32.totalorder %s49, 2
      // Predicated region
      $region17: #{tpu_custom_call.1} parent=5 // pred_check
        %p561 = pneg %p560
      $region18: #{tpu_custom_call.1} parent=5 // pred_check_branch
        %563 = sbr.rel (%p561) target = $region20
      $region19: #{tpu_custom_call.1} parent=5 // pred_region
        // Predicated region
        $region21: #{tpu_custom_call.1} parent=19 // pred_check
          %p564 = pneg %p107
        $region22: #{tpu_custom_call.1} parent=19 // pred_check_branch
          %566 = sbr.rel (%p564) target = $region24
        $region23: #{tpu_custom_call.1} parent=19 // pred_region
          %s567 = sand.u32 %s49, 1
          %s568 = scalar_lea.sflag [#allocation6], %s567
          %s569 = sand.u32 %s97, 1
          %s570 = smul.addr %s569, 256
          %s571 = scalar_lea.vmem [#allocation5], %s570
          %s573 = ssub.s32 4096, 4096
          %574 = vsyncadd %s568, %s573
          %s575 = smul.addr %s57, 64
          %s576 = smul.addr %s575, 64
          %s577 = scalar_lea.hbm %s1, %s576
          %s578 = sshll.u32 %s571, 4
          %s579 = int_to_ptr.vmem [resolvable:$true] %s578
          %584 = dma.hbm_to_vmem [thread:$0]  %s577, 4096, %s579, %s568, 64, 64, 4
        $region24: #{tpu_custom_call.1} parent=19 // pred_fallthru
          _
        // Predicated region
        $region25: #{tpu_custom_call.1} parent=19 // pred_check
          %p585 = pneg %p133
        $region26: #{tpu_custom_call.1} parent=19 // pred_check_branch
          %587 = sbr.rel (%p585) target = $region28
        $region27: #{tpu_custom_call.1} parent=19 // pred_region
          %s588 = sand.u32 %s49, 1
          %s589 = scalar_lea.sflag [#allocation6], %s588
          %s590 = sand.u32 %s123, 1
          %s591 = smul.addr %s590, 4
          %s592 = scalar_lea.vmem [#allocation7], %s591
          %s594 = ssub.s32 64, 64
          %595 = vsyncadd %s589, %s594
          %s596 = smul.addr %s57, 4
          %s597 = smul.addr %s596, 16
          %s598 = scalar_lea.hbm %s2, %s597
          %s599 = sshll.u32 %s592, 4
          %s600 = int_to_ptr.vmem [resolvable:$true] %s599
          %605 = dma.hbm_to_vmem [thread:$0]  %s598, 64, %s600, %s589, 16, 16, 1
        $region28: #{tpu_custom_call.1} parent=19 // pred_fallthru
          _
        // Predicated region
        $region29: #{tpu_custom_call.1} parent=19 // pred_check
          %p606 = pneg %p159
        $region30: #{tpu_custom_call.1} parent=19 // pred_check_branch
          %608 = sbr.rel (%p606) target = $region32
        $region31: #{tpu_custom_call.1} parent=19 // pred_region
          %s609 = sand.u32 %s49, 1
          %s610 = scalar_lea.sflag [#allocation9], %s609
          %s611 = sand.u32 %s149, 1
          %s612 = smul.addr %s611, 256
          %s613 = scalar_lea.vmem [#allocation8], %s612
          %s615 = ssub.s32 4096, 4096
          %616 = vsyncadd %s610, %s615
          %s617 = smul.addr %s57, 64
          %s618 = smul.addr %s617, 64
          %s619 = scalar_lea.hbm %s3, %s618
          %s620 = sshll.u32 %s613, 4
          %s621 = int_to_ptr.vmem [resolvable:$true] %s620
          %626 = dma.hbm_to_vmem [thread:$0]  %s619, 4096, %s621, %s610, 64, 64, 4
        $region32: #{tpu_custom_call.1} parent=19 // pred_fallthru
          _
        // Predicated region
        $region33: #{tpu_custom_call.1} parent=19 // pred_check
          %p627 = pneg %p185
        $region34: #{tpu_custom_call.1} parent=19 // pred_check_branch
          %629 = sbr.rel (%p627) target = $region36
        $region35: #{tpu_custom_call.1} parent=19 // pred_region
          %s630 = sand.u32 %s49, 1
          %s631 = scalar_lea.sflag [#allocation9], %s630
          %s632 = sand.u32 %s175, 1
          %s633 = smul.addr %s632, 4
          %s634 = scalar_lea.vmem [#allocation10], %s633
          %s636 = ssub.s32 64, 64
          %637 = vsyncadd %s631, %s636
          %s638 = smul.addr %s57, 4
          %s639 = smul.addr %s638, 16
          %s640 = scalar_lea.hbm %s4, %s639
          %s641 = sshll.u32 %s634, 4
          %s642 = int_to_ptr.vmem [resolvable:$true] %s641
          %647 = dma.hbm_to_vmem [thread:$0]  %s640, 64, %s642, %s631, 16, 16, 1
        $region36: #{tpu_custom_call.1} parent=19 // pred_fallthru
          _
        // Predicated region
        $region37: #{tpu_custom_call.1} parent=19 // pred_check
          %p648 = pneg %p211
        $region38: #{tpu_custom_call.1} parent=19 // pred_check_branch
          %650 = sbr.rel (%p648) target = $region40
        $region39: #{tpu_custom_call.1} parent=19 // pred_region
          %s651 = sand.u32 %s49, 1
          %s652 = scalar_lea.sflag [#allocation12], %s651
          %s653 = sand.u32 %s201, 1
          %s654 = smul.addr %s653, 256
          %s655 = scalar_lea.vmem [#allocation11], %s654
          %s657 = ssub.s32 4096, 4096
          %658 = vsyncadd %s652, %s657
          %s659 = smul.addr %s57, 64
          %s660 = smul.addr %s659, 64
          %s661 = scalar_lea.hbm %s5, %s660
          %s662 = sshll.u32 %s655, 4
          %s663 = int_to_ptr.vmem [resolvable:$true] %s662
          %668 = dma.hbm_to_vmem [thread:$0]  %s661, 4096, %s663, %s652, 64, 64, 4
        $region40: #{tpu_custom_call.1} parent=19 // pred_fallthru
          _
        // Predicated region
        $region41: #{tpu_custom_call.1} parent=19 // pred_check
          %p669 = pneg %p237
        $region42: #{tpu_custom_call.1} parent=19 // pred_check_branch
          %671 = sbr.rel (%p669) target = $region44
        $region43: #{tpu_custom_call.1} parent=19 // pred_region
          %s672 = sand.u32 %s49, 1
          %s673 = scalar_lea.sflag [#allocation12], %s672
          %s674 = sand.u32 %s227, 1
          %s675 = smul.addr %s674, 4
          %s676 = scalar_lea.vmem [#allocation13], %s675
          %s678 = ssub.s32 64, 64
          %679 = vsyncadd %s673, %s678
          %s680 = smul.addr %s57, 4
          %s681 = smul.addr %s680, 16
          %s682 = scalar_lea.hbm %s6, %s681
          %s683 = sshll.u32 %s676, 4
          %s684 = int_to_ptr.vmem [resolvable:$true] %s683
          %689 = dma.hbm_to_vmem [thread:$0]  %s682, 64, %s684, %s673, 16, 16, 1
        $region44: #{tpu_custom_call.1} parent=19 // pred_fallthru
          _
        // Predicated region
        $region45: #{tpu_custom_call.1} parent=19 // pred_check
          %p690 = pneg %p263
        $region46: #{tpu_custom_call.1} parent=19 // pred_check_branch
          %692 = sbr.rel (%p690) target = $region48
        $region47: #{tpu_custom_call.1} parent=19 // pred_region
          %s693 = sand.u32 %s49, 1
          %s694 = scalar_lea.sflag [#allocation15], %s693
          %s695 = sand.u32 %s253, 1
          %s696 = smul.addr %s695, 16
          %s697 = scalar_lea.vmem [#allocation14], %s696
          %s699 = ssub.s32 256, 256
          %700 = vsyncadd %s694, %s699
          %s701 = smul.addr %s57, 4
          %s702 = smul.addr %s701, 64
          %s703 = scalar_lea.hbm %s7, %s702
          %s704 = sshll.u32 %s697, 4
          %s705 = int_to_ptr.vmem [resolvable:$true] %s704
          %710 = dma.hbm_to_vmem [thread:$0]  %s703, 256, %s705, %s694, 64, 64, 4
        $region48: #{tpu_custom_call.1} parent=19 // pred_fallthru
          _
        // Predicated region
        $region49: #{tpu_custom_call.1} parent=19 // pred_check
          %p711 = pneg %p289
        $region50: #{tpu_custom_call.1} parent=19 // pred_check_branch
          %713 = sbr.rel (%p711) target = $region52
        $region51: #{tpu_custom_call.1} parent=19 // pred_region
          %s714 = sand.u32 %s49, 1
          %s715 = scalar_lea.sflag [#allocation15], %s714
          %s716 = sand.u32 %s279, 1
          %s717 = scalar_lea.vmem [#allocation16], %s716
          %s719 = ssub.s32 16, 16
          %720 = vsyncadd %s715, %s719
          %s721 = smul.addr %s57, 16
          %s722 = scalar_lea.hbm %s8, %s721
          %s724 = sshll.u32 %s717, 4
          %s725 = int_to_ptr.vmem [resolvable:$true] %s724
          %727 = dma.hbm_to_vmem [thread:$0]  %s722, 16, %s725, %s715
        $region52: #{tpu_custom_call.1} parent=19 // pred_fallthru
          _
        // Predicated region
        $region53: #{tpu_custom_call.1} parent=19 // pred_check
          %p728 = pneg %p315
        $region54: #{tpu_custom_call.1} parent=19 // pred_check_branch
          %730 = sbr.rel (%p728) target = $region56
        $region55: #{tpu_custom_call.1} parent=19 // pred_region
          %s731 = sand.u32 %s49, 1
          %s732 = scalar_lea.sflag [#allocation18], %s731
          %s733 = sand.u32 %s305, 1
          %s734 = scalar_lea.vmem [#allocation17], %s733
          %s736 = ssub.s32 16, 16
          %737 = vsyncadd %s732, %s736
          %s738 = smul.addr %s57, 16
          %s739 = scalar_lea.hbm %s9, %s738
          %s741 = sshll.u32 %s734, 4
          %s742 = int_to_ptr.vmem [resolvable:$true] %s741
          %744 = dma.hbm_to_vmem [thread:$0]  %s739, 16, %s742, %s732
        $region56: #{tpu_custom_call.1} parent=19 // pred_fallthru
          _
        // Predicated region
        $region57: #{tpu_custom_call.1} parent=19 // pred_check
          %p745 = pneg %p341
        $region58: #{tpu_custom_call.1} parent=19 // pred_check_branch
          %747 = sbr.rel (%p745) target = $region60
        $region59: #{tpu_custom_call.1} parent=19 // pred_region
          %s748 = sand.u32 %s49, 1
          %s749 = scalar_lea.sflag [#allocation18], %s748
          %s750 = sand.u32 %s331, 1
          %s751 = scalar_lea.vmem [#allocation19], %s750
          %s753 = ssub.s32 16, 16
          %754 = vsyncadd %s749, %s753
          %s755 = smul.addr %s57, 16
          %s756 = scalar_lea.hbm %s10, %s755
          %s758 = sshll.u32 %s751, 4
          %s759 = int_to_ptr.vmem [resolvable:$true] %s758
          %761 = dma.hbm_to_vmem [thread:$0]  %s756, 16, %s759, %s749
        $region60: #{tpu_custom_call.1} parent=19 // pred_fallthru
          _
        // Predicated region
        $region61: #{tpu_custom_call.1} parent=19 // pred_check
          %p762 = pneg %p367
        $region62: #{tpu_custom_call.1} parent=19 // pred_check_branch
          %764 = sbr.rel (%p762) target = $region64
        $region63: #{tpu_custom_call.1} parent=19 // pred_region
          %s765 = sand.u32 %s49, 1
          %s766 = scalar_lea.sflag [#allocation21], %s765
          %s767 = sand.u32 %s357, 1
          %s768 = smul.addr %s767, 64
          %s769 = scalar_lea.vmem [#allocation20], %s768
          %s771 = ssub.s32 1024, 1024
          %772 = vsyncadd %s766, %s771
          %s773 = smul.addr %s57, 16
          %s774 = smul.addr %s773, 64
          %s775 = scalar_lea.hbm %s11, %s774
          %s776 = sshll.u32 %s769, 4
          %s777 = int_to_ptr.vmem [resolvable:$true] %s776
          %782 = dma.hbm_to_vmem [thread:$0]  %s775, 1024, %s777, %s766, 64, 64, 4
        $region64: #{tpu_custom_call.1} parent=19 // pred_fallthru
          _
        // Predicated region
        $region65: #{tpu_custom_call.1} parent=19 // pred_check
          %p783 = pneg %p393
        $region66: #{tpu_custom_call.1} parent=19 // pred_check_branch
          %785 = sbr.rel (%p783) target = $region68
        $region67: #{tpu_custom_call.1} parent=19 // pred_region
          %s786 = sand.u32 %s49, 1
          %s787 = scalar_lea.sflag [#allocation21], %s786
          %s788 = sand.u32 %s383, 1
          %s789 = scalar_lea.vmem [#allocation22], %s788
          %s791 = ssub.s32 16, 16
          %792 = vsyncadd %s787, %s791
          %s793 = smul.addr %s57, 16
          %s794 = scalar_lea.hbm %s12, %s793
          %s796 = sshll.u32 %s789, 4
          %s797 = int_to_ptr.vmem [resolvable:$true] %s796
          %799 = dma.hbm_to_vmem [thread:$0]  %s794, 16, %s797, %s787
        $region68: #{tpu_custom_call.1} parent=19 // pred_fallthru
          _
        // Predicated region
        $region69: #{tpu_custom_call.1} parent=19 // pred_check
          %p800 = pneg %p419
        $region70: #{tpu_custom_call.1} parent=19 // pred_check_branch
          %802 = sbr.rel (%p800) target = $region72
        $region71: #{tpu_custom_call.1} parent=19 // pred_region
          %s803 = sand.u32 %s49, 1
          %s804 = scalar_lea.sflag [#allocation24], %s803
          %s805 = sand.u32 %s409, 1
          %s806 = smul.addr %s805, 64
          %s807 = scalar_lea.vmem [#allocation23], %s806
          %s809 = ssub.s32 1024, 1024
          %810 = vsyncadd %s804, %s809
          %s811 = smul.addr %s57, 16
          %s812 = smul.addr %s811, 64
          %s813 = scalar_lea.hbm %s13, %s812
          %s814 = sshll.u32 %s807, 4
          %s815 = int_to_ptr.vmem [resolvable:$true] %s814
          %820 = dma.hbm_to_vmem [thread:$0]  %s813, 1024, %s815, %s804, 64, 64, 4
        $region72: #{tpu_custom_call.1} parent=19 // pred_fallthru
          _
        // Predicated region
        $region73: #{tpu_custom_call.1} parent=19 // pred_check
          %p821 = pneg %p445
        $region74: #{tpu_custom_call.1} parent=19 // pred_check_branch
          %823 = sbr.rel (%p821) target = $region76
        $region75: #{tpu_custom_call.1} parent=19 // pred_region
          %s824 = sand.u32 %s49, 1
          %s825 = scalar_lea.sflag [#allocation24], %s824
          %s826 = sand.u32 %s435, 1
          %s827 = scalar_lea.vmem [#allocation25], %s826
          %s829 = ssub.s32 16, 16
          %830 = vsyncadd %s825, %s829
          %s831 = smul.addr %s57, 16
          %s832 = scalar_lea.hbm %s14, %s831
          %s834 = sshll.u32 %s827, 4
          %s835 = int_to_ptr.vmem [resolvable:$true] %s834
          %837 = dma.hbm_to_vmem [thread:$0]  %s832, 16, %s835, %s825
        $region76: #{tpu_custom_call.1} parent=19 // pred_fallthru
          _
        // Predicated region
        $region77: #{tpu_custom_call.1} parent=19 // pred_check
          %p838 = pneg %p471
        $region78: #{tpu_custom_call.1} parent=19 // pred_check_branch
          %840 = sbr.rel (%p838) target = $region80
        $region79: #{tpu_custom_call.1} parent=19 // pred_region
          %s841 = sand.u32 %s49, 1
          %s842 = scalar_lea.sflag [#allocation27], %s841
          %s843 = sand.u32 %s461, 1
          %s844 = scalar_lea.vmem [#allocation26], %s843
          %s846 = ssub.s32 16, 16
          %847 = vsyncadd %s842, %s846
          %s848 = smul.addr %s57, 16
          %s849 = scalar_lea.hbm %s15, %s848
          %s851 = sshll.u32 %s844, 4
          %s852 = int_to_ptr.vmem [resolvable:$true] %s851
          %854 = dma.hbm_to_vmem [thread:$0]  %s849, 16, %s852, %s842
        $region80: #{tpu_custom_call.1} parent=19 // pred_fallthru
          _
        // Predicated region
        $region81: #{tpu_custom_call.1} parent=19 // pred_check
          %p855 = pneg %p497
        $region82: #{tpu_custom_call.1} parent=19 // pred_check_branch
          %857 = sbr.rel (%p855) target = $region84
        $region83: #{tpu_custom_call.1} parent=19 // pred_region
          %s858 = sand.u32 %s49, 1
          %s859 = scalar_lea.sflag [#allocation27], %s858
          %s860 = sand.u32 %s487, 1
          %s861 = scalar_lea.vmem [#allocation28], %s860
          %s863 = ssub.s32 16, 16
          %864 = vsyncadd %s859, %s863
          %s865 = smul.addr %s57, 16
          %s866 = scalar_lea.hbm %s16, %s865
          %s868 = sshll.u32 %s861, 4
          %s869 = int_to_ptr.vmem [resolvable:$true] %s868
          %871 = dma.hbm_to_vmem [thread:$0]  %s866, 16, %s869, %s859
        $region84: #{tpu_custom_call.1} parent=19 // pred_fallthru
          _
      $region20: #{tpu_custom_call.1} parent=5 // pred_fallthru
        _
      %p872 = scmp.le.s32.totalorder 1, %s49
      %p873 = scmp.lt.s32.totalorder %s49, 3
      %p874 = pnand %p872, %p873
      %p875 = pneg %p874
      // Predicated region
      $region85: #{tpu_custom_call.1} parent=5 // pred_check
        _
      $region86: #{tpu_custom_call.1} parent=5 // pred_check_branch
        %877 = sbr.rel (%p874) target = $region88
      $region87: #{tpu_custom_call.1} parent=5 // pred_region
        %s878 = ssub.s32 %s49, 1
        // Predicated region
        $region89: #{tpu_custom_call.1} parent=87 // pred_check
          %p879 = pneg %p87
        $region90: #{tpu_custom_call.1} parent=87 // pred_check_branch
          %881 = sbr.rel (%p879) target = $region92
        $region91: #{tpu_custom_call.1} parent=87 // pred_region
          %882 = dma.done [#allocation3], 256
        $region92: #{tpu_custom_call.1} parent=87 // pred_fallthru
          _
        %s883 = sand.u32 %s54, 1
        %s884 = scalar_lea.sflag [#allocation6], %s883
        %s885 = sand.u32 %s100, 1
        %s886 = smul.addr %s885, 256
        %s887 = scalar_lea.vmem [#allocation5], %s886
        // Predicated region
        $region93: #{tpu_custom_call.1} parent=87 // pred_check
          %p888 = pneg %p113
        $region94: #{tpu_custom_call.1} parent=87 // pred_check_branch
          %890 = sbr.rel (%p888) target = $region96
        $region95: #{tpu_custom_call.1} parent=87 // pred_region
          %891 = dma.done %s884, 4096
        $region96: #{tpu_custom_call.1} parent=87 // pred_fallthru
          _
        %s892 = sand.u32 %s54, 1
        %s893 = scalar_lea.sflag [#allocation6], %s892
        %s894 = sand.u32 %s126, 1
        %s895 = smul.addr %s894, 4
        %s896 = scalar_lea.vmem [#allocation7], %s895
        // Predicated region
        $region97: #{tpu_custom_call.1} parent=87 // pred_check
          %p897 = pneg %p139
        $region98: #{tpu_custom_call.1} parent=87 // pred_check_branch
          %899 = sbr.rel (%p897) target = $region100
        $region99: #{tpu_custom_call.1} parent=87 // pred_region
          %900 = dma.done %s893, 64
        $region100: #{tpu_custom_call.1} parent=87 // pred_fallthru
          _
        %s901 = sand.u32 %s54, 1
        %s902 = scalar_lea.sflag [#allocation9], %s901
        %s903 = sand.u32 %s152, 1
        %s904 = smul.addr %s903, 256
        %s905 = scalar_lea.vmem [#allocation8], %s904
        // Predicated region
        $region101: #{tpu_custom_call.1} parent=87 // pred_check
          %p906 = pneg %p165
        $region102: #{tpu_custom_call.1} parent=87 // pred_check_branch
          %908 = sbr.rel (%p906) target = $region104
        $region103: #{tpu_custom_call.1} parent=87 // pred_region
          %909 = dma.done %s902, 4096
        $region104: #{tpu_custom_call.1} parent=87 // pred_fallthru
          _
        %s910 = sand.u32 %s54, 1
        %s911 = scalar_lea.sflag [#allocation9], %s910
        %s912 = sand.u32 %s178, 1
        %s913 = smul.addr %s912, 4
        %s914 = scalar_lea.vmem [#allocation10], %s913
        // Predicated region
        $region105: #{tpu_custom_call.1} parent=87 // pred_check
          %p915 = pneg %p191
        $region106: #{tpu_custom_call.1} parent=87 // pred_check_branch
          %917 = sbr.rel (%p915) target = $region108
        $region107: #{tpu_custom_call.1} parent=87 // pred_region
          %918 = dma.done %s911, 64
        $region108: #{tpu_custom_call.1} parent=87 // pred_fallthru
          _
        %s919 = sand.u32 %s54, 1
        %s920 = scalar_lea.sflag [#allocation12], %s919
        %s921 = sand.u32 %s204, 1
        %s922 = smul.addr %s921, 256
        %s923 = scalar_lea.vmem [#allocation11], %s922
        // Predicated region
        $region109: #{tpu_custom_call.1} parent=87 // pred_check
          %p924 = pneg %p217
        $region110: #{tpu_custom_call.1} parent=87 // pred_check_branch
          %926 = sbr.rel (%p924) target = $region112
        $region111: #{tpu_custom_call.1} parent=87 // pred_region
          %927 = dma.done %s920, 4096
        $region112: #{tpu_custom_call.1} parent=87 // pred_fallthru
          _
        %s928 = sand.u32 %s54, 1
        %s929 = scalar_lea.sflag [#allocation12], %s928
        %s930 = sand.u32 %s230, 1
        %s931 = smul.addr %s930, 4
        %s932 = scalar_lea.vmem [#allocation13], %s931
        // Predicated region
        $region113: #{tpu_custom_call.1} parent=87 // pred_check
          %p933 = pneg %p243
        $region114: #{tpu_custom_call.1} parent=87 // pred_check_branch
          %935 = sbr.rel (%p933) target = $region116
        $region115: #{tpu_custom_call.1} parent=87 // pred_region
          %936 = dma.done %s929, 64
        $region116: #{tpu_custom_call.1} parent=87 // pred_fallthru
          _
        %s937 = sand.u32 %s54, 1
        %s938 = scalar_lea.sflag [#allocation15], %s937
        %s939 = sand.u32 %s256, 1
        %s940 = smul.addr %s939, 16
        %s941 = scalar_lea.vmem [#allocation14], %s940
        // Predicated region
        $region117: #{tpu_custom_call.1} parent=87 // pred_check
          %p942 = pneg %p269
        $region118: #{tpu_custom_call.1} parent=87 // pred_check_branch
          %944 = sbr.rel (%p942) target = $region120
        $region119: #{tpu_custom_call.1} parent=87 // pred_region
          %945 = dma.done %s938, 256
        $region120: #{tpu_custom_call.1} parent=87 // pred_fallthru
          _
        %s946 = sand.u32 %s54, 1
        %s947 = scalar_lea.sflag [#allocation15], %s946
        %s948 = sand.u32 %s282, 1
        %s949 = scalar_lea.vmem [#allocation16], %s948
        // Predicated region
        $region121: #{tpu_custom_call.1} parent=87 // pred_check
          %p950 = pneg %p295
        $region122: #{tpu_custom_call.1} parent=87 // pred_check_branch
          %952 = sbr.rel (%p950) target = $region124
        $region123: #{tpu_custom_call.1} parent=87 // pred_region
          %953 = dma.done %s947, 16
        $region124: #{tpu_custom_call.1} parent=87 // pred_fallthru
          _
        %s954 = sand.u32 %s54, 1
        %s955 = scalar_lea.sflag [#allocation18], %s954
        %s956 = sand.u32 %s308, 1
        %s957 = scalar_lea.vmem [#allocation17], %s956
        // Predicated region
        $region125: #{tpu_custom_call.1} parent=87 // pred_check
          %p958 = pneg %p321
        $region126: #{tpu_custom_call.1} parent=87 // pred_check_branch
          %960 = sbr.rel (%p958) target = $region128
        $region127: #{tpu_custom_call.1} parent=87 // pred_region
          %961 = dma.done %s955, 16
        $region128: #{tpu_custom_call.1} parent=87 // pred_fallthru
          _
        %s962 = sand.u32 %s54, 1
        %s963 = scalar_lea.sflag [#allocation18], %s962
        %s964 = sand.u32 %s334, 1
        %s965 = scalar_lea.vmem [#allocation19], %s964
        // Predicated region
        $region129: #{tpu_custom_call.1} parent=87 // pred_check
          %p966 = pneg %p347
        $region130: #{tpu_custom_call.1} parent=87 // pred_check_branch
          %968 = sbr.rel (%p966) target = $region132
        $region131: #{tpu_custom_call.1} parent=87 // pred_region
          %969 = dma.done %s963, 16
        $region132: #{tpu_custom_call.1} parent=87 // pred_fallthru
          _
        %s970 = sand.u32 %s54, 1
        %s971 = scalar_lea.sflag [#allocation21], %s970
        %s972 = sand.u32 %s360, 1
        %s973 = smul.addr %s972, 64
        %s974 = scalar_lea.vmem [#allocation20], %s973
        // Predicated region
        $region133: #{tpu_custom_call.1} parent=87 // pred_check
          %p975 = pneg %p373
        $region134: #{tpu_custom_call.1} parent=87 // pred_check_branch
          %977 = sbr.rel (%p975) target = $region136
        $region135: #{tpu_custom_call.1} parent=87 // pred_region
          %978 = dma.done %s971, 1024
        $region136: #{tpu_custom_call.1} parent=87 // pred_fallthru
          _
        %s979 = sand.u32 %s54, 1
        %s980 = scalar_lea.sflag [#allocation21], %s979
        %s981 = sand.u32 %s386, 1
        %s982 = scalar_lea.vmem [#allocation22], %s981
        // Predicated region
        $region137: #{tpu_custom_call.1} parent=87 // pred_check
          %p983 = pneg %p399
        $region138: #{tpu_custom_call.1} parent=87 // pred_check_branch
          %985 = sbr.rel (%p983) target = $region140
        $region139: #{tpu_custom_call.1} parent=87 // pred_region
          %986 = dma.done %s980, 16
        $region140: #{tpu_custom_call.1} parent=87 // pred_fallthru
          _
        %s987 = sand.u32 %s54, 1
        %s988 = scalar_lea.sflag [#allocation24], %s987
        %s989 = sand.u32 %s412, 1
        %s990 = smul.addr %s989, 64
        %s991 = scalar_lea.vmem [#allocation23], %s990
        // Predicated region
        $region141: #{tpu_custom_call.1} parent=87 // pred_check
          %p992 = pneg %p425
        $region142: #{tpu_custom_call.1} parent=87 // pred_check_branch
          %994 = sbr.rel (%p992) target = $region144
        $region143: #{tpu_custom_call.1} parent=87 // pred_region
          %995 = dma.done %s988, 1024
        $region144: #{tpu_custom_call.1} parent=87 // pred_fallthru
          _
        %s996 = sand.u32 %s54, 1
        %s997 = scalar_lea.sflag [#allocation24], %s996
        %s998 = sand.u32 %s438, 1
        %s999 = scalar_lea.vmem [#allocation25], %s998
        // Predicated region
        $region145: #{tpu_custom_call.1} parent=87 // pred_check
          %p1000 = pneg %p451
        $region146: #{tpu_custom_call.1} parent=87 // pred_check_branch
          %1002 = sbr.rel (%p1000) target = $region148
        $region147: #{tpu_custom_call.1} parent=87 // pred_region
          %1003 = dma.done %s997, 16
        $region148: #{tpu_custom_call.1} parent=87 // pred_fallthru
          _
        %s1004 = sand.u32 %s54, 1
        %s1005 = scalar_lea.sflag [#allocation27], %s1004
        %s1006 = sand.u32 %s464, 1
        %s1007 = scalar_lea.vmem [#allocation26], %s1006
        // Predicated region
        $region149: #{tpu_custom_call.1} parent=87 // pred_check
          %p1008 = pneg %p477
        $region150: #{tpu_custom_call.1} parent=87 // pred_check_branch
          %1010 = sbr.rel (%p1008) target = $region152
        $region151: #{tpu_custom_call.1} parent=87 // pred_region
          %1011 = dma.done %s1005, 16
        $region152: #{tpu_custom_call.1} parent=87 // pred_fallthru
          _
        %s1012 = sand.u32 %s54, 1
        %s1013 = scalar_lea.sflag [#allocation27], %s1012
        %s1014 = sand.u32 %s490, 1
        %s1015 = scalar_lea.vmem [#allocation28], %s1014
        // Predicated region
        $region153: #{tpu_custom_call.1} parent=87 // pred_check
          %p1016 = pneg %p503
        $region154: #{tpu_custom_call.1} parent=87 // pred_check_branch
          %1018 = sbr.rel (%p1016) target = $region156
        $region155: #{tpu_custom_call.1} parent=87 // pred_region
          %1019 = dma.done %s1013, 16
        $region156: #{tpu_custom_call.1} parent=87 // pred_fallthru
          _
        %p1020 = pneg %p87
        %p1021 = pneg %p84
        %s1022 = sand.u32 %s54, 1
        %s1023 = scalar_lea.sflag [#allocation6], %s1022
        %s1024 = sand.u32 %s100, 1
        %s1025 = smul.addr %s1024, 256
        %s1026 = scalar_lea.vmem [#allocation5], %s1025
        %p1027 = pneg %p113
        %p1028 = pneg %p110
        %s1029 = sand.u32 %s54, 1
        %s1030 = scalar_lea.sflag [#allocation6], %s1029
        %s1031 = sand.u32 %s126, 1
        %s1032 = smul.addr %s1031, 4
        %s1033 = scalar_lea.vmem [#allocation7], %s1032
        %p1034 = pneg %p139
        %p1035 = pneg %p136
        %s1036 = sand.u32 %s54, 1
        %s1037 = scalar_lea.sflag [#allocation9], %s1036
        %s1038 = sand.u32 %s152, 1
        %s1039 = smul.addr %s1038, 256
        %s1040 = scalar_lea.vmem [#allocation8], %s1039
        %p1041 = pneg %p165
        %p1042 = pneg %p162
        %s1043 = sand.u32 %s54, 1
        %s1044 = scalar_lea.sflag [#allocation9], %s1043
        %s1045 = sand.u32 %s178, 1
        %s1046 = smul.addr %s1045, 4
        %s1047 = scalar_lea.vmem [#allocation10], %s1046
        %p1048 = pneg %p191
        %p1049 = pneg %p188
        %s1050 = sand.u32 %s54, 1
        %s1051 = scalar_lea.sflag [#allocation12], %s1050
        %s1052 = sand.u32 %s204, 1
        %s1053 = smul.addr %s1052, 256
        %s1054 = scalar_lea.vmem [#allocation11], %s1053
        %p1055 = pneg %p217
        %p1056 = pneg %p214
        %s1057 = sand.u32 %s54, 1
        %s1058 = scalar_lea.sflag [#allocation12], %s1057
        %s1059 = sand.u32 %s230, 1
        %s1060 = smul.addr %s1059, 4
        %s1061 = scalar_lea.vmem [#allocation13], %s1060
        %p1062 = pneg %p243
        %p1063 = pneg %p240
        %s1064 = sand.u32 %s54, 1
        %s1065 = scalar_lea.sflag [#allocation15], %s1064
        %s1066 = sand.u32 %s256, 1
        %s1067 = smul.addr %s1066, 16
        %s1068 = scalar_lea.vmem [#allocation14], %s1067
        %p1069 = pneg %p269
        %p1070 = pneg %p266
        %s1071 = sand.u32 %s54, 1
        %s1072 = scalar_lea.sflag [#allocation15], %s1071
        %s1073 = sand.u32 %s282, 1
        %s1074 = scalar_lea.vmem [#allocation16], %s1073
        %p1075 = pneg %p295
        %p1076 = pneg %p292
        %s1077 = sand.u32 %s54, 1
        %s1078 = scalar_lea.sflag [#allocation18], %s1077
        %s1079 = sand.u32 %s308, 1
        %s1080 = scalar_lea.vmem [#allocation17], %s1079
        %p1081 = pneg %p321
        %p1082 = pneg %p318
        %s1083 = sand.u32 %s54, 1
        %s1084 = scalar_lea.sflag [#allocation18], %s1083
        %s1085 = sand.u32 %s334, 1
        %s1086 = scalar_lea.vmem [#allocation19], %s1085
        %p1087 = pneg %p347
        %p1088 = pneg %p344
        %s1089 = sand.u32 %s54, 1
        %s1090 = scalar_lea.sflag [#allocation21], %s1089
        %s1091 = sand.u32 %s360, 1
        %s1092 = smul.addr %s1091, 64
        %s1093 = scalar_lea.vmem [#allocation20], %s1092
        %p1094 = pneg %p373
        %p1095 = pneg %p370
        %s1096 = sand.u32 %s54, 1
        %s1097 = scalar_lea.sflag [#allocation21], %s1096
        %s1098 = sand.u32 %s386, 1
        %s1099 = scalar_lea.vmem [#allocation22], %s1098
        %p1100 = pneg %p399
        %p1101 = pneg %p396
        %s1102 = sand.u32 %s54, 1
        %s1103 = scalar_lea.sflag [#allocation24], %s1102
        %s1104 = sand.u32 %s412, 1
        %s1105 = smul.addr %s1104, 64
        %s1106 = scalar_lea.vmem [#allocation23], %s1105
        %p1107 = pneg %p425
        %p1108 = pneg %p422
        %s1109 = sand.u32 %s54, 1
        %s1110 = scalar_lea.sflag [#allocation24], %s1109
        %s1111 = sand.u32 %s438, 1
        %s1112 = scalar_lea.vmem [#allocation25], %s1111
        %p1113 = pneg %p451
        %p1114 = pneg %p448
        %s1115 = sand.u32 %s54, 1
        %s1116 = scalar_lea.sflag [#allocation27], %s1115
        %s1117 = sand.u32 %s464, 1
        %s1118 = scalar_lea.vmem [#allocation26], %s1117
        %p1119 = pneg %p477
        %p1120 = pneg %p474
        %s1121 = sand.u32 %s54, 1
        %s1122 = scalar_lea.sflag [#allocation27], %s1121
        %s1123 = sand.u32 %s490, 1
        %s1124 = scalar_lea.vmem [#allocation28], %s1123
        %p1125 = pneg %p503
        %p1126 = pneg %p500
        %p1127 = pneg %p529
        %p1128 = pneg %p526
        %s1129 = smul.u32 2, %s58
        %s1130 = smul.u32 2, %s58
        %p1132 = scmp.eq.s32.totalorder %s59, 0
        // Predicated region
        $region157: #{tpu_custom_call.1} parent=87 // pred_check
          %p1133 = pneg %p1132
        $region158: #{tpu_custom_call.1} parent=87 // pred_check_branch
          %1135 = sbr.rel (%p1133) target = $region160
        $region159: #{tpu_custom_call.1} parent=87 // pred_region
          %v1136 = vld [vmem:[#allocation2] sm:$0xff]
          %v1137 = vld [vmem:[#allocation2 + $0x8] sm:$0xff]
          %1138 = vst [vmem:[#allocation29] sm:$0xff] %v1136
          %1139 = vst [vmem:[#allocation29 + $0x8] sm:$0xff] %v1137
        $region160: #{tpu_custom_call.1} parent=87 // pred_fallthru
          _
        %v1140 = vld [vmem:[%s887] sm:$0xf]
        %v1141 = vld [vmem:[%s887 + $0x4] sm:$0xf]
        %v1142 = vld [vmem:[%s887 + $0x8] sm:$0xf]
        %v1143 = vld [vmem:[%s887 + $0xc] sm:$0xf]
        %v1144 = vld [vmem:[%s887 + $0x10] sm:$0xf]
        %v1145 = vld [vmem:[%s887 + $0x14] sm:$0xf]
        %v1146 = vld [vmem:[%s887 + $0x18] sm:$0xf]
        %v1147 = vld [vmem:[%s887 + $0x1c] sm:$0xf]
        %v1148 = vld [vmem:[%s887 + $0x20] sm:$0xf]
        %v1149 = vld [vmem:[%s887 + $0x24] sm:$0xf]
        %v1150 = vld [vmem:[%s887 + $0x28] sm:$0xf]
        %v1151 = vld [vmem:[%s887 + $0x2c] sm:$0xf]
        %v1152 = vld [vmem:[%s887 + $0x30] sm:$0xf]
        %v1153 = vld [vmem:[%s887 + $0x34] sm:$0xf]
        %v1154 = vld [vmem:[%s887 + $0x38] sm:$0xf]
        %v1155 = vld [vmem:[%s887 + $0x3c] sm:$0xf]
        %v1156 = vld [vmem:[%s887 + $0x40] sm:$0xf]
        %v1157 = vld [vmem:[%s887 + $0x44] sm:$0xf]
        %v1158 = vld [vmem:[%s887 + $0x48] sm:$0xf]
        %v1159 = vld [vmem:[%s887 + $0x4c] sm:$0xf]
        %v1160 = vld [vmem:[%s887 + $0x50] sm:$0xf]
        %v1161 = vld [vmem:[%s887 + $0x54] sm:$0xf]
        %v1162 = vld [vmem:[%s887 + $0x58] sm:$0xf]
        %v1163 = vld [vmem:[%s887 + $0x5c] sm:$0xf]
        %v1164 = vld [vmem:[%s887 + $0x60] sm:$0xf]
        %v1165 = vld [vmem:[%s887 + $0x64] sm:$0xf]
        %v1166 = vld [vmem:[%s887 + $0x68] sm:$0xf]
        %v1167 = vld [vmem:[%s887 + $0x6c] sm:$0xf]
        %v1168 = vld [vmem:[%s887 + $0x70] sm:$0xf]
        %v1169 = vld [vmem:[%s887 + $0x74] sm:$0xf]
        %v1170 = vld [vmem:[%s887 + $0x78] sm:$0xf]
        %v1171 = vld [vmem:[%s887 + $0x7c] sm:$0xf]
        %v1172 = vld [vmem:[%s887 + $0x80] sm:$0xf]
        %v1173 = vld [vmem:[%s887 + $0x84] sm:$0xf]
        %v1174 = vld [vmem:[%s887 + $0x88] sm:$0xf]
        %v1175 = vld [vmem:[%s887 + $0x8c] sm:$0xf]
        %v1176 = vld [vmem:[%s887 + $0x90] sm:$0xf]
        %v1177 = vld [vmem:[%s887 + $0x94] sm:$0xf]
        %v1178 = vld [vmem:[%s887 + $0x98] sm:$0xf]
        %v1179 = vld [vmem:[%s887 + $0x9c] sm:$0xf]
        %v1180 = vld [vmem:[%s887 + $0xa0] sm:$0xf]
        %v1181 = vld [vmem:[%s887 + $0xa4] sm:$0xf]
        %v1182 = vld [vmem:[%s887 + $0xa8] sm:$0xf]
        %v1183 = vld [vmem:[%s887 + $0xac] sm:$0xf]
        %v1184 = vld [vmem:[%s887 + $0xb0] sm:$0xf]
        %v1185 = vld [vmem:[%s887 + $0xb4] sm:$0xf]
        %v1186 = vld [vmem:[%s887 + $0xb8] sm:$0xf]
        %v1187 = vld [vmem:[%s887 + $0xbc] sm:$0xf]
        %v1188 = vld [vmem:[%s887 + $0xc0] sm:$0xf]
        %v1189 = vld [vmem:[%s887 + $0xc4] sm:$0xf]
        %v1190 = vld [vmem:[%s887 + $0xc8] sm:$0xf]
        %v1191 = vld [vmem:[%s887 + $0xcc] sm:$0xf]
        %v1192 = vld [vmem:[%s887 + $0xd0] sm:$0xf]
        %v1193 = vld [vmem:[%s887 + $0xd4] sm:$0xf]
        %v1194 = vld [vmem:[%s887 + $0xd8] sm:$0xf]
        %v1195 = vld [vmem:[%s887 + $0xdc] sm:$0xf]
        %v1196 = vld [vmem:[%s887 + $0xe0] sm:$0xf]
        %v1197 = vld [vmem:[%s887 + $0xe4] sm:$0xf]
        %v1198 = vld [vmem:[%s887 + $0xe8] sm:$0xf]
        %v1199 = vld [vmem:[%s887 + $0xec] sm:$0xf]
        %v1200 = vld [vmem:[%s887 + $0xf0] sm:$0xf]
        %v1201 = vld [vmem:[%s887 + $0xf4] sm:$0xf]
        %v1202 = vld [vmem:[%s887 + $0xf8] sm:$0xf]
        %v1203 = vld [vmem:[%s887 + $0xfc] sm:$0xf]
        %v1204 = vld [vmem:[%s896] sm:$0x1]
        %v1205 = vld [vmem:[%s896 + $0x1] sm:$0x1]
        %v1206 = vld [vmem:[%s896 + $0x2] sm:$0x1]
        %v1207 = vld [vmem:[%s896 + $0x3] sm:$0x1]
        %v1208 = vld [vmem:[%s905] sm:$0xf]
        %v1209 = vld [vmem:[%s905 + $0x4] sm:$0xf]
        %v1210 = vld [vmem:[%s905 + $0x8] sm:$0xf]
        %v1211 = vld [vmem:[%s905 + $0xc] sm:$0xf]
        %v1212 = vld [vmem:[%s905 + $0x10] sm:$0xf]
        %v1213 = vld [vmem:[%s905 + $0x14] sm:$0xf]
        %v1214 = vld [vmem:[%s905 + $0x18] sm:$0xf]
        %v1215 = vld [vmem:[%s905 + $0x1c] sm:$0xf]
        %v1216 = vld [vmem:[%s905 + $0x20] sm:$0xf]
        %v1217 = vld [vmem:[%s905 + $0x24] sm:$0xf]
        %v1218 = vld [vmem:[%s905 + $0x28] sm:$0xf]
        %v1219 = vld [vmem:[%s905 + $0x2c] sm:$0xf]
        %v1220 = vld [vmem:[%s905 + $0x30] sm:$0xf]
        %v1221 = vld [vmem:[%s905 + $0x34] sm:$0xf]
        %v1222 = vld [vmem:[%s905 + $0x38] sm:$0xf]
        %v1223 = vld [vmem:[%s905 + $0x3c] sm:$0xf]
        %v1224 = vld [vmem:[%s905 + $0x40] sm:$0xf]
        %v1225 = vld [vmem:[%s905 + $0x44] sm:$0xf]
        %v1226 = vld [vmem:[%s905 + $0x48] sm:$0xf]
        %v1227 = vld [vmem:[%s905 + $0x4c] sm:$0xf]
        %v1228 = vld [vmem:[%s905 + $0x50] sm:$0xf]
        %v1229 = vld [vmem:[%s905 + $0x54] sm:$0xf]
        %v1230 = vld [vmem:[%s905 + $0x58] sm:$0xf]
        %v1231 = vld [vmem:[%s905 + $0x5c] sm:$0xf]
        %v1232 = vld [vmem:[%s905 + $0x60] sm:$0xf]
        %v1233 = vld [vmem:[%s905 + $0x64] sm:$0xf]
        %v1234 = vld [vmem:[%s905 + $0x68] sm:$0xf]
        %v1235 = vld [vmem:[%s905 + $0x6c] sm:$0xf]
        %v1236 = vld [vmem:[%s905 + $0x70] sm:$0xf]
        %v1237 = vld [vmem:[%s905 + $0x74] sm:$0xf]
        %v1238 = vld [vmem:[%s905 + $0x78] sm:$0xf]
        %v1239 = vld [vmem:[%s905 + $0x7c] sm:$0xf]
        %v1240 = vld [vmem:[%s905 + $0x80] sm:$0xf]
        %v1241 = vld [vmem:[%s905 + $0x84] sm:$0xf]
        %v1242 = vld [vmem:[%s905 + $0x88] sm:$0xf]
        %v1243 = vld [vmem:[%s905 + $0x8c] sm:$0xf]
        %v1244 = vld [vmem:[%s905 + $0x90] sm:$0xf]
        %v1245 = vld [vmem:[%s905 + $0x94] sm:$0xf]
        %v1246 = vld [vmem:[%s905 + $0x98] sm:$0xf]
        %v1247 = vld [vmem:[%s905 + $0x9c] sm:$0xf]
        %v1248 = vld [vmem:[%s905 + $0xa0] sm:$0xf]
        %v1249 = vld [vmem:[%s905 + $0xa4] sm:$0xf]
        %v1250 = vld [vmem:[%s905 + $0xa8] sm:$0xf]
        %v1251 = vld [vmem:[%s905 + $0xac] sm:$0xf]
        %v1252 = vld [vmem:[%s905 + $0xb0] sm:$0xf]
        %v1253 = vld [vmem:[%s905 + $0xb4] sm:$0xf]
        %v1254 = vld [vmem:[%s905 + $0xb8] sm:$0xf]
        %v1255 = vld [vmem:[%s905 + $0xbc] sm:$0xf]
        %v1256 = vld [vmem:[%s905 + $0xc0] sm:$0xf]
        %v1257 = vld [vmem:[%s905 + $0xc4] sm:$0xf]
        %v1258 = vld [vmem:[%s905 + $0xc8] sm:$0xf]
        %v1259 = vld [vmem:[%s905 + $0xcc] sm:$0xf]
        %v1260 = vld [vmem:[%s905 + $0xd0] sm:$0xf]
        %v1261 = vld [vmem:[%s905 + $0xd4] sm:$0xf]
        %v1262 = vld [vmem:[%s905 + $0xd8] sm:$0xf]
        %v1263 = vld [vmem:[%s905 + $0xdc] sm:$0xf]
        %v1264 = vld [vmem:[%s905 + $0xe0] sm:$0xf]
        %v1265 = vld [vmem:[%s905 + $0xe4] sm:$0xf]
        %v1266 = vld [vmem:[%s905 + $0xe8] sm:$0xf]
        %v1267 = vld [vmem:[%s905 + $0xec] sm:$0xf]
        %v1268 = vld [vmem:[%s905 + $0xf0] sm:$0xf]
        %v1269 = vld [vmem:[%s905 + $0xf4] sm:$0xf]
        %v1270 = vld [vmem:[%s905 + $0xf8] sm:$0xf]
        %v1271 = vld [vmem:[%s905 + $0xfc] sm:$0xf]
        %v1272 = vld [vmem:[%s914] sm:$0x1]
        %v1273 = vld [vmem:[%s914 + $0x1] sm:$0x1]
        %v1274 = vld [vmem:[%s914 + $0x2] sm:$0x1]
        %v1275 = vld [vmem:[%s914 + $0x3] sm:$0x1]
        %v1276 = vld [vmem:[%s923] sm:$0xf]
        %v1277 = vld [vmem:[%s923 + $0x4] sm:$0xf]
        %v1278 = vld [vmem:[%s923 + $0x8] sm:$0xf]
        %v1279 = vld [vmem:[%s923 + $0xc] sm:$0xf]
        %v1280 = vld [vmem:[%s923 + $0x10] sm:$0xf]
        %v1281 = vld [vmem:[%s923 + $0x14] sm:$0xf]
        %v1282 = vld [vmem:[%s923 + $0x18] sm:$0xf]
        %v1283 = vld [vmem:[%s923 + $0x1c] sm:$0xf]
        %v1284 = vld [vmem:[%s923 + $0x20] sm:$0xf]
        %v1285 = vld [vmem:[%s923 + $0x24] sm:$0xf]
        %v1286 = vld [vmem:[%s923 + $0x28] sm:$0xf]
        %v1287 = vld [vmem:[%s923 + $0x2c] sm:$0xf]
        %v1288 = vld [vmem:[%s923 + $0x30] sm:$0xf]
        %v1289 = vld [vmem:[%s923 + $0x34] sm:$0xf]
        %v1290 = vld [vmem:[%s923 + $0x38] sm:$0xf]
        %v1291 = vld [vmem:[%s923 + $0x3c] sm:$0xf]
        %v1292 = vld [vmem:[%s923 + $0x40] sm:$0xf]
        %v1293 = vld [vmem:[%s923 + $0x44] sm:$0xf]
        %v1294 = vld [vmem:[%s923 + $0x48] sm:$0xf]
        %v1295 = vld [vmem:[%s923 + $0x4c] sm:$0xf]
        %v1296 = vld [vmem:[%s923 + $0x50] sm:$0xf]
        %v1297 = vld [vmem:[%s923 + $0x54] sm:$0xf]
        %v1298 = vld [vmem:[%s923 + $0x58] sm:$0xf]
        %v1299 = vld [vmem:[%s923 + $0x5c] sm:$0xf]
        %v1300 = vld [vmem:[%s923 + $0x60] sm:$0xf]
        %v1301 = vld [vmem:[%s923 + $0x64] sm:$0xf]
        %v1302 = vld [vmem:[%s923 + $0x68] sm:$0xf]
        %v1303 = vld [vmem:[%s923 + $0x6c] sm:$0xf]
        %v1304 = vld [vmem:[%s923 + $0x70] sm:$0xf]
        %v1305 = vld [vmem:[%s923 + $0x74] sm:$0xf]
        %v1306 = vld [vmem:[%s923 + $0x78] sm:$0xf]
        %v1307 = vld [vmem:[%s923 + $0x7c] sm:$0xf]
        %v1308 = vld [vmem:[%s923 + $0x80] sm:$0xf]
        %v1309 = vld [vmem:[%s923 + $0x84] sm:$0xf]
        %v1310 = vld [vmem:[%s923 + $0x88] sm:$0xf]
        %v1311 = vld [vmem:[%s923 + $0x8c] sm:$0xf]
        %v1312 = vld [vmem:[%s923 + $0x90] sm:$0xf]
        %v1313 = vld [vmem:[%s923 + $0x94] sm:$0xf]
        %v1314 = vld [vmem:[%s923 + $0x98] sm:$0xf]
        %v1315 = vld [vmem:[%s923 + $0x9c] sm:$0xf]
        %v1316 = vld [vmem:[%s923 + $0xa0] sm:$0xf]
        %v1317 = vld [vmem:[%s923 + $0xa4] sm:$0xf]
        %v1318 = vld [vmem:[%s923 + $0xa8] sm:$0xf]
        %v1319 = vld [vmem:[%s923 + $0xac] sm:$0xf]
        %v1320 = vld [vmem:[%s923 + $0xb0] sm:$0xf]
        %v1321 = vld [vmem:[%s923 + $0xb4] sm:$0xf]
        %v1322 = vld [vmem:[%s923 + $0xb8] sm:$0xf]
        %v1323 = vld [vmem:[%s923 + $0xbc] sm:$0xf]
        %v1324 = vld [vmem:[%s923 + $0xc0] sm:$0xf]
        %v1325 = vld [vmem:[%s923 + $0xc4] sm:$0xf]
        %v1326 = vld [vmem:[%s923 + $0xc8] sm:$0xf]
        %v1327 = vld [vmem:[%s923 + $0xcc] sm:$0xf]
        %v1328 = vld [vmem:[%s923 + $0xd0] sm:$0xf]
        %v1329 = vld [vmem:[%s923 + $0xd4] sm:$0xf]
        %v1330 = vld [vmem:[%s923 + $0xd8] sm:$0xf]
        %v1331 = vld [vmem:[%s923 + $0xdc] sm:$0xf]
        %v1332 = vld [vmem:[%s923 + $0xe0] sm:$0xf]
        %v1333 = vld [vmem:[%s923 + $0xe4] sm:$0xf]
        %v1334 = vld [vmem:[%s923 + $0xe8] sm:$0xf]
        %v1335 = vld [vmem:[%s923 + $0xec] sm:$0xf]
        %v1336 = vld [vmem:[%s923 + $0xf0] sm:$0xf]
        %v1337 = vld [vmem:[%s923 + $0xf4] sm:$0xf]
        %v1338 = vld [vmem:[%s923 + $0xf8] sm:$0xf]
        %v1339 = vld [vmem:[%s923 + $0xfc] sm:$0xf]
        %v1340 = vld [vmem:[%s932] sm:$0x1]
        %v1341 = vld [vmem:[%s932 + $0x1] sm:$0x1]
        %v1342 = vld [vmem:[%s932 + $0x2] sm:$0x1]
        %v1343 = vld [vmem:[%s932 + $0x3] sm:$0x1]
        %v1344 = vld [vmem:[%s941] sm:$0xf]
        %v1345 = vld [vmem:[%s941 + $0x4] sm:$0xf]
        %v1346 = vld [vmem:[%s941 + $0x8] sm:$0xf]
        %v1347 = vld [vmem:[%s941 + $0xc] sm:$0xf]
        %v1348 = vld [vmem:[%s949] sm:$0x1]
        %v1349 = vld [vmem:[%s957] sm:$0x1]
        %v1350 = vld [vmem:[%s965] sm:$0x1]
        %v1351 = vld [vmem:[%s974] sm:$0xf]
        %v1352 = vld [vmem:[%s974 + $0x4] sm:$0xf]
        %v1353 = vld [vmem:[%s974 + $0x8] sm:$0xf]
        %v1354 = vld [vmem:[%s974 + $0xc] sm:$0xf]
        %v1355 = vld [vmem:[%s974 + $0x10] sm:$0xf]
        %v1356 = vld [vmem:[%s974 + $0x14] sm:$0xf]
        %v1357 = vld [vmem:[%s974 + $0x18] sm:$0xf]
        %v1358 = vld [vmem:[%s974 + $0x1c] sm:$0xf]
        %v1359 = vld [vmem:[%s974 + $0x20] sm:$0xf]
        %v1360 = vld [vmem:[%s974 + $0x24] sm:$0xf]
        %v1361 = vld [vmem:[%s974 + $0x28] sm:$0xf]
        %v1362 = vld [vmem:[%s974 + $0x2c] sm:$0xf]
        %v1363 = vld [vmem:[%s974 + $0x30] sm:$0xf]
        %v1364 = vld [vmem:[%s974 + $0x34] sm:$0xf]
        %v1365 = vld [vmem:[%s974 + $0x38] sm:$0xf]
        %v1366 = vld [vmem:[%s974 + $0x3c] sm:$0xf]
        %v1367 = vld [vmem:[%s982] sm:$0x1]
        %v1368 = vld [vmem:[%s991] sm:$0xf]
        %v1369 = vld [vmem:[%s991 + $0x4] sm:$0xf]
        %v1370 = vld [vmem:[%s991 + $0x8] sm:$0xf]
        %v1371 = vld [vmem:[%s991 + $0xc] sm:$0xf]
        %v1372 = vld [vmem:[%s991 + $0x10] sm:$0xf]
        %v1373 = vld [vmem:[%s991 + $0x14] sm:$0xf]
        %v1374 = vld [vmem:[%s991 + $0x18] sm:$0xf]
        %v1375 = vld [vmem:[%s991 + $0x1c] sm:$0xf]
        %v1376 = vld [vmem:[%s991 + $0x20] sm:$0xf]
        %v1377 = vld [vmem:[%s991 + $0x24] sm:$0xf]
        %v1378 = vld [vmem:[%s991 + $0x28] sm:$0xf]
        %v1379 = vld [vmem:[%s991 + $0x2c] sm:$0xf]
        %v1380 = vld [vmem:[%s991 + $0x30] sm:$0xf]
        %v1381 = vld [vmem:[%s991 + $0x34] sm:$0xf]
        %v1382 = vld [vmem:[%s991 + $0x38] sm:$0xf]
        %v1383 = vld [vmem:[%s991 + $0x3c] sm:$0xf]
        %v1384 = vld [vmem:[%s999] sm:$0x1]
        %v1385 = vld [vmem:[%s1007] sm:$0x1]
        %v1386 = vld [vmem:[%s1015] sm:$0x1]
        %v1387 = vlaneseq
        %v1388 = vand.u32 %v1387, 127
        %vm1389 = vcmp.lt.s32.totalorder %v1388, 32
        %v1390 = vsel %vm1389, 1, 0
        %v1391 = vcvt.s32.f32 %v1390
        %v1392 = vld [vmem:[#allocation29] sm:$0xff]
        %v1393 = vpack.c.bf16 %v1392, %v1392
        %v1398 = vlaneseq
        %v1399 = vshrl.u32 %v1398, 7
        %v1400 = vsub.s32 0, %v1399
        %v1401 = vrot.slane %v1204, %v1400
        %v1402 = vlaneseq
        %v1403 = vshrl.u32 %v1402, 7
        %v1404 = vsub.s32 0, %v1403
        %v1405 = vrot.slane %v1205, %v1404
        %v1406 = vlaneseq
        %v1407 = vshrl.u32 %v1406, 7
        %v1408 = vsub.s32 0, %v1407
        %v1409 = vrot.slane %v1206, %v1408
        %v1410 = vlaneseq
        %v1411 = vshrl.u32 %v1410, 7
        %v1412 = vsub.s32 0, %v1411
        %v1413 = vrot.slane %v1207, %v1412
        %v1434 = vunpack.c.l.b16 %v1140
        %v1435 = vunpack.c.l.b16 %v1141
        %v1436 = vunpack.c.l.b16 %v1142
        %v1437 = vunpack.c.l.b16 %v1143
        %v1438 = vunpack.c.l.b16 %v1144
        %v1439 = vunpack.c.l.b16 %v1145
        %v1440 = vunpack.c.l.b16 %v1146
        %v1441 = vunpack.c.l.b16 %v1147
        %v1442 = vunpack.c.l.b16 %v1148
        %v1443 = vunpack.c.l.b16 %v1149
        %v1444 = vunpack.c.l.b16 %v1150
        %v1445 = vunpack.c.l.b16 %v1151
        %v1446 = vunpack.c.l.b16 %v1152
        %v1447 = vunpack.c.l.b16 %v1153
        %v1448 = vunpack.c.l.b16 %v1154
        %v1449 = vunpack.c.l.b16 %v1155
        %v1450 = vpack.c.b16 %v1435, %v1434
        %v1451 = vpack.c.b16 %v1437, %v1436
        %v1452 = vpack.c.b16 %v1439, %v1438
        %v1453 = vpack.c.b16 %v1441, %v1440
        %v1454 = vpack.c.b16 %v1443, %v1442
        %v1455 = vpack.c.b16 %v1445, %v1444
        %v1456 = vpack.c.b16 %v1447, %v1446
        %v1457 = vpack.c.b16 %v1449, %v1448
        %1466 = vmatprep.subr.bf16.mxu0 0
        %1467 = vmatpush1.bf16.msra.mxu0 %v1450
        %1468 = vmatprep.subr.bf16.mxu0 0
        %1469 = vmatpush1.bf16.msra.mxu0 %v1451
        %1470 = vmatprep.subr.bf16.mxu0 0
        %1471 = vmatpush1.bf16.msra.mxu0 %v1452
        %1472 = vmatprep.subr.bf16.mxu0 0
        %1473 = vmatpush1.bf16.msra.mxu0 %v1453
        %1474 = vmatprep.subr.bf16.mxu0 0
        %1475 = vmatpush1.bf16.msra.mxu0 %v1454
        %1476 = vmatprep.subr.bf16.mxu0 0
        %1477 = vmatpush1.bf16.msra.mxu0 %v1455
        %1478 = vmatprep.subr.bf16.mxu0 0
        %1479 = vmatpush1.bf16.msra.mxu0 %v1456
        %1480 = vmatprep.subr.bf16.mxu0 0
        %1481 = vmatpush1.bf16.msra.mxu0 %v1457
        %1482 = vmatprep.subr.bf16.mxu0 0
        %1483 = vmatpush1.bf16.msra.mxu0 0
        %1484 = vmatprep.subr.bf16.mxu0 0
        %1485 = vmatpush1.bf16.msra.mxu0 0
        %1486 = vmatprep.subr.bf16.mxu0 0
        %1487 = vmatpush1.bf16.msra.mxu0 0
        %1488 = vmatprep.subr.bf16.mxu0 0
        %1489 = vmatpush1.bf16.msra.mxu0 0
        %1490 = vmatprep.subr.bf16.mxu0 0
        %1491 = vmatpush1.bf16.msra.mxu0 0
        %1492 = vmatprep.subr.bf16.mxu0 0
        %1493 = vmatpush1.bf16.msra.mxu0 0
        %1494 = vmatprep.subr.bf16.mxu0 0
        %1495 = vmatpush1.bf16.msra.mxu0 0
        %1496 = vmatprep.subr.bf16.mxu0 0
        %1497 = vmatpush1.bf16.msra.mxu0 0
        %1498 = vmatprep.mubr.bf16.mxu0 0
        %1499 = vmatmul.mubr.bf16.gmra.mrb[0].mxu0 %v1393
        %v1500 = vpop.f32.mrb[0].mxu0
        %v1501 = vadd.f32 %v1401, %v1500
        %v1502 = vpop.f32.mrb[0].mxu0
        %v1503 = vpop.f32.mrb[0].mxu0
        %v1504 = vpop.f32.mrb[0].mxu0
        %1505 = vdwg.mxu0
        %v1522 = vunpack.c.l.b16 %v1156
        %v1523 = vunpack.c.l.b16 %v1157
        %v1524 = vunpack.c.l.b16 %v1158
        %v1525 = vunpack.c.l.b16 %v1159
        %v1526 = vunpack.c.l.b16 %v1160
        %v1527 = vunpack.c.l.b16 %v1161
        %v1528 = vunpack.c.l.b16 %v1162
        %v1529 = vunpack.c.l.b16 %v1163
        %v1530 = vunpack.c.l.b16 %v1164
        %v1531 = vunpack.c.l.b16 %v1165
        %v1532 = vunpack.c.l.b16 %v1166
        %v1533 = vunpack.c.l.b16 %v1167
        %v1534 = vunpack.c.l.b16 %v1168
        %v1535 = vunpack.c.l.b16 %v1169
        %v1536 = vunpack.c.l.b16 %v1170
        %v1537 = vunpack.c.l.b16 %v1171
        %v1538 = vpack.c.b16 %v1523, %v1522
        %v1539 = vpack.c.b16 %v1525, %v1524
        %v1540 = vpack.c.b16 %v1527, %v1526
        %v1541 = vpack.c.b16 %v1529, %v1528
        %v1542 = vpack.c.b16 %v1531, %v1530
        %v1543 = vpack.c.b16 %v1533, %v1532
        %v1544 = vpack.c.b16 %v1535, %v1534
        %v1545 = vpack.c.b16 %v1537, %v1536
        %1554 = vmatprep.subr.bf16.mxu0 0
        %1555 = vmatpush1.bf16.msra.mxu0 %v1538
        %1556 = vmatprep.subr.bf16.mxu0 0
        %1557 = vmatpush1.bf16.msra.mxu0 %v1539
        %1558 = vmatprep.subr.bf16.mxu0 0
        %1559 = vmatpush1.bf16.msra.mxu0 %v1540
        %1560 = vmatprep.subr.bf16.mxu0 0
        %1561 = vmatpush1.bf16.msra.mxu0 %v1541
        %1562 = vmatprep.subr.bf16.mxu0 0
        %1563 = vmatpush1.bf16.msra.mxu0 %v1542
        %1564 = vmatprep.subr.bf16.mxu0 0
        %1565 = vmatpush1.bf16.msra.mxu0 %v1543
        %1566 = vmatprep.subr.bf16.mxu0 0
        %1567 = vmatpush1.bf16.msra.mxu0 %v1544
        %1568 = vmatprep.subr.bf16.mxu0 0
        %1569 = vmatpush1.bf16.msra.mxu0 %v1545
        %1570 = vmatprep.subr.bf16.mxu0 0
        %1571 = vmatpush1.bf16.msra.mxu0 0
        %1572 = vmatprep.subr.bf16.mxu0 0
        %1573 = vmatpush1.bf16.msra.mxu0 0
        %1574 = vmatprep.subr.bf16.mxu0 0
        %1575 = vmatpush1.bf16.msra.mxu0 0
        %1576 = vmatprep.subr.bf16.mxu0 0
        %1577 = vmatpush1.bf16.msra.mxu0 0
        %1578 = vmatprep.subr.bf16.mxu0 0
        %1579 = vmatpush1.bf16.msra.mxu0 0
        %1580 = vmatprep.subr.bf16.mxu0 0
        %1581 = vmatpush1.bf16.msra.mxu0 0
        %1582 = vmatprep.subr.bf16.mxu0 0
        %1583 = vmatpush1.bf16.msra.mxu0 0
        %1584 = vmatprep.subr.bf16.mxu0 0
        %1585 = vmatpush1.bf16.msra.mxu0 0
        %1586 = vmatprep.mubr.bf16.mxu0 0
        %1587 = vmatmul.mubr.bf16.gmra.mrb[0].mxu0 %v1393
        %v1588 = vpop.f32.mrb[0].mxu0
        %v1589 = vadd.f32 %v1405, %v1588
        %v1590 = vpop.f32.mrb[0].mxu0
        %v1591 = vpop.f32.mrb[0].mxu0
        %v1592 = vpop.f32.mrb[0].mxu0
        %1593 = vdwg.mxu0
        %v1610 = vunpack.c.l.b16 %v1172
        %v1611 = vunpack.c.l.b16 %v1173
        %v1612 = vunpack.c.l.b16 %v1174
        %v1613 = vunpack.c.l.b16 %v1175
        %v1614 = vunpack.c.l.b16 %v1176
        %v1615 = vunpack.c.l.b16 %v1177
        %v1616 = vunpack.c.l.b16 %v1178
        %v1617 = vunpack.c.l.b16 %v1179
        %v1618 = vunpack.c.l.b16 %v1180
        %v1619 = vunpack.c.l.b16 %v1181
        %v1620 = vunpack.c.l.b16 %v1182
        %v1621 = vunpack.c.l.b16 %v1183
        %v1622 = vunpack.c.l.b16 %v1184
        %v1623 = vunpack.c.l.b16 %v1185
        %v1624 = vunpack.c.l.b16 %v1186
        %v1625 = vunpack.c.l.b16 %v1187
        %v1626 = vpack.c.b16 %v1611, %v1610
        %v1627 = vpack.c.b16 %v1613, %v1612
        %v1628 = vpack.c.b16 %v1615, %v1614
        %v1629 = vpack.c.b16 %v1617, %v1616
        %v1630 = vpack.c.b16 %v1619, %v1618
        %v1631 = vpack.c.b16 %v1621, %v1620
        %v1632 = vpack.c.b16 %v1623, %v1622
        %v1633 = vpack.c.b16 %v1625, %v1624
        %1642 = vmatprep.subr.bf16.mxu0 0
        %1643 = vmatpush1.bf16.msra.mxu0 %v1626
        %1644 = vmatprep.subr.bf16.mxu0 0
        %1645 = vmatpush1.bf16.msra.mxu0 %v1627
        %1646 = vmatprep.subr.bf16.mxu0 0
        %1647 = vmatpush1.bf16.msra.mxu0 %v1628
        %1648 = vmatprep.subr.bf16.mxu0 0
        %1649 = vmatpush1.bf16.msra.mxu0 %v1629
        %1650 = vmatprep.subr.bf16.mxu0 0
        %1651 = vmatpush1.bf16.msra.mxu0 %v1630
        %1652 = vmatprep.subr.bf16.mxu0 0
        %1653 = vmatpush1.bf16.msra.mxu0 %v1631
        %1654 = vmatprep.subr.bf16.mxu0 0
        %1655 = vmatpush1.bf16.msra.mxu0 %v1632
        %1656 = vmatprep.subr.bf16.mxu0 0
        %1657 = vmatpush1.bf16.msra.mxu0 %v1633
        %1658 = vmatprep.subr.bf16.mxu0 0
        %1659 = vmatpush1.bf16.msra.mxu0 0
        %1660 = vmatprep.subr.bf16.mxu0 0
        %1661 = vmatpush1.bf16.msra.mxu0 0
        %1662 = vmatprep.subr.bf16.mxu0 0
        %1663 = vmatpush1.bf16.msra.mxu0 0
        %1664 = vmatprep.subr.bf16.mxu0 0
        %1665 = vmatpush1.bf16.msra.mxu0 0
        %1666 = vmatprep.subr.bf16.mxu0 0
        %1667 = vmatpush1.bf16.msra.mxu0 0
        %1668 = vmatprep.subr.bf16.mxu0 0
        %1669 = vmatpush1.bf16.msra.mxu0 0
        %1670 = vmatprep.subr.bf16.mxu0 0
        %1671 = vmatpush1.bf16.msra.mxu0 0
        %1672 = vmatprep.subr.bf16.mxu0 0
        %1673 = vmatpush1.bf16.msra.mxu0 0
        %1674 = vmatprep.mubr.bf16.mxu0 0
        %1675 = vmatmul.mubr.bf16.gmra.mrb[0].mxu0 %v1393
        %v1676 = vpop.f32.mrb[0].mxu0
        %v1677 = vadd.f32 %v1409, %v1676
        %v1678 = vpop.f32.mrb[0].mxu0
        %v1679 = vpop.f32.mrb[0].mxu0
        %v1680 = vpop.f32.mrb[0].mxu0
        %1681 = vdwg.mxu0
        %v1698 = vunpack.c.l.b16 %v1188
        %v1699 = vunpack.c.l.b16 %v1189
        %v1700 = vunpack.c.l.b16 %v1190
        %v1701 = vunpack.c.l.b16 %v1191
        %v1702 = vunpack.c.l.b16 %v1192
        %v1703 = vunpack.c.l.b16 %v1193
        %v1704 = vunpack.c.l.b16 %v1194
        %v1705 = vunpack.c.l.b16 %v1195
        %v1706 = vunpack.c.l.b16 %v1196
        %v1707 = vunpack.c.l.b16 %v1197
        %v1708 = vunpack.c.l.b16 %v1198
        %v1709 = vunpack.c.l.b16 %v1199
        %v1710 = vunpack.c.l.b16 %v1200
        %v1711 = vunpack.c.l.b16 %v1201
        %v1712 = vunpack.c.l.b16 %v1202
        %v1713 = vunpack.c.l.b16 %v1203
        %v1714 = vpack.c.b16 %v1699, %v1698
        %v1715 = vpack.c.b16 %v1701, %v1700
        %v1716 = vpack.c.b16 %v1703, %v1702
        %v1717 = vpack.c.b16 %v1705, %v1704
        %v1718 = vpack.c.b16 %v1707, %v1706
        %v1719 = vpack.c.b16 %v1709, %v1708
        %v1720 = vpack.c.b16 %v1711, %v1710
        %v1721 = vpack.c.b16 %v1713, %v1712
        %1730 = vmatprep.subr.bf16.mxu0 0
        %1731 = vmatpush1.bf16.msra.mxu0 %v1714
        %1732 = vmatprep.subr.bf16.mxu0 0
        %1733 = vmatpush1.bf16.msra.mxu0 %v1715
        %1734 = vmatprep.subr.bf16.mxu0 0
        %1735 = vmatpush1.bf16.msra.mxu0 %v1716
        %1736 = vmatprep.subr.bf16.mxu0 0
        %1737 = vmatpush1.bf16.msra.mxu0 %v1717
        %1738 = vmatprep.subr.bf16.mxu0 0
        %1739 = vmatpush1.bf16.msra.mxu0 %v1718
        %1740 = vmatprep.subr.bf16.mxu0 0
        %1741 = vmatpush1.bf16.msra.mxu0 %v1719
        %1742 = vmatprep.subr.bf16.mxu0 0
        %1743 = vmatpush1.bf16.msra.mxu0 %v1720
        %1744 = vmatprep.subr.bf16.mxu0 0
        %1745 = vmatpush1.bf16.msra.mxu0 %v1721
        %1746 = vmatprep.subr.bf16.mxu0 0
        %1747 = vmatpush1.bf16.msra.mxu0 0
        %1748 = vmatprep.subr.bf16.mxu0 0
        %1749 = vmatpush1.bf16.msra.mxu0 0
        %1750 = vmatprep.subr.bf16.mxu0 0
        %1751 = vmatpush1.bf16.msra.mxu0 0
        %1752 = vmatprep.subr.bf16.mxu0 0
        %1753 = vmatpush1.bf16.msra.mxu0 0
        %1754 = vmatprep.subr.bf16.mxu0 0
        %1755 = vmatpush1.bf16.msra.mxu0 0
        %1756 = vmatprep.subr.bf16.mxu0 0
        %1757 = vmatpush1.bf16.msra.mxu0 0
        %1758 = vmatprep.subr.bf16.mxu0 0
        %1759 = vmatpush1.bf16.msra.mxu0 0
        %1760 = vmatprep.subr.bf16.mxu0 0
        %1761 = vmatpush1.bf16.msra.mxu0 0
        %1762 = vmatprep.mubr.bf16.mxu0 0
        %1763 = vmatmul.mubr.bf16.gmra.mrb[0].mxu0 %v1393
        %v1764 = vpop.f32.mrb[0].mxu0
        %v1765 = vadd.f32 %v1413, %v1764
        %v1766 = vpop.f32.mrb[0].mxu0
        %v1767 = vpop.f32.mrb[0].mxu0
        %v1768 = vpop.f32.mrb[0].mxu0
        %1769 = vdwg.mxu0
        %v1774 = vlaneseq
        %v1775 = vshrl.u32 %v1774, 7
        %v1776 = vsub.s32 0, %v1775
        %v1777 = vrot.slane %v1272, %v1776
        %v1778 = vlaneseq
        %v1779 = vshrl.u32 %v1778, 7
        %v1780 = vsub.s32 0, %v1779
        %v1781 = vrot.slane %v1273, %v1780
        %v1782 = vlaneseq
        %v1783 = vshrl.u32 %v1782, 7
        %v1784 = vsub.s32 0, %v1783
        %v1785 = vrot.slane %v1274, %v1784
        %v1786 = vlaneseq
        %v1787 = vshrl.u32 %v1786, 7
        %v1788 = vsub.s32 0, %v1787
        %v1789 = vrot.slane %v1275, %v1788
        %v1810 = vunpack.c.l.b16 %v1208
        %v1811 = vunpack.c.l.b16 %v1209
        %v1812 = vunpack.c.l.b16 %v1210
        %v1813 = vunpack.c.l.b16 %v1211
        %v1814 = vunpack.c.l.b16 %v1212
        %v1815 = vunpack.c.l.b16 %v1213
        %v1816 = vunpack.c.l.b16 %v1214
        %v1817 = vunpack.c.l.b16 %v1215
        %v1818 = vunpack.c.l.b16 %v1216
        %v1819 = vunpack.c.l.b16 %v1217
        %v1820 = vunpack.c.l.b16 %v1218
        %v1821 = vunpack.c.l.b16 %v1219
        %v1822 = vunpack.c.l.b16 %v1220
        %v1823 = vunpack.c.l.b16 %v1221
        %v1824 = vunpack.c.l.b16 %v1222
        %v1825 = vunpack.c.l.b16 %v1223
        %v1826 = vpack.c.b16 %v1811, %v1810
        %v1827 = vpack.c.b16 %v1813, %v1812
        %v1828 = vpack.c.b16 %v1815, %v1814
        %v1829 = vpack.c.b16 %v1817, %v1816
        %v1830 = vpack.c.b16 %v1819, %v1818
        %v1831 = vpack.c.b16 %v1821, %v1820
        %v1832 = vpack.c.b16 %v1823, %v1822
        %v1833 = vpack.c.b16 %v1825, %v1824
        %1842 = vmatprep.subr.bf16.mxu0 0
        %1843 = vmatpush1.bf16.msra.mxu0 %v1826
        %1844 = vmatprep.subr.bf16.mxu0 0
        %1845 = vmatpush1.bf16.msra.mxu0 %v1827
        %1846 = vmatprep.subr.bf16.mxu0 0
        %1847 = vmatpush1.bf16.msra.mxu0 %v1828
        %1848 = vmatprep.subr.bf16.mxu0 0
        %1849 = vmatpush1.bf16.msra.mxu0 %v1829
        %1850 = vmatprep.subr.bf16.mxu0 0
        %1851 = vmatpush1.bf16.msra.mxu0 %v1830
        %1852 = vmatprep.subr.bf16.mxu0 0
        %1853 = vmatpush1.bf16.msra.mxu0 %v1831
        %1854 = vmatprep.subr.bf16.mxu0 0
        %1855 = vmatpush1.bf16.msra.mxu0 %v1832
        %1856 = vmatprep.subr.bf16.mxu0 0
        %1857 = vmatpush1.bf16.msra.mxu0 %v1833
        %1858 = vmatprep.subr.bf16.mxu0 0
        %1859 = vmatpush1.bf16.msra.mxu0 0
        %1860 = vmatprep.subr.bf16.mxu0 0
        %1861 = vmatpush1.bf16.msra.mxu0 0
        %1862 = vmatprep.subr.bf16.mxu0 0
        %1863 = vmatpush1.bf16.msra.mxu0 0
        %1864 = vmatprep.subr.bf16.mxu0 0
        %1865 = vmatpush1.bf16.msra.mxu0 0
        %1866 = vmatprep.subr.bf16.mxu0 0
        %1867 = vmatpush1.bf16.msra.mxu0 0
        %1868 = vmatprep.subr.bf16.mxu0 0
        %1869 = vmatpush1.bf16.msra.mxu0 0
        %1870 = vmatprep.subr.bf16.mxu0 0
        %1871 = vmatpush1.bf16.msra.mxu0 0
        %1872 = vmatprep.subr.bf16.mxu0 0
        %1873 = vmatpush1.bf16.msra.mxu0 0
        %1874 = vmatprep.mubr.bf16.mxu0 0
        %1875 = vmatmul.mubr.bf16.gmra.mrb[0].mxu0 %v1393
        %v1876 = vpop.f32.mrb[0].mxu0
        %v1877 = vadd.f32 %v1777, %v1876
        %v1878 = vpop.f32.mrb[0].mxu0
        %v1879 = vpop.f32.mrb[0].mxu0
        %v1880 = vpop.f32.mrb[0].mxu0
        %1881 = vdwg.mxu0
        %v1898 = vunpack.c.l.b16 %v1224
        %v1899 = vunpack.c.l.b16 %v1225
        %v1900 = vunpack.c.l.b16 %v1226
        %v1901 = vunpack.c.l.b16 %v1227
        %v1902 = vunpack.c.l.b16 %v1228
        %v1903 = vunpack.c.l.b16 %v1229
        %v1904 = vunpack.c.l.b16 %v1230
        %v1905 = vunpack.c.l.b16 %v1231
        %v1906 = vunpack.c.l.b16 %v1232
        %v1907 = vunpack.c.l.b16 %v1233
        %v1908 = vunpack.c.l.b16 %v1234
        %v1909 = vunpack.c.l.b16 %v1235
        %v1910 = vunpack.c.l.b16 %v1236
        %v1911 = vunpack.c.l.b16 %v1237
        %v1912 = vunpack.c.l.b16 %v1238
        %v1913 = vunpack.c.l.b16 %v1239
        %v1914 = vpack.c.b16 %v1899, %v1898
        %v1915 = vpack.c.b16 %v1901, %v1900
        %v1916 = vpack.c.b16 %v1903, %v1902
        %v1917 = vpack.c.b16 %v1905, %v1904
        %v1918 = vpack.c.b16 %v1907, %v1906
        %v1919 = vpack.c.b16 %v1909, %v1908
        %v1920 = vpack.c.b16 %v1911, %v1910
        %v1921 = vpack.c.b16 %v1913, %v1912
        %1930 = vmatprep.subr.bf16.mxu0 0
        %1931 = vmatpush1.bf16.msra.mxu0 %v1914
        %1932 = vmatprep.subr.bf16.mxu0 0
        %1933 = vmatpush1.bf16.msra.mxu0 %v1915
        %1934 = vmatprep.subr.bf16.mxu0 0
        %1935 = vmatpush1.bf16.msra.mxu0 %v1916
        %1936 = vmatprep.subr.bf16.mxu0 0
        %1937 = vmatpush1.bf16.msra.mxu0 %v1917
        %1938 = vmatprep.subr.bf16.mxu0 0
        %1939 = vmatpush1.bf16.msra.mxu0 %v1918
        %1940 = vmatprep.subr.bf16.mxu0 0
        %1941 = vmatpush1.bf16.msra.mxu0 %v1919
        %1942 = vmatprep.subr.bf16.mxu0 0
        %1943 = vmatpush1.bf16.msra.mxu0 %v1920
        %1944 = vmatprep.subr.bf16.mxu0 0
        %1945 = vmatpush1.bf16.msra.mxu0 %v1921
        %1946 = vmatprep.subr.bf16.mxu0 0
        %1947 = vmatpush1.bf16.msra.mxu0 0
        %1948 = vmatprep.subr.bf16.mxu0 0
        %1949 = vmatpush1.bf16.msra.mxu0 0
        %1950 = vmatprep.subr.bf16.mxu0 0
        %1951 = vmatpush1.bf16.msra.mxu0 0
        %1952 = vmatprep.subr.bf16.mxu0 0
        %1953 = vmatpush1.bf16.msra.mxu0 0
        %1954 = vmatprep.subr.bf16.mxu0 0
        %1955 = vmatpush1.bf16.msra.mxu0 0
        %1956 = vmatprep.subr.bf16.mxu0 0
        %1957 = vmatpush1.bf16.msra.mxu0 0
        %1958 = vmatprep.subr.bf16.mxu0 0
        %1959 = vmatpush1.bf16.msra.mxu0 0
        %1960 = vmatprep.subr.bf16.mxu0 0
        %1961 = vmatpush1.bf16.msra.mxu0 0
        %1962 = vmatprep.mubr.bf16.mxu0 0
        %1963 = vmatmul.mubr.bf16.gmra.mrb[0].mxu0 %v1393
        %v1964 = vpop.f32.mrb[0].mxu0
        %v1965 = vadd.f32 %v1781, %v1964
        %v1966 = vpop.f32.mrb[0].mxu0
        %v1967 = vpop.f32.mrb[0].mxu0
        %v1968 = vpop.f32.mrb[0].mxu0
        %1969 = vdwg.mxu0
        %v1986 = vunpack.c.l.b16 %v1240
        %v1987 = vunpack.c.l.b16 %v1241
        %v1988 = vunpack.c.l.b16 %v1242
        %v1989 = vunpack.c.l.b16 %v1243
        %v1990 = vunpack.c.l.b16 %v1244
        %v1991 = vunpack.c.l.b16 %v1245
        %v1992 = vunpack.c.l.b16 %v1246
        %v1993 = vunpack.c.l.b16 %v1247
        %v1994 = vunpack.c.l.b16 %v1248
        %v1995 = vunpack.c.l.b16 %v1249
        %v1996 = vunpack.c.l.b16 %v1250
        %v1997 = vunpack.c.l.b16 %v1251
        %v1998 = vunpack.c.l.b16 %v1252
        %v1999 = vunpack.c.l.b16 %v1253
        %v2000 = vunpack.c.l.b16 %v1254
        %v2001 = vunpack.c.l.b16 %v1255
        %v2002 = vpack.c.b16 %v1987, %v1986
        %v2003 = vpack.c.b16 %v1989, %v1988
        %v2004 = vpack.c.b16 %v1991, %v1990
        %v2005 = vpack.c.b16 %v1993, %v1992
        %v2006 = vpack.c.b16 %v1995, %v1994
        %v2007 = vpack.c.b16 %v1997, %v1996
        %v2008 = vpack.c.b16 %v1999, %v1998
        %v2009 = vpack.c.b16 %v2001, %v2000
        %2018 = vmatprep.subr.bf16.mxu0 0
        %2019 = vmatpush1.bf16.msra.mxu0 %v2002
        %2020 = vmatprep.subr.bf16.mxu0 0
        %2021 = vmatpush1.bf16.msra.mxu0 %v2003
        %2022 = vmatprep.subr.bf16.mxu0 0
        %2023 = vmatpush1.bf16.msra.mxu0 %v2004
        %2024 = vmatprep.subr.bf16.mxu0 0
        %2025 = vmatpush1.bf16.msra.mxu0 %v2005
        %2026 = vmatprep.subr.bf16.mxu0 0
        %2027 = vmatpush1.bf16.msra.mxu0 %v2006
        %2028 = vmatprep.subr.bf16.mxu0 0
        %2029 = vmatpush1.bf16.msra.mxu0 %v2007
        %2030 = vmatprep.subr.bf16.mxu0 0
        %2031 = vmatpush1.bf16.msra.mxu0 %v2008
        %2032 = vmatprep.subr.bf16.mxu0 0
        %2033 = vmatpush1.bf16.msra.mxu0 %v2009
        %2034 = vmatprep.subr.bf16.mxu0 0
        %2035 = vmatpush1.bf16.msra.mxu0 0
        %2036 = vmatprep.subr.bf16.mxu0 0
        %2037 = vmatpush1.bf16.msra.mxu0 0
        %2038 = vmatprep.subr.bf16.mxu0 0
        %2039 = vmatpush1.bf16.msra.mxu0 0
        %2040 = vmatprep.subr.bf16.mxu0 0
        %2041 = vmatpush1.bf16.msra.mxu0 0
        %2042 = vmatprep.subr.bf16.mxu0 0
        %2043 = vmatpush1.bf16.msra.mxu0 0
        %2044 = vmatprep.subr.bf16.mxu0 0
        %2045 = vmatpush1.bf16.msra.mxu0 0
        %2046 = vmatprep.subr.bf16.mxu0 0
        %2047 = vmatpush1.bf16.msra.mxu0 0
        %2048 = vmatprep.subr.bf16.mxu0 0
        %2049 = vmatpush1.bf16.msra.mxu0 0
        %2050 = vmatprep.mubr.bf16.mxu0 0
        %2051 = vmatmul.mubr.bf16.gmra.mrb[0].mxu0 %v1393
        %v2052 = vpop.f32.mrb[0].mxu0
        %v2053 = vadd.f32 %v1785, %v2052
        %v2054 = vpop.f32.mrb[0].mxu0
        %v2055 = vpop.f32.mrb[0].mxu0
        %v2056 = vpop.f32.mrb[0].mxu0
        %2057 = vdwg.mxu0
        %v2074 = vunpack.c.l.b16 %v1256
        %v2075 = vunpack.c.l.b16 %v1257
        %v2076 = vunpack.c.l.b16 %v1258
        %v2077 = vunpack.c.l.b16 %v1259
        %v2078 = vunpack.c.l.b16 %v1260
        %v2079 = vunpack.c.l.b16 %v1261
        %v2080 = vunpack.c.l.b16 %v1262
        %v2081 = vunpack.c.l.b16 %v1263
        %v2082 = vunpack.c.l.b16 %v1264
        %v2083 = vunpack.c.l.b16 %v1265
        %v2084 = vunpack.c.l.b16 %v1266
        %v2085 = vunpack.c.l.b16 %v1267
        %v2086 = vunpack.c.l.b16 %v1268
        %v2087 = vunpack.c.l.b16 %v1269
        %v2088 = vunpack.c.l.b16 %v1270
        %v2089 = vunpack.c.l.b16 %v1271
        %v2090 = vpack.c.b16 %v2075, %v2074
        %v2091 = vpack.c.b16 %v2077, %v2076
        %v2092 = vpack.c.b16 %v2079, %v2078
        %v2093 = vpack.c.b16 %v2081, %v2080
        %v2094 = vpack.c.b16 %v2083, %v2082
        %v2095 = vpack.c.b16 %v2085, %v2084
        %v2096 = vpack.c.b16 %v2087, %v2086
        %v2097 = vpack.c.b16 %v2089, %v2088
        %2106 = vmatprep.subr.bf16.mxu0 0
        %2107 = vmatpush1.bf16.msra.mxu0 %v2090
        %2108 = vmatprep.subr.bf16.mxu0 0
        %2109 = vmatpush1.bf16.msra.mxu0 %v2091
        %2110 = vmatprep.subr.bf16.mxu0 0
        %2111 = vmatpush1.bf16.msra.mxu0 %v2092
        %2112 = vmatprep.subr.bf16.mxu0 0
        %2113 = vmatpush1.bf16.msra.mxu0 %v2093
        %2114 = vmatprep.subr.bf16.mxu0 0
        %2115 = vmatpush1.bf16.msra.mxu0 %v2094
        %2116 = vmatprep.subr.bf16.mxu0 0
        %2117 = vmatpush1.bf16.msra.mxu0 %v2095
        %2118 = vmatprep.subr.bf16.mxu0 0
        %2119 = vmatpush1.bf16.msra.mxu0 %v2096
        %2120 = vmatprep.subr.bf16.mxu0 0
        %2121 = vmatpush1.bf16.msra.mxu0 %v2097
        %2122 = vmatprep.subr.bf16.mxu0 0
        %2123 = vmatpush1.bf16.msra.mxu0 0
        %2124 = vmatprep.subr.bf16.mxu0 0
        %2125 = vmatpush1.bf16.msra.mxu0 0
        %2126 = vmatprep.subr.bf16.mxu0 0
        %2127 = vmatpush1.bf16.msra.mxu0 0
        %2128 = vmatprep.subr.bf16.mxu0 0
        %2129 = vmatpush1.bf16.msra.mxu0 0
        %2130 = vmatprep.subr.bf16.mxu0 0
        %2131 = vmatpush1.bf16.msra.mxu0 0
        %2132 = vmatprep.subr.bf16.mxu0 0
        %2133 = vmatpush1.bf16.msra.mxu0 0
        %2134 = vmatprep.subr.bf16.mxu0 0
        %2135 = vmatpush1.bf16.msra.mxu0 0
        %2136 = vmatprep.subr.bf16.mxu0 0
        %2137 = vmatpush1.bf16.msra.mxu0 0
        %2138 = vmatprep.mubr.bf16.mxu0 0
        %2139 = vmatmul.mubr.bf16.gmra.mrb[0].mxu0 %v1393
        %v2140 = vpop.f32.mrb[0].mxu0
        %v2141 = vadd.f32 %v1789, %v2140
        %v2142 = vpop.f32.mrb[0].mxu0
        %v2143 = vpop.f32.mrb[0].mxu0
        %v2144 = vpop.f32.mrb[0].mxu0
        %2145 = vdwg.mxu0
        %v2150 = vlaneseq
        %v2151 = vshrl.u32 %v2150, 7
        %v2152 = vsub.s32 0, %v2151
        %v2153 = vrot.slane %v1340, %v2152
        %v2154 = vlaneseq
        %v2155 = vshrl.u32 %v2154, 7
        %v2156 = vsub.s32 0, %v2155
        %v2157 = vrot.slane %v1341, %v2156
        %v2158 = vlaneseq
        %v2159 = vshrl.u32 %v2158, 7
        %v2160 = vsub.s32 0, %v2159
        %v2161 = vrot.slane %v1342, %v2160
        %v2162 = vlaneseq
        %v2163 = vshrl.u32 %v2162, 7
        %v2164 = vsub.s32 0, %v2163
        %v2165 = vrot.slane %v1343, %v2164
        %v2186 = vunpack.c.l.b16 %v1276
        %v2187 = vunpack.c.l.b16 %v1277
        %v2188 = vunpack.c.l.b16 %v1278
        %v2189 = vunpack.c.l.b16 %v1279
        %v2190 = vunpack.c.l.b16 %v1280
        %v2191 = vunpack.c.l.b16 %v1281
        %v2192 = vunpack.c.l.b16 %v1282
        %v2193 = vunpack.c.l.b16 %v1283
        %v2194 = vunpack.c.l.b16 %v1284
        %v2195 = vunpack.c.l.b16 %v1285
        %v2196 = vunpack.c.l.b16 %v1286
        %v2197 = vunpack.c.l.b16 %v1287
        %v2198 = vunpack.c.l.b16 %v1288
        %v2199 = vunpack.c.l.b16 %v1289
        %v2200 = vunpack.c.l.b16 %v1290
        %v2201 = vunpack.c.l.b16 %v1291
        %v2202 = vpack.c.b16 %v2187, %v2186
        %v2203 = vpack.c.b16 %v2189, %v2188
        %v2204 = vpack.c.b16 %v2191, %v2190
        %v2205 = vpack.c.b16 %v2193, %v2192
        %v2206 = vpack.c.b16 %v2195, %v2194
        %v2207 = vpack.c.b16 %v2197, %v2196
        %v2208 = vpack.c.b16 %v2199, %v2198
        %v2209 = vpack.c.b16 %v2201, %v2200
        %2218 = vmatprep.subr.bf16.mxu0 0
        %2219 = vmatpush1.bf16.msra.mxu0 %v2202
        %2220 = vmatprep.subr.bf16.mxu0 0
        %2221 = vmatpush1.bf16.msra.mxu0 %v2203
        %2222 = vmatprep.subr.bf16.mxu0 0
        %2223 = vmatpush1.bf16.msra.mxu0 %v2204
        %2224 = vmatprep.subr.bf16.mxu0 0
        %2225 = vmatpush1.bf16.msra.mxu0 %v2205
        %2226 = vmatprep.subr.bf16.mxu0 0
        %2227 = vmatpush1.bf16.msra.mxu0 %v2206
        %2228 = vmatprep.subr.bf16.mxu0 0
        %2229 = vmatpush1.bf16.msra.mxu0 %v2207
        %2230 = vmatprep.subr.bf16.mxu0 0
        %2231 = vmatpush1.bf16.msra.mxu0 %v2208
        %2232 = vmatprep.subr.bf16.mxu0 0
        %2233 = vmatpush1.bf16.msra.mxu0 %v2209
        %2234 = vmatprep.subr.bf16.mxu0 0
        %2235 = vmatpush1.bf16.msra.mxu0 0
        %2236 = vmatprep.subr.bf16.mxu0 0
        %2237 = vmatpush1.bf16.msra.mxu0 0
        %2238 = vmatprep.subr.bf16.mxu0 0
        %2239 = vmatpush1.bf16.msra.mxu0 0
        %2240 = vmatprep.subr.bf16.mxu0 0
        %2241 = vmatpush1.bf16.msra.mxu0 0
        %2242 = vmatprep.subr.bf16.mxu0 0
        %2243 = vmatpush1.bf16.msra.mxu0 0
        %2244 = vmatprep.subr.bf16.mxu0 0
        %2245 = vmatpush1.bf16.msra.mxu0 0
        %2246 = vmatprep.subr.bf16.mxu0 0
        %2247 = vmatpush1.bf16.msra.mxu0 0
        %2248 = vmatprep.subr.bf16.mxu0 0
        %2249 = vmatpush1.bf16.msra.mxu0 0
        %2250 = vmatprep.mubr.bf16.mxu0 0
        %2251 = vmatmul.mubr.bf16.gmra.mrb[0].mxu0 %v1393
        %v2252 = vpop.f32.mrb[0].mxu0
        %v2253 = vadd.f32 %v2153, %v2252
        %v2254 = vpop.f32.mrb[0].mxu0
        %v2255 = vpop.f32.mrb[0].mxu0
        %v2256 = vpop.f32.mrb[0].mxu0
        %2257 = vdwg.mxu0
        %v2274 = vunpack.c.l.b16 %v1292
        %v2275 = vunpack.c.l.b16 %v1293
        %v2276 = vunpack.c.l.b16 %v1294
        %v2277 = vunpack.c.l.b16 %v1295
        %v2278 = vunpack.c.l.b16 %v1296
        %v2279 = vunpack.c.l.b16 %v1297
        %v2280 = vunpack.c.l.b16 %v1298
        %v2281 = vunpack.c.l.b16 %v1299
        %v2282 = vunpack.c.l.b16 %v1300
        %v2283 = vunpack.c.l.b16 %v1301
        %v2284 = vunpack.c.l.b16 %v1302
        %v2285 = vunpack.c.l.b16 %v1303
        %v2286 = vunpack.c.l.b16 %v1304
        %v2287 = vunpack.c.l.b16 %v1305
        %v2288 = vunpack.c.l.b16 %v1306
        %v2289 = vunpack.c.l.b16 %v1307
        %v2290 = vpack.c.b16 %v2275, %v2274
        %v2291 = vpack.c.b16 %v2277, %v2276
        %v2292 = vpack.c.b16 %v2279, %v2278
        %v2293 = vpack.c.b16 %v2281, %v2280
        %v2294 = vpack.c.b16 %v2283, %v2282
        %v2295 = vpack.c.b16 %v2285, %v2284
        %v2296 = vpack.c.b16 %v2287, %v2286
        %v2297 = vpack.c.b16 %v2289, %v2288
        %2306 = vmatprep.subr.bf16.mxu0 0
        %2307 = vmatpush1.bf16.msra.mxu0 %v2290
        %2308 = vmatprep.subr.bf16.mxu0 0
        %2309 = vmatpush1.bf16.msra.mxu0 %v2291
        %2310 = vmatprep.subr.bf16.mxu0 0
        %2311 = vmatpush1.bf16.msra.mxu0 %v2292
        %2312 = vmatprep.subr.bf16.mxu0 0
        %2313 = vmatpush1.bf16.msra.mxu0 %v2293
        %2314 = vmatprep.subr.bf16.mxu0 0
        %2315 = vmatpush1.bf16.msra.mxu0 %v2294
        %2316 = vmatprep.subr.bf16.mxu0 0
        %2317 = vmatpush1.bf16.msra.mxu0 %v2295
        %2318 = vmatprep.subr.bf16.mxu0 0
        %2319 = vmatpush1.bf16.msra.mxu0 %v2296
        %2320 = vmatprep.subr.bf16.mxu0 0
        %2321 = vmatpush1.bf16.msra.mxu0 %v2297
        %2322 = vmatprep.subr.bf16.mxu0 0
        %2323 = vmatpush1.bf16.msra.mxu0 0
        %2324 = vmatprep.subr.bf16.mxu0 0
        %2325 = vmatpush1.bf16.msra.mxu0 0
        %2326 = vmatprep.subr.bf16.mxu0 0
        %2327 = vmatpush1.bf16.msra.mxu0 0
        %2328 = vmatprep.subr.bf16.mxu0 0
        %2329 = vmatpush1.bf16.msra.mxu0 0
        %2330 = vmatprep.subr.bf16.mxu0 0
        %2331 = vmatpush1.bf16.msra.mxu0 0
        %2332 = vmatprep.subr.bf16.mxu0 0
        %2333 = vmatpush1.bf16.msra.mxu0 0
        %2334 = vmatprep.subr.bf16.mxu0 0
        %2335 = vmatpush1.bf16.msra.mxu0 0
        %2336 = vmatprep.subr.bf16.mxu0 0
        %2337 = vmatpush1.bf16.msra.mxu0 0
        %2338 = vmatprep.mubr.bf16.mxu0 0
        %2339 = vmatmul.mubr.bf16.gmra.mrb[0].mxu0 %v1393
        %v2340 = vpop.f32.mrb[0].mxu0
        %v2341 = vadd.f32 %v2157, %v2340
        %v2342 = vpop.f32.mrb[0].mxu0
        %v2343 = vpop.f32.mrb[0].mxu0
        %v2344 = vpop.f32.mrb[0].mxu0
        %2345 = vdwg.mxu0
        %v2362 = vunpack.c.l.b16 %v1308
        %v2363 = vunpack.c.l.b16 %v1309
        %v2364 = vunpack.c.l.b16 %v1310
        %v2365 = vunpack.c.l.b16 %v1311
        %v2366 = vunpack.c.l.b16 %v1312
        %v2367 = vunpack.c.l.b16 %v1313
        %v2368 = vunpack.c.l.b16 %v1314
        %v2369 = vunpack.c.l.b16 %v1315
        %v2370 = vunpack.c.l.b16 %v1316
        %v2371 = vunpack.c.l.b16 %v1317
        %v2372 = vunpack.c.l.b16 %v1318
        %v2373 = vunpack.c.l.b16 %v1319
        %v2374 = vunpack.c.l.b16 %v1320
        %v2375 = vunpack.c.l.b16 %v1321
        %v2376 = vunpack.c.l.b16 %v1322
        %v2377 = vunpack.c.l.b16 %v1323
        %v2378 = vpack.c.b16 %v2363, %v2362
        %v2379 = vpack.c.b16 %v2365, %v2364
        %v2380 = vpack.c.b16 %v2367, %v2366
        %v2381 = vpack.c.b16 %v2369, %v2368
        %v2382 = vpack.c.b16 %v2371, %v2370
        %v2383 = vpack.c.b16 %v2373, %v2372
        %v2384 = vpack.c.b16 %v2375, %v2374
        %v2385 = vpack.c.b16 %v2377, %v2376
        %2394 = vmatprep.subr.bf16.mxu0 0
        %2395 = vmatpush1.bf16.msra.mxu0 %v2378
        %2396 = vmatprep.subr.bf16.mxu0 0
        %2397 = vmatpush1.bf16.msra.mxu0 %v2379
        %2398 = vmatprep.subr.bf16.mxu0 0
        %2399 = vmatpush1.bf16.msra.mxu0 %v2380
        %2400 = vmatprep.subr.bf16.mxu0 0
        %2401 = vmatpush1.bf16.msra.mxu0 %v2381
        %2402 = vmatprep.subr.bf16.mxu0 0
        %2403 = vmatpush1.bf16.msra.mxu0 %v2382
        %2404 = vmatprep.subr.bf16.mxu0 0
        %2405 = vmatpush1.bf16.msra.mxu0 %v2383
        %2406 = vmatprep.subr.bf16.mxu0 0
        %2407 = vmatpush1.bf16.msra.mxu0 %v2384
        %2408 = vmatprep.subr.bf16.mxu0 0
        %2409 = vmatpush1.bf16.msra.mxu0 %v2385
        %2410 = vmatprep.subr.bf16.mxu0 0
        %2411 = vmatpush1.bf16.msra.mxu0 0
        %2412 = vmatprep.subr.bf16.mxu0 0
        %2413 = vmatpush1.bf16.msra.mxu0 0
        %2414 = vmatprep.subr.bf16.mxu0 0
        %2415 = vmatpush1.bf16.msra.mxu0 0
        %2416 = vmatprep.subr.bf16.mxu0 0
        %2417 = vmatpush1.bf16.msra.mxu0 0
        %2418 = vmatprep.subr.bf16.mxu0 0
        %2419 = vmatpush1.bf16.msra.mxu0 0
        %2420 = vmatprep.subr.bf16.mxu0 0
        %2421 = vmatpush1.bf16.msra.mxu0 0
        %2422 = vmatprep.subr.bf16.mxu0 0
        %2423 = vmatpush1.bf16.msra.mxu0 0
        %2424 = vmatprep.subr.bf16.mxu0 0
        %2425 = vmatpush1.bf16.msra.mxu0 0
        %2426 = vmatprep.mubr.bf16.mxu0 0
        %2427 = vmatmul.mubr.bf16.gmra.mrb[0].mxu0 %v1393
        %v2428 = vpop.f32.mrb[0].mxu0
        %v2429 = vadd.f32 %v2161, %v2428
        %v2430 = vpop.f32.mrb[0].mxu0
        %v2431 = vpop.f32.mrb[0].mxu0
        %v2432 = vpop.f32.mrb[0].mxu0
        %2433 = vdwg.mxu0
        %v2450 = vunpack.c.l.b16 %v1324
        %v2451 = vunpack.c.l.b16 %v1325
        %v2452 = vunpack.c.l.b16 %v1326
        %v2453 = vunpack.c.l.b16 %v1327
        %v2454 = vunpack.c.l.b16 %v1328
        %v2455 = vunpack.c.l.b16 %v1329
        %v2456 = vunpack.c.l.b16 %v1330
        %v2457 = vunpack.c.l.b16 %v1331
        %v2458 = vunpack.c.l.b16 %v1332
        %v2459 = vunpack.c.l.b16 %v1333
        %v2460 = vunpack.c.l.b16 %v1334
        %v2461 = vunpack.c.l.b16 %v1335
        %v2462 = vunpack.c.l.b16 %v1336
        %v2463 = vunpack.c.l.b16 %v1337
        %v2464 = vunpack.c.l.b16 %v1338
        %v2465 = vunpack.c.l.b16 %v1339
        %v2466 = vpack.c.b16 %v2451, %v2450
        %v2467 = vpack.c.b16 %v2453, %v2452
        %v2468 = vpack.c.b16 %v2455, %v2454
        %v2469 = vpack.c.b16 %v2457, %v2456
        %v2470 = vpack.c.b16 %v2459, %v2458
        %v2471 = vpack.c.b16 %v2461, %v2460
        %v2472 = vpack.c.b16 %v2463, %v2462
        %v2473 = vpack.c.b16 %v2465, %v2464
        %2482 = vmatprep.subr.bf16.mxu0 0
        %2483 = vmatpush1.bf16.msra.mxu0 %v2466
        %2484 = vmatprep.subr.bf16.mxu0 0
        %2485 = vmatpush1.bf16.msra.mxu0 %v2467
        %2486 = vmatprep.subr.bf16.mxu0 0
        %2487 = vmatpush1.bf16.msra.mxu0 %v2468
        %2488 = vmatprep.subr.bf16.mxu0 0
        %2489 = vmatpush1.bf16.msra.mxu0 %v2469
        %2490 = vmatprep.subr.bf16.mxu0 0
        %2491 = vmatpush1.bf16.msra.mxu0 %v2470
        %2492 = vmatprep.subr.bf16.mxu0 0
        %2493 = vmatpush1.bf16.msra.mxu0 %v2471
        %2494 = vmatprep.subr.bf16.mxu0 0
        %2495 = vmatpush1.bf16.msra.mxu0 %v2472
        %2496 = vmatprep.subr.bf16.mxu0 0
        %2497 = vmatpush1.bf16.msra.mxu0 %v2473
        %2498 = vmatprep.subr.bf16.mxu0 0
        %2499 = vmatpush1.bf16.msra.mxu0 0
        %2500 = vmatprep.subr.bf16.mxu0 0
        %2501 = vmatpush1.bf16.msra.mxu0 0
        %2502 = vmatprep.subr.bf16.mxu0 0
        %2503 = vmatpush1.bf16.msra.mxu0 0
        %2504 = vmatprep.subr.bf16.mxu0 0
        %2505 = vmatpush1.bf16.msra.mxu0 0
        %2506 = vmatprep.subr.bf16.mxu0 0
        %2507 = vmatpush1.bf16.msra.mxu0 0
        %2508 = vmatprep.subr.bf16.mxu0 0
        %2509 = vmatpush1.bf16.msra.mxu0 0
        %2510 = vmatprep.subr.bf16.mxu0 0
        %2511 = vmatpush1.bf16.msra.mxu0 0
        %2512 = vmatprep.subr.bf16.mxu0 0
        %2513 = vmatpush1.bf16.msra.mxu0 0
        %2514 = vmatprep.mubr.bf16.mxu0 0
        %2515 = vmatmul.mubr.bf16.gmra.mrb[0].mxu0 %v1393
        %v2516 = vpop.f32.mrb[0].mxu0
        %v2517 = vadd.f32 %v2165, %v2516
        %v2518 = vpop.f32.mrb[0].mxu0
        %v2519 = vpop.f32.mrb[0].mxu0
        %v2520 = vpop.f32.mrb[0].mxu0
        %2521 = vdwg.mxu0
        %v2522 = vmul.f32 %v1501, 0.35355338
        %v2523 = vmul.f32 %v1589, 0.35355338
        %v2524 = vmul.f32 %v1677, 0.35355338
        %v2525 = vmul.f32 %v1765, 0.35355338
        %vm2526 = vcmask 64512
        %v2528 = vsel %vm2526, %v2522, 0
        %v2531 = vsel %vm2526, %v1877, 0
        %2533 = vmatprep.subr.mxu0 0.0
        %2534 = vmatpush1.xpose.msra.mxu0 %v2531
        %2535 = vmatprep.subr.mxu0 0.0
        %2536 = vmatpush1.xpose.msra.mxu0 0.0
        %2537 = vmatprep.subr.mxu0 0.0
        %2538 = vmatpush1.xpose.msra.mxu0 0.0
        %2539 = vmatprep.subr.mxu0 0.0
        %2540 = vmatpush1.xpose.msra.mxu0 0.0
        %2541 = vmatprep.subr.mxu0 0.0
        %2542 = vmatpush1.xpose.msra.mxu0 0.0
        %2543 = vmatprep.subr.mxu0 0.0
        %2544 = vmatpush1.xpose.msra.mxu0 0.0
        %2545 = vmatprep.subr.mxu0 0.0
        %2546 = vmatpush1.xpose.msra.mxu0 0.0
        %2547 = vmatprep.subr.mxu0 0.0
        %2548 = vmatpush1.xpose.msra.mxu0 0.0
        %2549 = vmatprep.subr.mxu0 0.0
        %2550 = vmatpush1.xpose.msra.mxu0 0.0
        %2551 = vmatprep.subr.mxu0 0.0
        %2552 = vmatpush1.xpose.msra.mxu0 0.0
        %2553 = vmatprep.subr.mxu0 0.0
        %2554 = vmatpush1.xpose.msra.mxu0 0.0
        %2555 = vmatprep.subr.mxu0 0.0
        %2556 = vmatpush1.xpose.msra.mxu0 0.0
        %2557 = vmatprep.subr.mxu0 0.0
        %2558 = vmatpush1.xpose.msra.mxu0 0.0
        %2559 = vmatprep.subr.mxu0 0.0
        %2560 = vmatpush1.xpose.msra.mxu0 0.0
        %2561 = vmatprep.subr.mxu0 0.0
        %2562 = vmatpush1.xpose.msra.mxu0 0.0
        %2563 = vmatprep.subr.mxu0 0.0
        %2564 = vmatpush1.xpose.msra.mxu0 0.0
        %2565 = vmatprep.subr.mxu0 0.0
        %2566 = vmatpush1.xpose.msra.mxu0 0.0
        %2567 = vmatprep.subr.mxu0 0.0
        %2568 = vmatpush1.xpose.msra.mxu0 0.0
        %2569 = vmatprep.subr.mxu0 0.0
        %2570 = vmatpush1.xpose.msra.mxu0 0.0
        %2571 = vmatprep.subr.mxu0 0.0
        %2572 = vmatpush1.xpose.msra.mxu0 0.0
        %2573 = vmatprep.subr.mxu0 0.0
        %2574 = vmatpush1.xpose.msra.mxu0 0.0
        %2575 = vmatprep.subr.mxu0 0.0
        %2576 = vmatpush1.xpose.msra.mxu0 0.0
        %2577 = vmatprep.subr.mxu0 0.0
        %2578 = vmatpush1.xpose.msra.mxu0 0.0
        %2579 = vmatprep.subr.mxu0 0.0
        %2580 = vmatpush1.xpose.msra.mxu0 0.0
        %2581 = vmatprep.subr.mxu0 0.0
        %2582 = vmatpush1.xpose.msra.mxu0 0.0
        %2583 = vmatprep.subr.mxu0 0.0
        %2584 = vmatpush1.xpose.msra.mxu0 0.0
        %2585 = vmatprep.subr.mxu0 0.0
        %2586 = vmatpush1.xpose.msra.mxu0 0.0
        %2587 = vmatprep.subr.mxu0 0.0
        %2588 = vmatpush1.xpose.msra.mxu0 0.0
        %2589 = vmatprep.subr.mxu0 0.0
        %2590 = vmatpush1.xpose.msra.mxu0 0.0
        %2591 = vmatprep.subr.mxu0 0.0
        %2592 = vmatpush1.xpose.msra.mxu0 0.0
        %2593 = vmatprep.subr.mxu0 0.0
        %2594 = vmatpush1.xpose.msra.mxu0 0.0
        %2595 = vmatprep.subr.mxu0 0.0
        %2596 = vmatpush1.xpose.msra.mxu0 0.0
        %2597 = vmatprep.mubr.f32.mxu0 0.0
        %2598 = vmatmul.mubr.f32.gmra.mrb[0].mxu0 %v2528
        %v2599 = vpop.f32.mrb[0].mxu0
        %v2600 = vadd.f32 0.0, %v2599
        %v2601 = vpop.f32.mrb[0].mxu0
        %2602 = vdwg.mxu0
        %v2604 = vsel %vm2526, %v2523, 0
        %v2607 = vsel %vm2526, %v1965, 0
        %2609 = vmatprep.subr.mxu0 0.0
        %2610 = vmatpush1.xpose.msra.mxu0 %v2607
        %2611 = vmatprep.subr.mxu0 0.0
        %2612 = vmatpush1.xpose.msra.mxu0 0.0
        %2613 = vmatprep.subr.mxu0 0.0
        %2614 = vmatpush1.xpose.msra.mxu0 0.0
        %2615 = vmatprep.subr.mxu0 0.0
        %2616 = vmatpush1.xpose.msra.mxu0 0.0
        %2617 = vmatprep.subr.mxu0 0.0
        %2618 = vmatpush1.xpose.msra.mxu0 0.0
        %2619 = vmatprep.subr.mxu0 0.0
        %2620 = vmatpush1.xpose.msra.mxu0 0.0
        %2621 = vmatprep.subr.mxu0 0.0
        %2622 = vmatpush1.xpose.msra.mxu0 0.0
        %2623 = vmatprep.subr.mxu0 0.0
        %2624 = vmatpush1.xpose.msra.mxu0 0.0
        %2625 = vmatprep.subr.mxu0 0.0
        %2626 = vmatpush1.xpose.msra.mxu0 0.0
        %2627 = vmatprep.subr.mxu0 0.0
        %2628 = vmatpush1.xpose.msra.mxu0 0.0
        %2629 = vmatprep.subr.mxu0 0.0
        %2630 = vmatpush1.xpose.msra.mxu0 0.0
        %2631 = vmatprep.subr.mxu0 0.0
        %2632 = vmatpush1.xpose.msra.mxu0 0.0
        %2633 = vmatprep.subr.mxu0 0.0
        %2634 = vmatpush1.xpose.msra.mxu0 0.0
        %2635 = vmatprep.subr.mxu0 0.0
        %2636 = vmatpush1.xpose.msra.mxu0 0.0
        %2637 = vmatprep.subr.mxu0 0.0
        %2638 = vmatpush1.xpose.msra.mxu0 0.0
        %2639 = vmatprep.subr.mxu0 0.0
        %2640 = vmatpush1.xpose.msra.mxu0 0.0
        %2641 = vmatprep.subr.mxu0 0.0
        %2642 = vmatpush1.xpose.msra.mxu0 0.0
        %2643 = vmatprep.subr.mxu0 0.0
        %2644 = vmatpush1.xpose.msra.mxu0 0.0
        %2645 = vmatprep.subr.mxu0 0.0
        %2646 = vmatpush1.xpose.msra.mxu0 0.0
        %2647 = vmatprep.subr.mxu0 0.0
        %2648 = vmatpush1.xpose.msra.mxu0 0.0
        %2649 = vmatprep.subr.mxu0 0.0
        %2650 = vmatpush1.xpose.msra.mxu0 0.0
        %2651 = vmatprep.subr.mxu0 0.0
        %2652 = vmatpush1.xpose.msra.mxu0 0.0
        %2653 = vmatprep.subr.mxu0 0.0
        %2654 = vmatpush1.xpose.msra.mxu0 0.0
        %2655 = vmatprep.subr.mxu0 0.0
        %2656 = vmatpush1.xpose.msra.mxu0 0.0
        %2657 = vmatprep.subr.mxu0 0.0
        %2658 = vmatpush1.xpose.msra.mxu0 0.0
        %2659 = vmatprep.subr.mxu0 0.0
        %2660 = vmatpush1.xpose.msra.mxu0 0.0
        %2661 = vmatprep.subr.mxu0 0.0
        %2662 = vmatpush1.xpose.msra.mxu0 0.0
        %2663 = vmatprep.subr.mxu0 0.0
        %2664 = vmatpush1.xpose.msra.mxu0 0.0
        %2665 = vmatprep.subr.mxu0 0.0
        %2666 = vmatpush1.xpose.msra.mxu0 0.0
        %2667 = vmatprep.subr.mxu0 0.0
        %2668 = vmatpush1.xpose.msra.mxu0 0.0
        %2669 = vmatprep.subr.mxu0 0.0
        %2670 = vmatpush1.xpose.msra.mxu0 0.0
        %2671 = vmatprep.subr.mxu0 0.0
        %2672 = vmatpush1.xpose.msra.mxu0 0.0
        %2673 = vmatprep.mubr.f32.mxu0 0.0
        %2674 = vmatmul.mubr.f32.gmra.mrb[0].mxu0 %v2604
        %v2675 = vpop.f32.mrb[0].mxu0
        %v2676 = vadd.f32 0.0, %v2675
        %v2677 = vpop.f32.mrb[0].mxu0
        %2678 = vdwg.mxu0
        %v2680 = vsel %vm2526, %v2524, 0
        %v2683 = vsel %vm2526, %v2053, 0
        %2685 = vmatprep.subr.mxu0 0.0
        %2686 = vmatpush1.xpose.msra.mxu0 %v2683
        %2687 = vmatprep.subr.mxu0 0.0
        %2688 = vmatpush1.xpose.msra.mxu0 0.0
        %2689 = vmatprep.subr.mxu0 0.0
        %2690 = vmatpush1.xpose.msra.mxu0 0.0
        %2691 = vmatprep.subr.mxu0 0.0
        %2692 = vmatpush1.xpose.msra.mxu0 0.0
        %2693 = vmatprep.subr.mxu0 0.0
        %2694 = vmatpush1.xpose.msra.mxu0 0.0
        %2695 = vmatprep.subr.mxu0 0.0
        %2696 = vmatpush1.xpose.msra.mxu0 0.0
        %2697 = vmatprep.subr.mxu0 0.0
        %2698 = vmatpush1.xpose.msra.mxu0 0.0
        %2699 = vmatprep.subr.mxu0 0.0
        %2700 = vmatpush1.xpose.msra.mxu0 0.0
        %2701 = vmatprep.subr.mxu0 0.0
        %2702 = vmatpush1.xpose.msra.mxu0 0.0
        %2703 = vmatprep.subr.mxu0 0.0
        %2704 = vmatpush1.xpose.msra.mxu0 0.0
        %2705 = vmatprep.subr.mxu0 0.0
        %2706 = vmatpush1.xpose.msra.mxu0 0.0
        %2707 = vmatprep.subr.mxu0 0.0
        %2708 = vmatpush1.xpose.msra.mxu0 0.0
        %2709 = vmatprep.subr.mxu0 0.0
        %2710 = vmatpush1.xpose.msra.mxu0 0.0
        %2711 = vmatprep.subr.mxu0 0.0
        %2712 = vmatpush1.xpose.msra.mxu0 0.0
        %2713 = vmatprep.subr.mxu0 0.0
        %2714 = vmatpush1.xpose.msra.mxu0 0.0
        %2715 = vmatprep.subr.mxu0 0.0
        %2716 = vmatpush1.xpose.msra.mxu0 0.0
        %2717 = vmatprep.subr.mxu0 0.0
        %2718 = vmatpush1.xpose.msra.mxu0 0.0
        %2719 = vmatprep.subr.mxu0 0.0
        %2720 = vmatpush1.xpose.msra.mxu0 0.0
        %2721 = vmatprep.subr.mxu0 0.0
        %2722 = vmatpush1.xpose.msra.mxu0 0.0
        %2723 = vmatprep.subr.mxu0 0.0
        %2724 = vmatpush1.xpose.msra.mxu0 0.0
        %2725 = vmatprep.subr.mxu0 0.0
        %2726 = vmatpush1.xpose.msra.mxu0 0.0
        %2727 = vmatprep.subr.mxu0 0.0
        %2728 = vmatpush1.xpose.msra.mxu0 0.0
        %2729 = vmatprep.subr.mxu0 0.0
        %2730 = vmatpush1.xpose.msra.mxu0 0.0
        %2731 = vmatprep.subr.mxu0 0.0
        %2732 = vmatpush1.xpose.msra.mxu0 0.0
        %2733 = vmatprep.subr.mxu0 0.0
        %2734 = vmatpush1.xpose.msra.mxu0 0.0
        %2735 = vmatprep.subr.mxu0 0.0
        %2736 = vmatpush1.xpose.msra.mxu0 0.0
        %2737 = vmatprep.subr.mxu0 0.0
        %2738 = vmatpush1.xpose.msra.mxu0 0.0
        %2739 = vmatprep.subr.mxu0 0.0
        %2740 = vmatpush1.xpose.msra.mxu0 0.0
        %2741 = vmatprep.subr.mxu0 0.0
        %2742 = vmatpush1.xpose.msra.mxu0 0.0
        %2743 = vmatprep.subr.mxu0 0.0
        %2744 = vmatpush1.xpose.msra.mxu0 0.0
        %2745 = vmatprep.subr.mxu0 0.0
        %2746 = vmatpush1.xpose.msra.mxu0 0.0
        %2747 = vmatprep.subr.mxu0 0.0
        %2748 = vmatpush1.xpose.msra.mxu0 0.0
        %2749 = vmatprep.mubr.f32.mxu0 0.0
        %2750 = vmatmul.mubr.f32.gmra.mrb[0].mxu0 %v2680
        %v2751 = vpop.f32.mrb[0].mxu0
        %v2752 = vadd.f32 0.0, %v2751
        %v2753 = vpop.f32.mrb[0].mxu0
        %2754 = vdwg.mxu0
        %v2756 = vsel %vm2526, %v2525, 0
        %v2759 = vsel %vm2526, %v2141, 0
        %2761 = vmatprep.subr.mxu0 0.0
        %2762 = vmatpush1.xpose.msra.mxu0 %v2759
        %2763 = vmatprep.subr.mxu0 0.0
        %2764 = vmatpush1.xpose.msra.mxu0 0.0
        %2765 = vmatprep.subr.mxu0 0.0
        %2766 = vmatpush1.xpose.msra.mxu0 0.0
        %2767 = vmatprep.subr.mxu0 0.0
        %2768 = vmatpush1.xpose.msra.mxu0 0.0
        %2769 = vmatprep.subr.mxu0 0.0
        %2770 = vmatpush1.xpose.msra.mxu0 0.0
        %2771 = vmatprep.subr.mxu0 0.0
        %2772 = vmatpush1.xpose.msra.mxu0 0.0
        %2773 = vmatprep.subr.mxu0 0.0
        %2774 = vmatpush1.xpose.msra.mxu0 0.0
        %2775 = vmatprep.subr.mxu0 0.0
        %2776 = vmatpush1.xpose.msra.mxu0 0.0
        %2777 = vmatprep.subr.mxu0 0.0
        %2778 = vmatpush1.xpose.msra.mxu0 0.0
        %2779 = vmatprep.subr.mxu0 0.0
        %2780 = vmatpush1.xpose.msra.mxu0 0.0
        %2781 = vmatprep.subr.mxu0 0.0
        %2782 = vmatpush1.xpose.msra.mxu0 0.0
        %2783 = vmatprep.subr.mxu0 0.0
        %2784 = vmatpush1.xpose.msra.mxu0 0.0
        %2785 = vmatprep.subr.mxu0 0.0
        %2786 = vmatpush1.xpose.msra.mxu0 0.0
        %2787 = vmatprep.subr.mxu0 0.0
        %2788 = vmatpush1.xpose.msra.mxu0 0.0
        %2789 = vmatprep.subr.mxu0 0.0
        %2790 = vmatpush1.xpose.msra.mxu0 0.0
        %2791 = vmatprep.subr.mxu0 0.0
        %2792 = vmatpush1.xpose.msra.mxu0 0.0
        %2793 = vmatprep.subr.mxu0 0.0
        %2794 = vmatpush1.xpose.msra.mxu0 0.0
        %2795 = vmatprep.subr.mxu0 0.0
        %2796 = vmatpush1.xpose.msra.mxu0 0.0
        %2797 = vmatprep.subr.mxu0 0.0
        %2798 = vmatpush1.xpose.msra.mxu0 0.0
        %2799 = vmatprep.subr.mxu0 0.0
        %2800 = vmatpush1.xpose.msra.mxu0 0.0
        %2801 = vmatprep.subr.mxu0 0.0
        %2802 = vmatpush1.xpose.msra.mxu0 0.0
        %2803 = vmatprep.subr.mxu0 0.0
        %2804 = vmatpush1.xpose.msra.mxu0 0.0
        %2805 = vmatprep.subr.mxu0 0.0
        %2806 = vmatpush1.xpose.msra.mxu0 0.0
        %2807 = vmatprep.subr.mxu0 0.0
        %2808 = vmatpush1.xpose.msra.mxu0 0.0
        %2809 = vmatprep.subr.mxu0 0.0
        %2810 = vmatpush1.xpose.msra.mxu0 0.0
        %2811 = vmatprep.subr.mxu0 0.0
        %2812 = vmatpush1.xpose.msra.mxu0 0.0
        %2813 = vmatprep.subr.mxu0 0.0
        %2814 = vmatpush1.xpose.msra.mxu0 0.0
        %2815 = vmatprep.subr.mxu0 0.0
        %2816 = vmatpush1.xpose.msra.mxu0 0.0
        %2817 = vmatprep.subr.mxu0 0.0
        %2818 = vmatpush1.xpose.msra.mxu0 0.0
        %2819 = vmatprep.subr.mxu0 0.0
        %2820 = vmatpush1.xpose.msra.mxu0 0.0
        %2821 = vmatprep.subr.mxu0 0.0
        %2822 = vmatpush1.xpose.msra.mxu0 0.0
        %2823 = vmatprep.subr.mxu0 0.0
        %2824 = vmatpush1.xpose.msra.mxu0 0.0
        %2825 = vmatprep.mubr.f32.mxu0 0.0
        %2826 = vmatmul.mubr.f32.gmra.mrb[0].mxu0 %v2756
        %v2827 = vpop.f32.mrb[0].mxu0
        %v2828 = vadd.f32 0.0, %v2827
        %v2829 = vpop.f32.mrb[0].mxu0
        %2830 = vdwg.mxu0
        %v2831 = vsel %vm2526, %v2600, -inf
        %2832 = vmax.xlane.f32.xlu0 %v2831
        %v2833 = vpop.xlane.xlu0 %2832
        %v2834 = vsel %vm2526, %v2676, -inf
        %2835 = vmax.xlane.f32.xlu0 %v2834
        %v2836 = vpop.xlane.xlu0 %2835
        %v2837 = vsel %vm2526, %v2752, -inf
        %2838 = vmax.xlane.f32.xlu0 %v2837
        %v2839 = vpop.xlane.xlu0 %2838
        %v2840 = vsel %vm2526, %v2828, -inf
        %2841 = vmax.xlane.f32.xlu0 %v2840
        %v2842 = vpop.xlane.xlu0 %2841
        %v2843 = vsub.f32 %v2600, %v2833
        %v2844 = vsub.f32 %v2676, %v2836
        %v2845 = vsub.f32 %v2752, %v2839
        %v2846 = vsub.f32 %v2828, %v2842
        %v2847 = vmul.f32 %v2843, 1.442695
        %v2848 = vpow.pop %v2847
        %v2849 = vmul.f32 %v2844, 1.442695
        %v2850 = vpow.pop %v2849
        %v2851 = vmul.f32 %v2845, 1.442695
        %v2852 = vpow.pop %v2851
        %v2853 = vmul.f32 %v2846, 1.442695
        %v2854 = vpow.pop %v2853
        %v2855 = vsel %vm2526, %v2848, 0.0
        %2856 = vadd.xlane.f32.xlu0 %v2855
        %v2857 = vpop.xlane.xlu0 %2856
        %v2858 = vsel %vm2526, %v2850, 0.0
        %2859 = vadd.xlane.f32.xlu0 %v2858
        %v2860 = vpop.xlane.xlu0 %2859
        %v2861 = vsel %vm2526, %v2852, 0.0
        %2862 = vadd.xlane.f32.xlu0 %v2861
        %v2863 = vpop.xlane.xlu0 %2862
        %v2864 = vsel %vm2526, %v2854, 0.0
        %2865 = vadd.xlane.f32.xlu0 %v2864
        %v2866 = vpop.xlane.xlu0 %2865
        %v2867 = vrcp.pop %v2857
        %v2868 = vrcp.pop %v2860
        %v2869 = vrcp.pop %v2863
        %v2870 = vrcp.pop %v2866
        %v2871 = vmul.f32 %v2848, %v2867
        %v2872 = vmul.f32 %v2850, %v2868
        %v2873 = vmul.f32 %v2852, %v2869
        %v2874 = vmul.f32 %v2854, %v2870
        %v2876 = vsel %vm2526, %v2871, 0
        %2878 = vmatprep.subr.mxu0 0.0
        %2879 = vmatpush1.msra.mxu0 %v2253
        %2880 = vmatprep.subr.mxu0 0.0
        %2881 = vmatpush1.msra.mxu0 0.0
        %2882 = vmatprep.subr.mxu0 0.0
        %2883 = vmatpush1.msra.mxu0 0.0
        %2884 = vmatprep.subr.mxu0 0.0
        %2885 = vmatpush1.msra.mxu0 0.0
        %2886 = vmatprep.subr.mxu0 0.0
        %2887 = vmatpush1.msra.mxu0 0.0
        %2888 = vmatprep.subr.mxu0 0.0
        %2889 = vmatpush1.msra.mxu0 0.0
        %2890 = vmatprep.subr.mxu0 0.0
        %2891 = vmatpush1.msra.mxu0 0.0
        %2892 = vmatprep.subr.mxu0 0.0
        %2893 = vmatpush1.msra.mxu0 0.0
        %2894 = vmatprep.subr.mxu0 0.0
        %2895 = vmatpush1.msra.mxu0 0.0
        %2896 = vmatprep.subr.mxu0 0.0
        %2897 = vmatpush1.msra.mxu0 0.0
        %2898 = vmatprep.subr.mxu0 0.0
        %2899 = vmatpush1.msra.mxu0 0.0
        %2900 = vmatprep.subr.mxu0 0.0
        %2901 = vmatpush1.msra.mxu0 0.0
        %2902 = vmatprep.subr.mxu0 0.0
        %2903 = vmatpush1.msra.mxu0 0.0
        %2904 = vmatprep.subr.mxu0 0.0
        %2905 = vmatpush1.msra.mxu0 0.0
        %2906 = vmatprep.subr.mxu0 0.0
        %2907 = vmatpush1.msra.mxu0 0.0
        %2908 = vmatprep.subr.mxu0 0.0
        %2909 = vmatpush1.msra.mxu0 0.0
        %2910 = vmatprep.subr.mxu0 0.0
        %2911 = vmatpush1.msra.mxu0 0.0
        %2912 = vmatprep.subr.mxu0 0.0
        %2913 = vmatpush1.msra.mxu0 0.0
        %2914 = vmatprep.subr.mxu0 0.0
        %2915 = vmatpush1.msra.mxu0 0.0
        %2916 = vmatprep.subr.mxu0 0.0
        %2917 = vmatpush1.msra.mxu0 0.0
        %2918 = vmatprep.subr.mxu0 0.0
        %2919 = vmatpush1.msra.mxu0 0.0
        %2920 = vmatprep.subr.mxu0 0.0
        %2921 = vmatpush1.msra.mxu0 0.0
        %2922 = vmatprep.subr.mxu0 0.0
        %2923 = vmatpush1.msra.mxu0 0.0
        %2924 = vmatprep.subr.mxu0 0.0
        %2925 = vmatpush1.msra.mxu0 0.0
        %2926 = vmatprep.subr.mxu0 0.0
        %2927 = vmatpush1.msra.mxu0 0.0
        %2928 = vmatprep.subr.mxu0 0.0
        %2929 = vmatpush1.msra.mxu0 0.0
        %2930 = vmatprep.subr.mxu0 0.0
        %2931 = vmatpush1.msra.mxu0 0.0
        %2932 = vmatprep.subr.mxu0 0.0
        %2933 = vmatpush1.msra.mxu0 0.0
        %2934 = vmatprep.subr.mxu0 0.0
        %2935 = vmatpush1.msra.mxu0 0.0
        %2936 = vmatprep.subr.mxu0 0.0
        %2937 = vmatpush1.msra.mxu0 0.0
        %2938 = vmatprep.subr.mxu0 0.0
        %2939 = vmatpush1.msra.mxu0 0.0
        %2940 = vmatprep.subr.mxu0 0.0
        %2941 = vmatpush1.msra.mxu0 0.0
        %2942 = vmatprep.mubr.f32.mxu0 0.0
        %2943 = vmatmul.mubr.f32.gmra.mrb[0].mxu0 %v2876
        %v2944 = vpop.f32.mrb[0].mxu0
        %v2945 = vadd.f32 0.0, %v2944
        %v2946 = vpop.f32.mrb[0].mxu0
        %2947 = vdwg.mxu0
        %v2949 = vsel %vm2526, %v2872, 0
        %2951 = vmatprep.subr.mxu0 0.0
        %2952 = vmatpush1.msra.mxu0 %v2341
        %2953 = vmatprep.subr.mxu0 0.0
        %2954 = vmatpush1.msra.mxu0 0.0
        %2955 = vmatprep.subr.mxu0 0.0
        %2956 = vmatpush1.msra.mxu0 0.0
        %2957 = vmatprep.subr.mxu0 0.0
        %2958 = vmatpush1.msra.mxu0 0.0
        %2959 = vmatprep.subr.mxu0 0.0
        %2960 = vmatpush1.msra.mxu0 0.0
        %2961 = vmatprep.subr.mxu0 0.0
        %2962 = vmatpush1.msra.mxu0 0.0
        %2963 = vmatprep.subr.mxu0 0.0
        %2964 = vmatpush1.msra.mxu0 0.0
        %2965 = vmatprep.subr.mxu0 0.0
        %2966 = vmatpush1.msra.mxu0 0.0
        %2967 = vmatprep.subr.mxu0 0.0
        %2968 = vmatpush1.msra.mxu0 0.0
        %2969 = vmatprep.subr.mxu0 0.0
        %2970 = vmatpush1.msra.mxu0 0.0
        %2971 = vmatprep.subr.mxu0 0.0
        %2972 = vmatpush1.msra.mxu0 0.0
        %2973 = vmatprep.subr.mxu0 0.0
        %2974 = vmatpush1.msra.mxu0 0.0
        %2975 = vmatprep.subr.mxu0 0.0
        %2976 = vmatpush1.msra.mxu0 0.0
        %2977 = vmatprep.subr.mxu0 0.0
        %2978 = vmatpush1.msra.mxu0 0.0
        %2979 = vmatprep.subr.mxu0 0.0
        %2980 = vmatpush1.msra.mxu0 0.0
        %2981 = vmatprep.subr.mxu0 0.0
        %2982 = vmatpush1.msra.mxu0 0.0
        %2983 = vmatprep.subr.mxu0 0.0
        %2984 = vmatpush1.msra.mxu0 0.0
        %2985 = vmatprep.subr.mxu0 0.0
        %2986 = vmatpush1.msra.mxu0 0.0
        %2987 = vmatprep.subr.mxu0 0.0
        %2988 = vmatpush1.msra.mxu0 0.0
        %2989 = vmatprep.subr.mxu0 0.0
        %2990 = vmatpush1.msra.mxu0 0.0
        %2991 = vmatprep.subr.mxu0 0.0
        %2992 = vmatpush1.msra.mxu0 0.0
        %2993 = vmatprep.subr.mxu0 0.0
        %2994 = vmatpush1.msra.mxu0 0.0
        %2995 = vmatprep.subr.mxu0 0.0
        %2996 = vmatpush1.msra.mxu0 0.0
        %2997 = vmatprep.subr.mxu0 0.0
        %2998 = vmatpush1.msra.mxu0 0.0
        %2999 = vmatprep.subr.mxu0 0.0
        %3000 = vmatpush1.msra.mxu0 0.0
        %3001 = vmatprep.subr.mxu0 0.0
        %3002 = vmatpush1.msra.mxu0 0.0
        %3003 = vmatprep.subr.mxu0 0.0
        %3004 = vmatpush1.msra.mxu0 0.0
        %3005 = vmatprep.subr.mxu0 0.0
        %3006 = vmatpush1.msra.mxu0 0.0
        %3007 = vmatprep.subr.mxu0 0.0
        %3008 = vmatpush1.msra.mxu0 0.0
        %3009 = vmatprep.subr.mxu0 0.0
        %3010 = vmatpush1.msra.mxu0 0.0
        %3011 = vmatprep.subr.mxu0 0.0
        %3012 = vmatpush1.msra.mxu0 0.0
        %3013 = vmatprep.subr.mxu0 0.0
        %3014 = vmatpush1.msra.mxu0 0.0
        %3015 = vmatprep.mubr.f32.mxu0 0.0
        %3016 = vmatmul.mubr.f32.gmra.mrb[0].mxu0 %v2949
        %v3017 = vpop.f32.mrb[0].mxu0
        %v3018 = vadd.f32 0.0, %v3017
        %v3019 = vpop.f32.mrb[0].mxu0
        %3020 = vdwg.mxu0
        %v3022 = vsel %vm2526, %v2873, 0
        %3024 = vmatprep.subr.mxu0 0.0
        %3025 = vmatpush1.msra.mxu0 %v2429
        %3026 = vmatprep.subr.mxu0 0.0
        %3027 = vmatpush1.msra.mxu0 0.0
        %3028 = vmatprep.subr.mxu0 0.0
        %3029 = vmatpush1.msra.mxu0 0.0
        %3030 = vmatprep.subr.mxu0 0.0
        %3031 = vmatpush1.msra.mxu0 0.0
        %3032 = vmatprep.subr.mxu0 0.0
        %3033 = vmatpush1.msra.mxu0 0.0
        %3034 = vmatprep.subr.mxu0 0.0
        %3035 = vmatpush1.msra.mxu0 0.0
        %3036 = vmatprep.subr.mxu0 0.0
        %3037 = vmatpush1.msra.mxu0 0.0
        %3038 = vmatprep.subr.mxu0 0.0
        %3039 = vmatpush1.msra.mxu0 0.0
        %3040 = vmatprep.subr.mxu0 0.0
        %3041 = vmatpush1.msra.mxu0 0.0
        %3042 = vmatprep.subr.mxu0 0.0
        %3043 = vmatpush1.msra.mxu0 0.0
        %3044 = vmatprep.subr.mxu0 0.0
        %3045 = vmatpush1.msra.mxu0 0.0
        %3046 = vmatprep.subr.mxu0 0.0
        %3047 = vmatpush1.msra.mxu0 0.0
        %3048 = vmatprep.subr.mxu0 0.0
        %3049 = vmatpush1.msra.mxu0 0.0
        %3050 = vmatprep.subr.mxu0 0.0
        %3051 = vmatpush1.msra.mxu0 0.0
        %3052 = vmatprep.subr.mxu0 0.0
        %3053 = vmatpush1.msra.mxu0 0.0
        %3054 = vmatprep.subr.mxu0 0.0
        %3055 = vmatpush1.msra.mxu0 0.0
        %3056 = vmatprep.subr.mxu0 0.0
        %3057 = vmatpush1.msra.mxu0 0.0
        %3058 = vmatprep.subr.mxu0 0.0
        %3059 = vmatpush1.msra.mxu0 0.0
        %3060 = vmatprep.subr.mxu0 0.0
        %3061 = vmatpush1.msra.mxu0 0.0
        %3062 = vmatprep.subr.mxu0 0.0
        %3063 = vmatpush1.msra.mxu0 0.0
        %3064 = vmatprep.subr.mxu0 0.0
        %3065 = vmatpush1.msra.mxu0 0.0
        %3066 = vmatprep.subr.mxu0 0.0
        %3067 = vmatpush1.msra.mxu0 0.0
        %3068 = vmatprep.subr.mxu0 0.0
        %3069 = vmatpush1.msra.mxu0 0.0
        %3070 = vmatprep.subr.mxu0 0.0
        %3071 = vmatpush1.msra.mxu0 0.0
        %3072 = vmatprep.subr.mxu0 0.0
        %3073 = vmatpush1.msra.mxu0 0.0
        %3074 = vmatprep.subr.mxu0 0.0
        %3075 = vmatpush1.msra.mxu0 0.0
        %3076 = vmatprep.subr.mxu0 0.0
        %3077 = vmatpush1.msra.mxu0 0.0
        %3078 = vmatprep.subr.mxu0 0.0
        %3079 = vmatpush1.msra.mxu0 0.0
        %3080 = vmatprep.subr.mxu0 0.0
        %3081 = vmatpush1.msra.mxu0 0.0
        %3082 = vmatprep.subr.mxu0 0.0
        %3083 = vmatpush1.msra.mxu0 0.0
        %3084 = vmatprep.subr.mxu0 0.0
        %3085 = vmatpush1.msra.mxu0 0.0
        %3086 = vmatprep.subr.mxu0 0.0
        %3087 = vmatpush1.msra.mxu0 0.0
        %3088 = vmatprep.mubr.f32.mxu0 0.0
        %3089 = vmatmul.mubr.f32.gmra.mrb[0].mxu0 %v3022
        %v3090 = vpop.f32.mrb[0].mxu0
        %v3091 = vadd.f32 0.0, %v3090
        %v3092 = vpop.f32.mrb[0].mxu0
        %3093 = vdwg.mxu0
        %v3095 = vsel %vm2526, %v2874, 0
        %3097 = vmatprep.subr.mxu0 0.0
        %3098 = vmatpush1.msra.mxu0 %v2517
        %3099 = vmatprep.subr.mxu0 0.0
        %3100 = vmatpush1.msra.mxu0 0.0
        %3101 = vmatprep.subr.mxu0 0.0
        %3102 = vmatpush1.msra.mxu0 0.0
        %3103 = vmatprep.subr.mxu0 0.0
        %3104 = vmatpush1.msra.mxu0 0.0
        %3105 = vmatprep.subr.mxu0 0.0
        %3106 = vmatpush1.msra.mxu0 0.0
        %3107 = vmatprep.subr.mxu0 0.0
        %3108 = vmatpush1.msra.mxu0 0.0
        %3109 = vmatprep.subr.mxu0 0.0
        %3110 = vmatpush1.msra.mxu0 0.0
        %3111 = vmatprep.subr.mxu0 0.0
        %3112 = vmatpush1.msra.mxu0 0.0
        %3113 = vmatprep.subr.mxu0 0.0
        %3114 = vmatpush1.msra.mxu0 0.0
        %3115 = vmatprep.subr.mxu0 0.0
        %3116 = vmatpush1.msra.mxu0 0.0
        %3117 = vmatprep.subr.mxu0 0.0
        %3118 = vmatpush1.msra.mxu0 0.0
        %3119 = vmatprep.subr.mxu0 0.0
        %3120 = vmatpush1.msra.mxu0 0.0
        %3121 = vmatprep.subr.mxu0 0.0
        %3122 = vmatpush1.msra.mxu0 0.0
        %3123 = vmatprep.subr.mxu0 0.0
        %3124 = vmatpush1.msra.mxu0 0.0
        %3125 = vmatprep.subr.mxu0 0.0
        %3126 = vmatpush1.msra.mxu0 0.0
        %3127 = vmatprep.subr.mxu0 0.0
        %3128 = vmatpush1.msra.mxu0 0.0
        %3129 = vmatprep.subr.mxu0 0.0
        %3130 = vmatpush1.msra.mxu0 0.0
        %3131 = vmatprep.subr.mxu0 0.0
        %3132 = vmatpush1.msra.mxu0 0.0
        %3133 = vmatprep.subr.mxu0 0.0
        %3134 = vmatpush1.msra.mxu0 0.0
        %3135 = vmatprep.subr.mxu0 0.0
        %3136 = vmatpush1.msra.mxu0 0.0
        %3137 = vmatprep.subr.mxu0 0.0
        %3138 = vmatpush1.msra.mxu0 0.0
        %3139 = vmatprep.subr.mxu0 0.0
        %3140 = vmatpush1.msra.mxu0 0.0
        %3141 = vmatprep.subr.mxu0 0.0
        %3142 = vmatpush1.msra.mxu0 0.0
        %3143 = vmatprep.subr.mxu0 0.0
        %3144 = vmatpush1.msra.mxu0 0.0
        %3145 = vmatprep.subr.mxu0 0.0
        %3146 = vmatpush1.msra.mxu0 0.0
        %3147 = vmatprep.subr.mxu0 0.0
        %3148 = vmatpush1.msra.mxu0 0.0
        %3149 = vmatprep.subr.mxu0 0.0
        %3150 = vmatpush1.msra.mxu0 0.0
        %3151 = vmatprep.subr.mxu0 0.0
        %3152 = vmatpush1.msra.mxu0 0.0
        %3153 = vmatprep.subr.mxu0 0.0
        %3154 = vmatpush1.msra.mxu0 0.0
        %3155 = vmatprep.subr.mxu0 0.0
        %3156 = vmatpush1.msra.mxu0 0.0
        %3157 = vmatprep.subr.mxu0 0.0
        %3158 = vmatpush1.msra.mxu0 0.0
        %3159 = vmatprep.subr.mxu0 0.0
        %3160 = vmatpush1.msra.mxu0 0.0
        %3161 = vmatprep.mubr.f32.mxu0 0.0
        %3162 = vmatmul.mubr.f32.gmra.mrb[0].mxu0 %v3095
        %v3163 = vpop.f32.mrb[0].mxu0
        %v3164 = vadd.f32 0.0, %v3163
        %v3165 = vpop.f32.mrb[0].mxu0
        %3166 = vdwg.mxu0
        %v3167 = vpack.c.bf16 %v2945, %v2945
        %v3168 = vpack.c.bf16 %v3018, %v3018
        %v3169 = vpack.c.bf16 %v3091, %v3091
        %v3170 = vpack.c.bf16 %v3164, %v3164
        %v3172 = vsel %vm2526, %v3167, 0
        %vm3174 = vcmask 1043456
        %v3176 = vsel %vm3174, %v1344, 0
        %3178 = vmatprep.subr.bf16.mxu0 0
        %3179 = vmatpush1.bf16.msra.mxu0 %v3176
        %3180 = vmatprep.subr.bf16.mxu0 0
        %3181 = vmatpush1.bf16.msra.mxu0 0
        %3182 = vmatprep.subr.bf16.mxu0 0
        %3183 = vmatpush1.bf16.msra.mxu0 0
        %3184 = vmatprep.subr.bf16.mxu0 0
        %3185 = vmatpush1.bf16.msra.mxu0 0
        %3186 = vmatprep.subr.bf16.mxu0 0
        %3187 = vmatpush1.bf16.msra.mxu0 0
        %3188 = vmatprep.subr.bf16.mxu0 0
        %3189 = vmatpush1.bf16.msra.mxu0 0
        %3190 = vmatprep.subr.bf16.mxu0 0
        %3191 = vmatpush1.bf16.msra.mxu0 0
        %3192 = vmatprep.subr.bf16.mxu0 0
        %3193 = vmatpush1.bf16.msra.mxu0 0
        %3194 = vmatprep.subr.bf16.mxu0 0
        %3195 = vmatpush1.bf16.msra.mxu0 0
        %3196 = vmatprep.subr.bf16.mxu0 0
        %3197 = vmatpush1.bf16.msra.mxu0 0
        %3198 = vmatprep.subr.bf16.mxu0 0
        %3199 = vmatpush1.bf16.msra.mxu0 0
        %3200 = vmatprep.subr.bf16.mxu0 0
        %3201 = vmatpush1.bf16.msra.mxu0 0
        %3202 = vmatprep.subr.bf16.mxu0 0
        %3203 = vmatpush1.bf16.msra.mxu0 0
        %3204 = vmatprep.subr.bf16.mxu0 0
        %3205 = vmatpush1.bf16.msra.mxu0 0
        %3206 = vmatprep.subr.bf16.mxu0 0
        %3207 = vmatpush1.bf16.msra.mxu0 0
        %3208 = vmatprep.subr.bf16.mxu0 0
        %3209 = vmatpush1.bf16.msra.mxu0 0
        %3210 = vmatprep.mubr.bf16.mxu0 0
        %3211 = vmatmul.mubr.bf16.gmra.mrb[0].mxu0 %v3172
        %v3212 = vpop.f32.mrb[0].mxu0
        %v3213 = vadd.f32 0.0, %v3212
        %v3214 = vpop.f32.mrb[0].mxu0
        %v3215 = vpop.f32.mrb[0].mxu0
        %v3216 = vpop.f32.mrb[0].mxu0
        %3217 = vdwg.mxu0
        %v3219 = vsel %vm2526, %v3168, 0
        %v3222 = vsel %vm3174, %v1345, 0
        %3224 = vmatprep.subr.bf16.mxu0 0
        %3225 = vmatpush1.bf16.msra.mxu0 %v3222
        %3226 = vmatprep.subr.bf16.mxu0 0
        %3227 = vmatpush1.bf16.msra.mxu0 0
        %3228 = vmatprep.subr.bf16.mxu0 0
        %3229 = vmatpush1.bf16.msra.mxu0 0
        %3230 = vmatprep.subr.bf16.mxu0 0
        %3231 = vmatpush1.bf16.msra.mxu0 0
        %3232 = vmatprep.subr.bf16.mxu0 0
        %3233 = vmatpush1.bf16.msra.mxu0 0
        %3234 = vmatprep.subr.bf16.mxu0 0
        %3235 = vmatpush1.bf16.msra.mxu0 0
        %3236 = vmatprep.subr.bf16.mxu0 0
        %3237 = vmatpush1.bf16.msra.mxu0 0
        %3238 = vmatprep.subr.bf16.mxu0 0
        %3239 = vmatpush1.bf16.msra.mxu0 0
        %3240 = vmatprep.subr.bf16.mxu0 0
        %3241 = vmatpush1.bf16.msra.mxu0 0
        %3242 = vmatprep.subr.bf16.mxu0 0
        %3243 = vmatpush1.bf16.msra.mxu0 0
        %3244 = vmatprep.subr.bf16.mxu0 0
        %3245 = vmatpush1.bf16.msra.mxu0 0
        %3246 = vmatprep.subr.bf16.mxu0 0
        %3247 = vmatpush1.bf16.msra.mxu0 0
        %3248 = vmatprep.subr.bf16.mxu0 0
        %3249 = vmatpush1.bf16.msra.mxu0 0
        %3250 = vmatprep.subr.bf16.mxu0 0
        %3251 = vmatpush1.bf16.msra.mxu0 0
        %3252 = vmatprep.subr.bf16.mxu0 0
        %3253 = vmatpush1.bf16.msra.mxu0 0
        %3254 = vmatprep.subr.bf16.mxu0 0
        %3255 = vmatpush1.bf16.msra.mxu0 0
        %3256 = vmatprep.mubr.bf16.mxu0 0
        %3257 = vmatmul.mubr.bf16.gmra.mrb[0].mxu0 %v3219
        %v3258 = vpop.f32.mrb[0].mxu0
        %v3259 = vadd.f32 0.0, %v3258
        %v3260 = vpop.f32.mrb[0].mxu0
        %v3261 = vpop.f32.mrb[0].mxu0
        %v3262 = vpop.f32.mrb[0].mxu0
        %3263 = vdwg.mxu0
        %v3265 = vsel %vm2526, %v3169, 0
        %v3268 = vsel %vm3174, %v1346, 0
        %3270 = vmatprep.subr.bf16.mxu0 0
        %3271 = vmatpush1.bf16.msra.mxu0 %v3268
        %3272 = vmatprep.subr.bf16.mxu0 0
        %3273 = vmatpush1.bf16.msra.mxu0 0
        %3274 = vmatprep.subr.bf16.mxu0 0
        %3275 = vmatpush1.bf16.msra.mxu0 0
        %3276 = vmatprep.subr.bf16.mxu0 0
        %3277 = vmatpush1.bf16.msra.mxu0 0
        %3278 = vmatprep.subr.bf16.mxu0 0
        %3279 = vmatpush1.bf16.msra.mxu0 0
        %3280 = vmatprep.subr.bf16.mxu0 0
        %3281 = vmatpush1.bf16.msra.mxu0 0
        %3282 = vmatprep.subr.bf16.mxu0 0
        %3283 = vmatpush1.bf16.msra.mxu0 0
        %3284 = vmatprep.subr.bf16.mxu0 0
        %3285 = vmatpush1.bf16.msra.mxu0 0
        %3286 = vmatprep.subr.bf16.mxu0 0
        %3287 = vmatpush1.bf16.msra.mxu0 0
        %3288 = vmatprep.subr.bf16.mxu0 0
        %3289 = vmatpush1.bf16.msra.mxu0 0
        %3290 = vmatprep.subr.bf16.mxu0 0
        %3291 = vmatpush1.bf16.msra.mxu0 0
        %3292 = vmatprep.subr.bf16.mxu0 0
        %3293 = vmatpush1.bf16.msra.mxu0 0
        %3294 = vmatprep.subr.bf16.mxu0 0
        %3295 = vmatpush1.bf16.msra.mxu0 0
        %3296 = vmatprep.subr.bf16.mxu0 0
        %3297 = vmatpush1.bf16.msra.mxu0 0
        %3298 = vmatprep.subr.bf16.mxu0 0
        %3299 = vmatpush1.bf16.msra.mxu0 0
        %3300 = vmatprep.subr.bf16.mxu0 0
        %3301 = vmatpush1.bf16.msra.mxu0 0
        %3302 = vmatprep.mubr.bf16.mxu0 0
        %3303 = vmatmul.mubr.bf16.gmra.mrb[0].mxu0 %v3265
        %v3304 = vpop.f32.mrb[0].mxu0
        %v3305 = vadd.f32 0.0, %v3304
        %v3306 = vpop.f32.mrb[0].mxu0
        %v3307 = vpop.f32.mrb[0].mxu0
        %v3308 = vpop.f32.mrb[0].mxu0
        %3309 = vdwg.mxu0
        %v3311 = vsel %vm2526, %v3170, 0
        %v3314 = vsel %vm3174, %v1347, 0
        %3316 = vmatprep.subr.bf16.mxu0 0
        %3317 = vmatpush1.bf16.msra.mxu0 %v3314
        %3318 = vmatprep.subr.bf16.mxu0 0
        %3319 = vmatpush1.bf16.msra.mxu0 0
        %3320 = vmatprep.subr.bf16.mxu0 0
        %3321 = vmatpush1.bf16.msra.mxu0 0
        %3322 = vmatprep.subr.bf16.mxu0 0
        %3323 = vmatpush1.bf16.msra.mxu0 0
        %3324 = vmatprep.subr.bf16.mxu0 0
        %3325 = vmatpush1.bf16.msra.mxu0 0
        %3326 = vmatprep.subr.bf16.mxu0 0
        %3327 = vmatpush1.bf16.msra.mxu0 0
        %3328 = vmatprep.subr.bf16.mxu0 0
        %3329 = vmatpush1.bf16.msra.mxu0 0
        %3330 = vmatprep.subr.bf16.mxu0 0
        %3331 = vmatpush1.bf16.msra.mxu0 0
        %3332 = vmatprep.subr.bf16.mxu0 0
        %3333 = vmatpush1.bf16.msra.mxu0 0
        %3334 = vmatprep.subr.bf16.mxu0 0
        %3335 = vmatpush1.bf16.msra.mxu0 0
        %3336 = vmatprep.subr.bf16.mxu0 0
        %3337 = vmatpush1.bf16.msra.mxu0 0
        %3338 = vmatprep.subr.bf16.mxu0 0
        %3339 = vmatpush1.bf16.msra.mxu0 0
        %3340 = vmatprep.subr.bf16.mxu0 0
        %3341 = vmatpush1.bf16.msra.mxu0 0
        %3342 = vmatprep.subr.bf16.mxu0 0
        %3343 = vmatpush1.bf16.msra.mxu0 0
        %3344 = vmatprep.subr.bf16.mxu0 0
        %3345 = vmatpush1.bf16.msra.mxu0 0
        %3346 = vmatprep.subr.bf16.mxu0 0
        %3347 = vmatpush1.bf16.msra.mxu0 0
        %3348 = vmatprep.mubr.bf16.mxu0 0
        %3349 = vmatmul.mubr.bf16.gmra.mrb[0].mxu0 %v3311
        %v3350 = vpop.f32.mrb[0].mxu0
        %v3351 = vadd.f32 0.0, %v3350
        %v3352 = vpop.f32.mrb[0].mxu0
        %v3353 = vpop.f32.mrb[0].mxu0
        %v3354 = vpop.f32.mrb[0].mxu0
        %3355 = vdwg.mxu0
        %v3356 = vadd.f32 %v3213, %v3259
        %v3357 = vadd.f32 %v3356, %v3305
        %v3358 = vadd.f32 %v3357, %v3351
        %v3360 = vlaneseq
        %v3361 = vshrl.u32 %v3360, 7
        %v3362 = vsub.s32 0, %v3361
        %v3363 = vrot.slane %v1348, %v3362
        %v3365 = vadd.f32 %v3358, %v3363
        %v3366 = vadd.f32 %v3365, %v1392
        %3367 = vadd.xlane.f32.xlu0 %v3366
        %v3368 = vpop.xlane.xlu0 %3367
        %v3369 = vmul.f32 %v3368, 0.03125
        %v3370 = vsub.f32 %v3366, %v3369
        %v3371 = vmul.f32 %v3370, %v1391
        %v3372 = vmul.f32 %v3371, %v3371
        %3373 = vadd.xlane.f32.xlu0 %v3372
        %v3374 = vpop.xlane.xlu0 %3373
        %v3375 = vmul.f32 %v3374, 0.03125
        %v3376 = vadd.f32 %v3375, 1e-06
        %v3377 = vrsqrt.pop %v3376
        %v3378 = vmul.f32 %v3371, %v3377
        %v3380 = vlaneseq
        %v3381 = vshrl.u32 %v3380, 7
        %v3382 = vsub.s32 0, %v3381
        %v3383 = vrot.slane %v1349, %v3382
        %v3385 = vmul.f32 %v3378, %v3383
        %v3387 = vlaneseq
        %v3388 = vshrl.u32 %v3387, 7
        %v3389 = vsub.s32 0, %v3388
        %v3390 = vrot.slane %v1350, %v3389
        %v3392 = vadd.f32 %v3385, %v3390
        %v3393 = vpack.c.bf16 %v3392, %v3392
        %v3395 = vlaneseq
        %v3396 = vshrl.u32 %v3395, 7
        %v3397 = vsub.s32 0, %v3396
        %v3398 = vrot.slane %v1367, %v3397
        %v3416 = vunpack.c.l.b16 %v1351
        %v3417 = vunpack.c.l.b16 %v1352
        %v3418 = vunpack.c.l.b16 %v1353
        %v3419 = vunpack.c.l.b16 %v1354
        %v3420 = vunpack.c.l.b16 %v1355
        %v3421 = vunpack.c.l.b16 %v1356
        %v3422 = vunpack.c.l.b16 %v1357
        %v3423 = vunpack.c.l.b16 %v1358
        %v3424 = vunpack.c.l.b16 %v1359
        %v3425 = vunpack.c.l.b16 %v1360
        %v3426 = vunpack.c.l.b16 %v1361
        %v3427 = vunpack.c.l.b16 %v1362
        %v3428 = vunpack.c.l.b16 %v1363
        %v3429 = vunpack.c.l.b16 %v1364
        %v3430 = vunpack.c.l.b16 %v1365
        %v3431 = vunpack.c.l.b16 %v1366
        %v3432 = vpack.c.b16 %v3417, %v3416
        %v3433 = vpack.c.b16 %v3419, %v3418
        %v3434 = vpack.c.b16 %v3421, %v3420
        %v3435 = vpack.c.b16 %v3423, %v3422
        %v3436 = vpack.c.b16 %v3425, %v3424
        %v3437 = vpack.c.b16 %v3427, %v3426
        %v3438 = vpack.c.b16 %v3429, %v3428
        %v3439 = vpack.c.b16 %v3431, %v3430
        %3448 = vmatprep.subr.bf16.mxu0 0
        %3449 = vmatpush1.bf16.msra.mxu0 %v3432
        %3450 = vmatprep.subr.bf16.mxu0 0
        %3451 = vmatpush1.bf16.msra.mxu0 %v3433
        %3452 = vmatprep.subr.bf16.mxu0 0
        %3453 = vmatpush1.bf16.msra.mxu0 %v3434
        %3454 = vmatprep.subr.bf16.mxu0 0
        %3455 = vmatpush1.bf16.msra.mxu0 %v3435
        %3456 = vmatprep.subr.bf16.mxu0 0
        %3457 = vmatpush1.bf16.msra.mxu0 %v3436
        %3458 = vmatprep.subr.bf16.mxu0 0
        %3459 = vmatpush1.bf16.msra.mxu0 %v3437
        %3460 = vmatprep.subr.bf16.mxu0 0
        %3461 = vmatpush1.bf16.msra.mxu0 %v3438
        %3462 = vmatprep.subr.bf16.mxu0 0
        %3463 = vmatpush1.bf16.msra.mxu0 %v3439
        %3464 = vmatprep.subr.bf16.mxu0 0
        %3465 = vmatpush1.bf16.msra.mxu0 0
        %3466 = vmatprep.subr.bf16.mxu0 0
        %3467 = vmatpush1.bf16.msra.mxu0 0
        %3468 = vmatprep.subr.bf16.mxu0 0
        %3469 = vmatpush1.bf16.msra.mxu0 0
        %3470 = vmatprep.subr.bf16.mxu0 0
        %3471 = vmatpush1.bf16.msra.mxu0 0
        %3472 = vmatprep.subr.bf16.mxu0 0
        %3473 = vmatpush1.bf16.msra.mxu0 0
        %3474 = vmatprep.subr.bf16.mxu0 0
        %3475 = vmatpush1.bf16.msra.mxu0 0
        %3476 = vmatprep.subr.bf16.mxu0 0
        %3477 = vmatpush1.bf16.msra.mxu0 0
        %3478 = vmatprep.subr.bf16.mxu0 0
        %3479 = vmatpush1.bf16.msra.mxu0 0
        %3480 = vmatprep.mubr.bf16.mxu0 0
        %3481 = vmatmul.mubr.bf16.gmra.mrb[0].mxu0 %v3393
        %v3482 = vpop.f32.mrb[0].mxu0
        %v3483 = vadd.f32 %v3398, %v3482
        %v3484 = vpop.f32.mrb[0].mxu0
        %v3485 = vpop.f32.mrb[0].mxu0
        %v3486 = vpop.f32.mrb[0].mxu0
        %3487 = vdwg.mxu0
        %v3488 = vmax.f32 %v3483, 0.0
        %v3489 = vpack.c.bf16 %v3488, %v3488
        %v3491 = vlaneseq
        %v3492 = vshrl.u32 %v3491, 7
        %v3493 = vsub.s32 0, %v3492
        %v3494 = vrot.slane %v1384, %v3493
        %v3512 = vunpack.c.l.b16 %v1368
        %v3513 = vunpack.c.l.b16 %v1369
        %v3514 = vunpack.c.l.b16 %v1370
        %v3515 = vunpack.c.l.b16 %v1371
        %v3516 = vunpack.c.l.b16 %v1372
        %v3517 = vunpack.c.l.b16 %v1373
        %v3518 = vunpack.c.l.b16 %v1374
        %v3519 = vunpack.c.l.b16 %v1375
        %v3520 = vunpack.c.l.b16 %v1376
        %v3521 = vunpack.c.l.b16 %v1377
        %v3522 = vunpack.c.l.b16 %v1378
        %v3523 = vunpack.c.l.b16 %v1379
        %v3524 = vunpack.c.l.b16 %v1380
        %v3525 = vunpack.c.l.b16 %v1381
        %v3526 = vunpack.c.l.b16 %v1382
        %v3527 = vunpack.c.l.b16 %v1383
        %v3528 = vpack.c.b16 %v3513, %v3512
        %v3529 = vpack.c.b16 %v3515, %v3514
        %v3530 = vpack.c.b16 %v3517, %v3516
        %v3531 = vpack.c.b16 %v3519, %v3518
        %v3532 = vpack.c.b16 %v3521, %v3520
        %v3533 = vpack.c.b16 %v3523, %v3522
        %v3534 = vpack.c.b16 %v3525, %v3524
        %v3535 = vpack.c.b16 %v3527, %v3526
        %3544 = vmatprep.subr.bf16.mxu0 0
        %3545 = vmatpush1.bf16.msra.mxu0 %v3528
        %3546 = vmatprep.subr.bf16.mxu0 0
        %3547 = vmatpush1.bf16.msra.mxu0 %v3529
        %3548 = vmatprep.subr.bf16.mxu0 0
        %3549 = vmatpush1.bf16.msra.mxu0 %v3530
        %3550 = vmatprep.subr.bf16.mxu0 0
        %3551 = vmatpush1.bf16.msra.mxu0 %v3531
        %3552 = vmatprep.subr.bf16.mxu0 0
        %3553 = vmatpush1.bf16.msra.mxu0 %v3532
        %3554 = vmatprep.subr.bf16.mxu0 0
        %3555 = vmatpush1.bf16.msra.mxu0 %v3533
        %3556 = vmatprep.subr.bf16.mxu0 0
        %3557 = vmatpush1.bf16.msra.mxu0 %v3534
        %3558 = vmatprep.subr.bf16.mxu0 0
        %3559 = vmatpush1.bf16.msra.mxu0 %v3535
        %3560 = vmatprep.subr.bf16.mxu0 0
        %3561 = vmatpush1.bf16.msra.mxu0 0
        %3562 = vmatprep.subr.bf16.mxu0 0
        %3563 = vmatpush1.bf16.msra.mxu0 0
        %3564 = vmatprep.subr.bf16.mxu0 0
        %3565 = vmatpush1.bf16.msra.mxu0 0
        %3566 = vmatprep.subr.bf16.mxu0 0
        %3567 = vmatpush1.bf16.msra.mxu0 0
        %3568 = vmatprep.subr.bf16.mxu0 0
        %3569 = vmatpush1.bf16.msra.mxu0 0
        %3570 = vmatprep.subr.bf16.mxu0 0
        %3571 = vmatpush1.bf16.msra.mxu0 0
        %3572 = vmatprep.subr.bf16.mxu0 0
        %3573 = vmatpush1.bf16.msra.mxu0 0
        %3574 = vmatprep.subr.bf16.mxu0 0
        %3575 = vmatpush1.bf16.msra.mxu0 0
        %3576 = vmatprep.mubr.bf16.mxu0 0
        %3577 = vmatmul.mubr.bf16.gmra.mrb[0].mxu0 %v3489
        %v3578 = vpop.f32.mrb[0].mxu0
        %v3579 = vadd.f32 %v3494, %v3578
        %v3580 = vpop.f32.mrb[0].mxu0
        %v3581 = vpop.f32.mrb[0].mxu0
        %v3582 = vpop.f32.mrb[0].mxu0
        %3583 = vdwg.mxu0
        %v3584 = vadd.f32 %v3579, %v3392
        %3585 = vadd.xlane.f32.xlu0 %v3584
        %v3586 = vpop.xlane.xlu0 %3585
        %v3587 = vmul.f32 %v3586, 0.03125
        %v3588 = vsub.f32 %v3584, %v3587
        %v3589 = vmul.f32 %v3588, %v1391
        %v3590 = vmul.f32 %v3589, %v3589
        %3591 = vadd.xlane.f32.xlu0 %v3590
        %v3592 = vpop.xlane.xlu0 %3591
        %v3593 = vmul.f32 %v3592, 0.03125
        %v3594 = vadd.f32 %v3593, 1e-06
        %v3595 = vrsqrt.pop %v3594
        %v3596 = vmul.f32 %v3589, %v3595
        %v3598 = vlaneseq
        %v3599 = vshrl.u32 %v3598, 7
        %v3600 = vsub.s32 0, %v3599
        %v3601 = vrot.slane %v1385, %v3600
        %v3603 = vmul.f32 %v3596, %v3601
        %v3605 = vlaneseq
        %v3606 = vshrl.u32 %v3605, 7
        %v3607 = vsub.s32 0, %v3606
        %v3608 = vrot.slane %v1386, %v3607
        %v3610 = vadd.f32 %v3603, %v3608
        %3611 = vst [vmem:[#allocation29] sm:$0xff] %v3610
        %s3612 = scalar_lea.vmem [#allocation29], 8
        %v3613 = vld [vmem:[%s3612] sm:$0xff]
        %v3614 = vpack.c.bf16 %v3613, %v3613
        %3615 = vmatprep.subr.bf16.mxu0 0
        %3616 = vmatpush1.bf16.msra.mxu0 %v1450
        %3617 = vmatprep.subr.bf16.mxu0 0
        %3618 = vmatpush1.bf16.msra.mxu0 %v1451
        %3619 = vmatprep.subr.bf16.mxu0 0
        %3620 = vmatpush1.bf16.msra.mxu0 %v1452
        %3621 = vmatprep.subr.bf16.mxu0 0
        %3622 = vmatpush1.bf16.msra.mxu0 %v1453
        %3623 = vmatprep.subr.bf16.mxu0 0
        %3624 = vmatpush1.bf16.msra.mxu0 %v1454
        %3625 = vmatprep.subr.bf16.mxu0 0
        %3626 = vmatpush1.bf16.msra.mxu0 %v1455
        %3627 = vmatprep.subr.bf16.mxu0 0
        %3628 = vmatpush1.bf16.msra.mxu0 %v1456
        %3629 = vmatprep.subr.bf16.mxu0 0
        %3630 = vmatpush1.bf16.msra.mxu0 %v1457
        %3631 = vmatprep.subr.bf16.mxu0 0
        %3632 = vmatpush1.bf16.msra.mxu0 0
        %3633 = vmatprep.subr.bf16.mxu0 0
        %3634 = vmatpush1.bf16.msra.mxu0 0
        %3635 = vmatprep.subr.bf16.mxu0 0
        %3636 = vmatpush1.bf16.msra.mxu0 0
        %3637 = vmatprep.subr.bf16.mxu0 0
        %3638 = vmatpush1.bf16.msra.mxu0 0
        %3639 = vmatprep.subr.bf16.mxu0 0
        %3640 = vmatpush1.bf16.msra.mxu0 0
        %3641 = vmatprep.subr.bf16.mxu0 0
        %3642 = vmatpush1.bf16.msra.mxu0 0
        %3643 = vmatprep.subr.bf16.mxu0 0
        %3644 = vmatpush1.bf16.msra.mxu0 0
        %3645 = vmatprep.subr.bf16.mxu0 0
        %3646 = vmatpush1.bf16.msra.mxu0 0
        %3647 = vmatprep.mubr.bf16.mxu0 0
        %3648 = vmatmul.mubr.bf16.gmra.mrb[0].mxu0 %v3614
        %v3649 = vpop.f32.mrb[0].mxu0
        %v3650 = vadd.f32 %v1401, %v3649
        %v3651 = vpop.f32.mrb[0].mxu0
        %v3652 = vpop.f32.mrb[0].mxu0
        %v3653 = vpop.f32.mrb[0].mxu0
        %3654 = vdwg.mxu0
        %3655 = vmatprep.subr.bf16.mxu0 0
        %3656 = vmatpush1.bf16.msra.mxu0 %v1538
        %3657 = vmatprep.subr.bf16.mxu0 0
        %3658 = vmatpush1.bf16.msra.mxu0 %v1539
        %3659 = vmatprep.subr.bf16.mxu0 0
        %3660 = vmatpush1.bf16.msra.mxu0 %v1540
        %3661 = vmatprep.subr.bf16.mxu0 0
        %3662 = vmatpush1.bf16.msra.mxu0 %v1541
        %3663 = vmatprep.subr.bf16.mxu0 0
        %3664 = vmatpush1.bf16.msra.mxu0 %v1542
        %3665 = vmatprep.subr.bf16.mxu0 0
        %3666 = vmatpush1.bf16.msra.mxu0 %v1543
        %3667 = vmatprep.subr.bf16.mxu0 0
        %3668 = vmatpush1.bf16.msra.mxu0 %v1544
        %3669 = vmatprep.subr.bf16.mxu0 0
        %3670 = vmatpush1.bf16.msra.mxu0 %v1545
        %3671 = vmatprep.subr.bf16.mxu0 0
        %3672 = vmatpush1.bf16.msra.mxu0 0
        %3673 = vmatprep.subr.bf16.mxu0 0
        %3674 = vmatpush1.bf16.msra.mxu0 0
        %3675 = vmatprep.subr.bf16.mxu0 0
        %3676 = vmatpush1.bf16.msra.mxu0 0
        %3677 = vmatprep.subr.bf16.mxu0 0
        %3678 = vmatpush1.bf16.msra.mxu0 0
        %3679 = vmatprep.subr.bf16.mxu0 0
        %3680 = vmatpush1.bf16.msra.mxu0 0
        %3681 = vmatprep.subr.bf16.mxu0 0
        %3682 = vmatpush1.bf16.msra.mxu0 0
        %3683 = vmatprep.subr.bf16.mxu0 0
        %3684 = vmatpush1.bf16.msra.mxu0 0
        %3685 = vmatprep.subr.bf16.mxu0 0
        %3686 = vmatpush1.bf16.msra.mxu0 0
        %3687 = vmatprep.mubr.bf16.mxu0 0
        %3688 = vmatmul.mubr.bf16.gmra.mrb[0].mxu0 %v3614
        %v3689 = vpop.f32.mrb[0].mxu0
        %v3690 = vadd.f32 %v1405, %v3689
        %v3691 = vpop.f32.mrb[0].mxu0
        %v3692 = vpop.f32.mrb[0].mxu0
        %v3693 = vpop.f32.mrb[0].mxu0
        %3694 = vdwg.mxu0
        %3695 = vmatprep.subr.bf16.mxu0 0
        %3696 = vmatpush1.bf16.msra.mxu0 %v1626
        %3697 = vmatprep.subr.bf16.mxu0 0
        %3698 = vmatpush1.bf16.msra.mxu0 %v1627
        %3699 = vmatprep.subr.bf16.mxu0 0
        %3700 = vmatpush1.bf16.msra.mxu0 %v1628
        %3701 = vmatprep.subr.bf16.mxu0 0
        %3702 = vmatpush1.bf16.msra.mxu0 %v1629
        %3703 = vmatprep.subr.bf16.mxu0 0
        %3704 = vmatpush1.bf16.msra.mxu0 %v1630
        %3705 = vmatprep.subr.bf16.mxu0 0
        %3706 = vmatpush1.bf16.msra.mxu0 %v1631
        %3707 = vmatprep.subr.bf16.mxu0 0
        %3708 = vmatpush1.bf16.msra.mxu0 %v1632
        %3709 = vmatprep.subr.bf16.mxu0 0
        %3710 = vmatpush1.bf16.msra.mxu0 %v1633
        %3711 = vmatprep.subr.bf16.mxu0 0
        %3712 = vmatpush1.bf16.msra.mxu0 0
        %3713 = vmatprep.subr.bf16.mxu0 0
        %3714 = vmatpush1.bf16.msra.mxu0 0
        %3715 = vmatprep.subr.bf16.mxu0 0
        %3716 = vmatpush1.bf16.msra.mxu0 0
        %3717 = vmatprep.subr.bf16.mxu0 0
        %3718 = vmatpush1.bf16.msra.mxu0 0
        %3719 = vmatprep.subr.bf16.mxu0 0
        %3720 = vmatpush1.bf16.msra.mxu0 0
        %3721 = vmatprep.subr.bf16.mxu0 0
        %3722 = vmatpush1.bf16.msra.mxu0 0
        %3723 = vmatprep.subr.bf16.mxu0 0
        %3724 = vmatpush1.bf16.msra.mxu0 0
        %3725 = vmatprep.subr.bf16.mxu0 0
        %3726 = vmatpush1.bf16.msra.mxu0 0
        %3727 = vmatprep.mubr.bf16.mxu0 0
        %3728 = vmatmul.mubr.bf16.gmra.mrb[0].mxu0 %v3614
        %v3729 = vpop.f32.mrb[0].mxu0
        %v3730 = vadd.f32 %v1409, %v3729
        %v3731 = vpop.f32.mrb[0].mxu0
        %v3732 = vpop.f32.mrb[0].mxu0
        %v3733 = vpop.f32.mrb[0].mxu0
        %3734 = vdwg.mxu0
        %3735 = vmatprep.subr.bf16.mxu0 0
        %3736 = vmatpush1.bf16.msra.mxu0 %v1714
        %3737 = vmatprep.subr.bf16.mxu0 0
        %3738 = vmatpush1.bf16.msra.mxu0 %v1715
        %3739 = vmatprep.subr.bf16.mxu0 0
        %3740 = vmatpush1.bf16.msra.mxu0 %v1716
        %3741 = vmatprep.subr.bf16.mxu0 0
        %3742 = vmatpush1.bf16.msra.mxu0 %v1717
        %3743 = vmatprep.subr.bf16.mxu0 0
        %3744 = vmatpush1.bf16.msra.mxu0 %v1718
        %3745 = vmatprep.subr.bf16.mxu0 0
        %3746 = vmatpush1.bf16.msra.mxu0 %v1719
        %3747 = vmatprep.subr.bf16.mxu0 0
        %3748 = vmatpush1.bf16.msra.mxu0 %v1720
        %3749 = vmatprep.subr.bf16.mxu0 0
        %3750 = vmatpush1.bf16.msra.mxu0 %v1721
        %3751 = vmatprep.subr.bf16.mxu0 0
        %3752 = vmatpush1.bf16.msra.mxu0 0
        %3753 = vmatprep.subr.bf16.mxu0 0
        %3754 = vmatpush1.bf16.msra.mxu0 0
        %3755 = vmatprep.subr.bf16.mxu0 0
        %3756 = vmatpush1.bf16.msra.mxu0 0
        %3757 = vmatprep.subr.bf16.mxu0 0
        %3758 = vmatpush1.bf16.msra.mxu0 0
        %3759 = vmatprep.subr.bf16.mxu0 0
        %3760 = vmatpush1.bf16.msra.mxu0 0
        %3761 = vmatprep.subr.bf16.mxu0 0
        %3762 = vmatpush1.bf16.msra.mxu0 0
        %3763 = vmatprep.subr.bf16.mxu0 0
        %3764 = vmatpush1.bf16.msra.mxu0 0
        %3765 = vmatprep.subr.bf16.mxu0 0
        %3766 = vmatpush1.bf16.msra.mxu0 0
        %3767 = vmatprep.mubr.bf16.mxu0 0
        %3768 = vmatmul.mubr.bf16.gmra.mrb[0].mxu0 %v3614
        %v3769 = vpop.f32.mrb[0].mxu0
        %v3770 = vadd.f32 %v1413, %v3769
        %v3771 = vpop.f32.mrb[0].mxu0
        %v3772 = vpop.f32.mrb[0].mxu0
        %v3773 = vpop.f32.mrb[0].mxu0
        %3774 = vdwg.mxu0
        %3775 = vmatprep.subr.bf16.mxu0 0
        %3776 = vmatpush1.bf16.msra.mxu0 %v1826
        %3777 = vmatprep.subr.bf16.mxu0 0
        %3778 = vmatpush1.bf16.msra.mxu0 %v1827
        %3779 = vmatprep.subr.bf16.mxu0 0
        %3780 = vmatpush1.bf16.msra.mxu0 %v1828
        %3781 = vmatprep.subr.bf16.mxu0 0
        %3782 = vmatpush1.bf16.msra.mxu0 %v1829
        %3783 = vmatprep.subr.bf16.mxu0 0
        %3784 = vmatpush1.bf16.msra.mxu0 %v1830
        %3785 = vmatprep.subr.bf16.mxu0 0
        %3786 = vmatpush1.bf16.msra.mxu0 %v1831
        %3787 = vmatprep.subr.bf16.mxu0 0
        %3788 = vmatpush1.bf16.msra.mxu0 %v1832
        %3789 = vmatprep.subr.bf16.mxu0 0
        %3790 = vmatpush1.bf16.msra.mxu0 %v1833
        %3791 = vmatprep.subr.bf16.mxu0 0
        %3792 = vmatpush1.bf16.msra.mxu0 0
        %3793 = vmatprep.subr.bf16.mxu0 0
        %3794 = vmatpush1.bf16.msra.mxu0 0
        %3795 = vmatprep.subr.bf16.mxu0 0
        %3796 = vmatpush1.bf16.msra.mxu0 0
        %3797 = vmatprep.subr.bf16.mxu0 0
        %3798 = vmatpush1.bf16.msra.mxu0 0
        %3799 = vmatprep.subr.bf16.mxu0 0
        %3800 = vmatpush1.bf16.msra.mxu0 0
        %3801 = vmatprep.subr.bf16.mxu0 0
        %3802 = vmatpush1.bf16.msra.mxu0 0
        %3803 = vmatprep.subr.bf16.mxu0 0
        %3804 = vmatpush1.bf16.msra.mxu0 0
        %3805 = vmatprep.subr.bf16.mxu0 0
        %3806 = vmatpush1.bf16.msra.mxu0 0
        %3807 = vmatprep.mubr.bf16.mxu0 0
        %3808 = vmatmul.mubr.bf16.gmra.mrb[0].mxu0 %v3614
        %v3809 = vpop.f32.mrb[0].mxu0
        %v3810 = vadd.f32 %v1777, %v3809
        %v3811 = vpop.f32.mrb[0].mxu0
        %v3812 = vpop.f32.mrb[0].mxu0
        %v3813 = vpop.f32.mrb[0].mxu0
        %3814 = vdwg.mxu0
        %3815 = vmatprep.subr.bf16.mxu0 0
        %3816 = vmatpush1.bf16.msra.mxu0 %v1914
        %3817 = vmatprep.subr.bf16.mxu0 0
        %3818 = vmatpush1.bf16.msra.mxu0 %v1915
        %3819 = vmatprep.subr.bf16.mxu0 0
        %3820 = vmatpush1.bf16.msra.mxu0 %v1916
        %3821 = vmatprep.subr.bf16.mxu0 0
        %3822 = vmatpush1.bf16.msra.mxu0 %v1917
        %3823 = vmatprep.subr.bf16.mxu0 0
        %3824 = vmatpush1.bf16.msra.mxu0 %v1918
        %3825 = vmatprep.subr.bf16.mxu0 0
        %3826 = vmatpush1.bf16.msra.mxu0 %v1919
        %3827 = vmatprep.subr.bf16.mxu0 0
        %3828 = vmatpush1.bf16.msra.mxu0 %v1920
        %3829 = vmatprep.subr.bf16.mxu0 0
        %3830 = vmatpush1.bf16.msra.mxu0 %v1921
        %3831 = vmatprep.subr.bf16.mxu0 0
        %3832 = vmatpush1.bf16.msra.mxu0 0
        %3833 = vmatprep.subr.bf16.mxu0 0
        %3834 = vmatpush1.bf16.msra.mxu0 0
        %3835 = vmatprep.subr.bf16.mxu0 0
        %3836 = vmatpush1.bf16.msra.mxu0 0
        %3837 = vmatprep.subr.bf16.mxu0 0
        %3838 = vmatpush1.bf16.msra.mxu0 0
        %3839 = vmatprep.subr.bf16.mxu0 0
        %3840 = vmatpush1.bf16.msra.mxu0 0
        %3841 = vmatprep.subr.bf16.mxu0 0
        %3842 = vmatpush1.bf16.msra.mxu0 0
        %3843 = vmatprep.subr.bf16.mxu0 0
        %3844 = vmatpush1.bf16.msra.mxu0 0
        %3845 = vmatprep.subr.bf16.mxu0 0
        %3846 = vmatpush1.bf16.msra.mxu0 0
        %3847 = vmatprep.mubr.bf16.mxu0 0
        %3848 = vmatmul.mubr.bf16.gmra.mrb[0].mxu0 %v3614
        %v3849 = vpop.f32.mrb[0].mxu0
        %v3850 = vadd.f32 %v1781, %v3849
        %v3851 = vpop.f32.mrb[0].mxu0
        %v3852 = vpop.f32.mrb[0].mxu0
        %v3853 = vpop.f32.mrb[0].mxu0
        %3854 = vdwg.mxu0
        %3855 = vmatprep.subr.bf16.mxu0 0
        %3856 = vmatpush1.bf16.msra.mxu0 %v2002
        %3857 = vmatprep.subr.bf16.mxu0 0
        %3858 = vmatpush1.bf16.msra.mxu0 %v2003
        %3859 = vmatprep.subr.bf16.mxu0 0
        %3860 = vmatpush1.bf16.msra.mxu0 %v2004
        %3861 = vmatprep.subr.bf16.mxu0 0
        %3862 = vmatpush1.bf16.msra.mxu0 %v2005
        %3863 = vmatprep.subr.bf16.mxu0 0
        %3864 = vmatpush1.bf16.msra.mxu0 %v2006
        %3865 = vmatprep.subr.bf16.mxu0 0
        %3866 = vmatpush1.bf16.msra.mxu0 %v2007
        %3867 = vmatprep.subr.bf16.mxu0 0
        %3868 = vmatpush1.bf16.msra.mxu0 %v2008
        %3869 = vmatprep.subr.bf16.mxu0 0
        %3870 = vmatpush1.bf16.msra.mxu0 %v2009
        %3871 = vmatprep.subr.bf16.mxu0 0
        %3872 = vmatpush1.bf16.msra.mxu0 0
        %3873 = vmatprep.subr.bf16.mxu0 0
        %3874 = vmatpush1.bf16.msra.mxu0 0
        %3875 = vmatprep.subr.bf16.mxu0 0
        %3876 = vmatpush1.bf16.msra.mxu0 0
        %3877 = vmatprep.subr.bf16.mxu0 0
        %3878 = vmatpush1.bf16.msra.mxu0 0
        %3879 = vmatprep.subr.bf16.mxu0 0
        %3880 = vmatpush1.bf16.msra.mxu0 0
        %3881 = vmatprep.subr.bf16.mxu0 0
        %3882 = vmatpush1.bf16.msra.mxu0 0
        %3883 = vmatprep.subr.bf16.mxu0 0
        %3884 = vmatpush1.bf16.msra.mxu0 0
        %3885 = vmatprep.subr.bf16.mxu0 0
        %3886 = vmatpush1.bf16.msra.mxu0 0
        %3887 = vmatprep.mubr.bf16.mxu0 0
        %3888 = vmatmul.mubr.bf16.gmra.mrb[0].mxu0 %v3614
        %v3889 = vpop.f32.mrb[0].mxu0
        %v3890 = vadd.f32 %v1785, %v3889
        %v3891 = vpop.f32.mrb[0].mxu0
        %v3892 = vpop.f32.mrb[0].mxu0
        %v3893 = vpop.f32.mrb[0].mxu0
        %3894 = vdwg.mxu0
        %3895 = vmatprep.subr.bf16.mxu0 0
        %3896 = vmatpush1.bf16.msra.mxu0 %v2090
        %3897 = vmatprep.subr.bf16.mxu0 0
        %3898 = vmatpush1.bf16.msra.mxu0 %v2091
        %3899 = vmatprep.subr.bf16.mxu0 0
        %3900 = vmatpush1.bf16.msra.mxu0 %v2092
        %3901 = vmatprep.subr.bf16.mxu0 0
        %3902 = vmatpush1.bf16.msra.mxu0 %v2093
        %3903 = vmatprep.subr.bf16.mxu0 0
        %3904 = vmatpush1.bf16.msra.mxu0 %v2094
        %3905 = vmatprep.subr.bf16.mxu0 0
        %3906 = vmatpush1.bf16.msra.mxu0 %v2095
        %3907 = vmatprep.subr.bf16.mxu0 0
        %3908 = vmatpush1.bf16.msra.mxu0 %v2096
        %3909 = vmatprep.subr.bf16.mxu0 0
        %3910 = vmatpush1.bf16.msra.mxu0 %v2097
        %3911 = vmatprep.subr.bf16.mxu0 0
        %3912 = vmatpush1.bf16.msra.mxu0 0
        %3913 = vmatprep.subr.bf16.mxu0 0
        %3914 = vmatpush1.bf16.msra.mxu0 0
        %3915 = vmatprep.subr.bf16.mxu0 0
        %3916 = vmatpush1.bf16.msra.mxu0 0
        %3917 = vmatprep.subr.bf16.mxu0 0
        %3918 = vmatpush1.bf16.msra.mxu0 0
        %3919 = vmatprep.subr.bf16.mxu0 0
        %3920 = vmatpush1.bf16.msra.mxu0 0
        %3921 = vmatprep.subr.bf16.mxu0 0
        %3922 = vmatpush1.bf16.msra.mxu0 0
        %3923 = vmatprep.subr.bf16.mxu0 0
        %3924 = vmatpush1.bf16.msra.mxu0 0
        %3925 = vmatprep.subr.bf16.mxu0 0
        %3926 = vmatpush1.bf16.msra.mxu0 0
        %3927 = vmatprep.mubr.bf16.mxu0 0
        %3928 = vmatmul.mubr.bf16.gmra.mrb[0].mxu0 %v3614
        %v3929 = vpop.f32.mrb[0].mxu0
        %v3930 = vadd.f32 %v1789, %v3929
        %v3931 = vpop.f32.mrb[0].mxu0
        %v3932 = vpop.f32.mrb[0].mxu0
        %v3933 = vpop.f32.mrb[0].mxu0
        %3934 = vdwg.mxu0
        %3935 = vmatprep.subr.bf16.mxu0 0
        %3936 = vmatpush1.bf16.msra.mxu0 %v2202
        %3937 = vmatprep.subr.bf16.mxu0 0
        %3938 = vmatpush1.bf16.msra.mxu0 %v2203
        %3939 = vmatprep.subr.bf16.mxu0 0
        %3940 = vmatpush1.bf16.msra.mxu0 %v2204
        %3941 = vmatprep.subr.bf16.mxu0 0
        %3942 = vmatpush1.bf16.msra.mxu0 %v2205
        %3943 = vmatprep.subr.bf16.mxu0 0
        %3944 = vmatpush1.bf16.msra.mxu0 %v2206
        %3945 = vmatprep.subr.bf16.mxu0 0
        %3946 = vmatpush1.bf16.msra.mxu0 %v2207
        %3947 = vmatprep.subr.bf16.mxu0 0
        %3948 = vmatpush1.bf16.msra.mxu0 %v2208
        %3949 = vmatprep.subr.bf16.mxu0 0
        %3950 = vmatpush1.bf16.msra.mxu0 %v2209
        %3951 = vmatprep.subr.bf16.mxu0 0
        %3952 = vmatpush1.bf16.msra.mxu0 0
        %3953 = vmatprep.subr.bf16.mxu0 0
        %3954 = vmatpush1.bf16.msra.mxu0 0
        %3955 = vmatprep.subr.bf16.mxu0 0
        %3956 = vmatpush1.bf16.msra.mxu0 0
        %3957 = vmatprep.subr.bf16.mxu0 0
        %3958 = vmatpush1.bf16.msra.mxu0 0
        %3959 = vmatprep.subr.bf16.mxu0 0
        %3960 = vmatpush1.bf16.msra.mxu0 0
        %3961 = vmatprep.subr.bf16.mxu0 0
        %3962 = vmatpush1.bf16.msra.mxu0 0
        %3963 = vmatprep.subr.bf16.mxu0 0
        %3964 = vmatpush1.bf16.msra.mxu0 0
        %3965 = vmatprep.subr.bf16.mxu0 0
        %3966 = vmatpush1.bf16.msra.mxu0 0
        %3967 = vmatprep.mubr.bf16.mxu0 0
        %3968 = vmatmul.mubr.bf16.gmra.mrb[0].mxu0 %v3614
        %v3969 = vpop.f32.mrb[0].mxu0
        %v3970 = vadd.f32 %v2153, %v3969
        %v3971 = vpop.f32.mrb[0].mxu0
        %v3972 = vpop.f32.mrb[0].mxu0
        %v3973 = vpop.f32.mrb[0].mxu0
        %3974 = vdwg.mxu0
        %3975 = vmatprep.subr.bf16.mxu0 0
        %3976 = vmatpush1.bf16.msra.mxu0 %v2290
        %3977 = vmatprep.subr.bf16.mxu0 0
        %3978 = vmatpush1.bf16.msra.mxu0 %v2291
        %3979 = vmatprep.subr.bf16.mxu0 0
        %3980 = vmatpush1.bf16.msra.mxu0 %v2292
        %3981 = vmatprep.subr.bf16.mxu0 0
        %3982 = vmatpush1.bf16.msra.mxu0 %v2293
        %3983 = vmatprep.subr.bf16.mxu0 0
        %3984 = vmatpush1.bf16.msra.mxu0 %v2294
        %3985 = vmatprep.subr.bf16.mxu0 0
        %3986 = vmatpush1.bf16.msra.mxu0 %v2295
        %3987 = vmatprep.subr.bf16.mxu0 0
        %3988 = vmatpush1.bf16.msra.mxu0 %v2296
        %3989 = vmatprep.subr.bf16.mxu0 0
        %3990 = vmatpush1.bf16.msra.mxu0 %v2297
        %3991 = vmatprep.subr.bf16.mxu0 0
        %3992 = vmatpush1.bf16.msra.mxu0 0
        %3993 = vmatprep.subr.bf16.mxu0 0
        %3994 = vmatpush1.bf16.msra.mxu0 0
        %3995 = vmatprep.subr.bf16.mxu0 0
        %3996 = vmatpush1.bf16.msra.mxu0 0
        %3997 = vmatprep.subr.bf16.mxu0 0
        %3998 = vmatpush1.bf16.msra.mxu0 0
        %3999 = vmatprep.subr.bf16.mxu0 0
        %4000 = vmatpush1.bf16.msra.mxu0 0
        %4001 = vmatprep.subr.bf16.mxu0 0
        %4002 = vmatpush1.bf16.msra.mxu0 0
        %4003 = vmatprep.subr.bf16.mxu0 0
        %4004 = vmatpush1.bf16.msra.mxu0 0
        %4005 = vmatprep.subr.bf16.mxu0 0
        %4006 = vmatpush1.bf16.msra.mxu0 0
        %4007 = vmatprep.mubr.bf16.mxu0 0
        %4008 = vmatmul.mubr.bf16.gmra.mrb[0].mxu0 %v3614
        %v4009 = vpop.f32.mrb[0].mxu0
        %v4010 = vadd.f32 %v2157, %v4009
        %v4011 = vpop.f32.mrb[0].mxu0
        %v4012 = vpop.f32.mrb[0].mxu0
        %v4013 = vpop.f32.mrb[0].mxu0
        %4014 = vdwg.mxu0
        %4015 = vmatprep.subr.bf16.mxu0 0
        %4016 = vmatpush1.bf16.msra.mxu0 %v2378
        %4017 = vmatprep.subr.bf16.mxu0 0
        %4018 = vmatpush1.bf16.msra.mxu0 %v2379
        %4019 = vmatprep.subr.bf16.mxu0 0
        %4020 = vmatpush1.bf16.msra.mxu0 %v2380
        %4021 = vmatprep.subr.bf16.mxu0 0
        %4022 = vmatpush1.bf16.msra.mxu0 %v2381
        %4023 = vmatprep.subr.bf16.mxu0 0
        %4024 = vmatpush1.bf16.msra.mxu0 %v2382
        %4025 = vmatprep.subr.bf16.mxu0 0
        %4026 = vmatpush1.bf16.msra.mxu0 %v2383
        %4027 = vmatprep.subr.bf16.mxu0 0
        %4028 = vmatpush1.bf16.msra.mxu0 %v2384
        %4029 = vmatprep.subr.bf16.mxu0 0
        %4030 = vmatpush1.bf16.msra.mxu0 %v2385
        %4031 = vmatprep.subr.bf16.mxu0 0
        %4032 = vmatpush1.bf16.msra.mxu0 0
        %4033 = vmatprep.subr.bf16.mxu0 0
        %4034 = vmatpush1.bf16.msra.mxu0 0
        %4035 = vmatprep.subr.bf16.mxu0 0
        %4036 = vmatpush1.bf16.msra.mxu0 0
        %4037 = vmatprep.subr.bf16.mxu0 0
        %4038 = vmatpush1.bf16.msra.mxu0 0
        %4039 = vmatprep.subr.bf16.mxu0 0
        %4040 = vmatpush1.bf16.msra.mxu0 0
        %4041 = vmatprep.subr.bf16.mxu0 0
        %4042 = vmatpush1.bf16.msra.mxu0 0
        %4043 = vmatprep.subr.bf16.mxu0 0
        %4044 = vmatpush1.bf16.msra.mxu0 0
        %4045 = vmatprep.subr.bf16.mxu0 0
        %4046 = vmatpush1.bf16.msra.mxu0 0
        %4047 = vmatprep.mubr.bf16.mxu0 0
        %4048 = vmatmul.mubr.bf16.gmra.mrb[0].mxu0 %v3614
        %v4049 = vpop.f32.mrb[0].mxu0
        %v4050 = vadd.f32 %v2161, %v4049
        %v4051 = vpop.f32.mrb[0].mxu0
        %v4052 = vpop.f32.mrb[0].mxu0
        %v4053 = vpop.f32.mrb[0].mxu0
        %4054 = vdwg.mxu0
        %4055 = vmatprep.subr.bf16.mxu0 0
        %4056 = vmatpush1.bf16.msra.mxu0 %v2466
        %4057 = vmatprep.subr.bf16.mxu0 0
        %4058 = vmatpush1.bf16.msra.mxu0 %v2467
        %4059 = vmatprep.subr.bf16.mxu0 0
        %4060 = vmatpush1.bf16.msra.mxu0 %v2468
        %4061 = vmatprep.subr.bf16.mxu0 0
        %4062 = vmatpush1.bf16.msra.mxu0 %v2469
        %4063 = vmatprep.subr.bf16.mxu0 0
        %4064 = vmatpush1.bf16.msra.mxu0 %v2470
        %4065 = vmatprep.subr.bf16.mxu0 0
        %4066 = vmatpush1.bf16.msra.mxu0 %v2471
        %4067 = vmatprep.subr.bf16.mxu0 0
        %4068 = vmatpush1.bf16.msra.mxu0 %v2472
        %4069 = vmatprep.subr.bf16.mxu0 0
        %4070 = vmatpush1.bf16.msra.mxu0 %v2473
        %4071 = vmatprep.subr.bf16.mxu0 0
        %4072 = vmatpush1.bf16.msra.mxu0 0
        %4073 = vmatprep.subr.bf16.mxu0 0
        %4074 = vmatpush1.bf16.msra.mxu0 0
        %4075 = vmatprep.subr.bf16.mxu0 0
        %4076 = vmatpush1.bf16.msra.mxu0 0
        %4077 = vmatprep.subr.bf16.mxu0 0
        %4078 = vmatpush1.bf16.msra.mxu0 0
        %4079 = vmatprep.subr.bf16.mxu0 0
        %4080 = vmatpush1.bf16.msra.mxu0 0
        %4081 = vmatprep.subr.bf16.mxu0 0
        %4082 = vmatpush1.bf16.msra.mxu0 0
        %4083 = vmatprep.subr.bf16.mxu0 0
        %4084 = vmatpush1.bf16.msra.mxu0 0
        %4085 = vmatprep.subr.bf16.mxu0 0
        %4086 = vmatpush1.bf16.msra.mxu0 0
        %4087 = vmatprep.mubr.bf16.mxu0 0
        %4088 = vmatmul.mubr.bf16.gmra.mrb[0].mxu0 %v3614
        %v4089 = vpop.f32.mrb[0].mxu0
        %v4090 = vadd.f32 %v2165, %v4089
        %v4091 = vpop.f32.mrb[0].mxu0
        %v4092 = vpop.f32.mrb[0].mxu0
        %v4093 = vpop.f32.mrb[0].mxu0
        %4094 = vdwg.mxu0
        %v4095 = vmul.f32 %v3650, 0.35355338
        %v4096 = vmul.f32 %v3690, 0.35355338
        %v4097 = vmul.f32 %v3730, 0.35355338
        %v4098 = vmul.f32 %v3770, 0.35355338
        %v4100 = vsel %vm2526, %v4095, 0
        %v4103 = vsel %vm2526, %v3810, 0
        %4105 = vmatprep.subr.mxu0 0.0
        %4106 = vmatpush1.xpose.msra.mxu0 %v4103
        %4107 = vmatprep.subr.mxu0 0.0
        %4108 = vmatpush1.xpose.msra.mxu0 0.0
        %4109 = vmatprep.subr.mxu0 0.0
        %4110 = vmatpush1.xpose.msra.mxu0 0.0
        %4111 = vmatprep.subr.mxu0 0.0
        %4112 = vmatpush1.xpose.msra.mxu0 0.0
        %4113 = vmatprep.subr.mxu0 0.0
        %4114 = vmatpush1.xpose.msra.mxu0 0.0
        %4115 = vmatprep.subr.mxu0 0.0
        %4116 = vmatpush1.xpose.msra.mxu0 0.0
        %4117 = vmatprep.subr.mxu0 0.0
        %4118 = vmatpush1.xpose.msra.mxu0 0.0
        %4119 = vmatprep.subr.mxu0 0.0
        %4120 = vmatpush1.xpose.msra.mxu0 0.0
        %4121 = vmatprep.subr.mxu0 0.0
        %4122 = vmatpush1.xpose.msra.mxu0 0.0
        %4123 = vmatprep.subr.mxu0 0.0
        %4124 = vmatpush1.xpose.msra.mxu0 0.0
        %4125 = vmatprep.subr.mxu0 0.0
        %4126 = vmatpush1.xpose.msra.mxu0 0.0
        %4127 = vmatprep.subr.mxu0 0.0
        %4128 = vmatpush1.xpose.msra.mxu0 0.0
        %4129 = vmatprep.subr.mxu0 0.0
        %4130 = vmatpush1.xpose.msra.mxu0 0.0
        %4131 = vmatprep.subr.mxu0 0.0
        %4132 = vmatpush1.xpose.msra.mxu0 0.0
        %4133 = vmatprep.subr.mxu0 0.0
        %4134 = vmatpush1.xpose.msra.mxu0 0.0
        %4135 = vmatprep.subr.mxu0 0.0
        %4136 = vmatpush1.xpose.msra.mxu0 0.0
        %4137 = vmatprep.subr.mxu0 0.0
        %4138 = vmatpush1.xpose.msra.mxu0 0.0
        %4139 = vmatprep.subr.mxu0 0.0
        %4140 = vmatpush1.xpose.msra.mxu0 0.0
        %4141 = vmatprep.subr.mxu0 0.0
        %4142 = vmatpush1.xpose.msra.mxu0 0.0
        %4143 = vmatprep.subr.mxu0 0.0
        %4144 = vmatpush1.xpose.msra.mxu0 0.0
        %4145 = vmatprep.subr.mxu0 0.0
        %4146 = vmatpush1.xpose.msra.mxu0 0.0
        %4147 = vmatprep.subr.mxu0 0.0
        %4148 = vmatpush1.xpose.msra.mxu0 0.0
        %4149 = vmatprep.subr.mxu0 0.0
        %4150 = vmatpush1.xpose.msra.mxu0 0.0
        %4151 = vmatprep.subr.mxu0 0.0
        %4152 = vmatpush1.xpose.msra.mxu0 0.0
        %4153 = vmatprep.subr.mxu0 0.0
        %4154 = vmatpush1.xpose.msra.mxu0 0.0
        %4155 = vmatprep.subr.mxu0 0.0
        %4156 = vmatpush1.xpose.msra.mxu0 0.0
        %4157 = vmatprep.subr.mxu0 0.0
        %4158 = vmatpush1.xpose.msra.mxu0 0.0
        %4159 = vmatprep.subr.mxu0 0.0
        %4160 = vmatpush1.xpose.msra.mxu0 0.0
        %4161 = vmatprep.subr.mxu0 0.0
        %4162 = vmatpush1.xpose.msra.mxu0 0.0
        %4163 = vmatprep.subr.mxu0 0.0
        %4164 = vmatpush1.xpose.msra.mxu0 0.0
        %4165 = vmatprep.subr.mxu0 0.0
        %4166 = vmatpush1.xpose.msra.mxu0 0.0
        %4167 = vmatprep.subr.mxu0 0.0
        %4168 = vmatpush1.xpose.msra.mxu0 0.0
        %4169 = vmatprep.mubr.f32.mxu0 0.0
        %4170 = vmatmul.mubr.f32.gmra.mrb[0].mxu0 %v4100
        %v4171 = vpop.f32.mrb[0].mxu0
        %v4172 = vadd.f32 0.0, %v4171
        %v4173 = vpop.f32.mrb[0].mxu0
        %4174 = vdwg.mxu0
        %v4176 = vsel %vm2526, %v4096, 0
        %v4179 = vsel %vm2526, %v3850, 0
        %4181 = vmatprep.subr.mxu0 0.0
        %4182 = vmatpush1.xpose.msra.mxu0 %v4179
        %4183 = vmatprep.subr.mxu0 0.0
        %4184 = vmatpush1.xpose.msra.mxu0 0.0
        %4185 = vmatprep.subr.mxu0 0.0
        %4186 = vmatpush1.xpose.msra.mxu0 0.0
        %4187 = vmatprep.subr.mxu0 0.0
        %4188 = vmatpush1.xpose.msra.mxu0 0.0
        %4189 = vmatprep.subr.mxu0 0.0
        %4190 = vmatpush1.xpose.msra.mxu0 0.0
        %4191 = vmatprep.subr.mxu0 0.0
        %4192 = vmatpush1.xpose.msra.mxu0 0.0
        %4193 = vmatprep.subr.mxu0 0.0
        %4194 = vmatpush1.xpose.msra.mxu0 0.0
        %4195 = vmatprep.subr.mxu0 0.0
        %4196 = vmatpush1.xpose.msra.mxu0 0.0
        %4197 = vmatprep.subr.mxu0 0.0
        %4198 = vmatpush1.xpose.msra.mxu0 0.0
        %4199 = vmatprep.subr.mxu0 0.0
        %4200 = vmatpush1.xpose.msra.mxu0 0.0
        %4201 = vmatprep.subr.mxu0 0.0
        %4202 = vmatpush1.xpose.msra.mxu0 0.0
        %4203 = vmatprep.subr.mxu0 0.0
        %4204 = vmatpush1.xpose.msra.mxu0 0.0
        %4205 = vmatprep.subr.mxu0 0.0
        %4206 = vmatpush1.xpose.msra.mxu0 0.0
        %4207 = vmatprep.subr.mxu0 0.0
        %4208 = vmatpush1.xpose.msra.mxu0 0.0
        %4209 = vmatprep.subr.mxu0 0.0
        %4210 = vmatpush1.xpose.msra.mxu0 0.0
        %4211 = vmatprep.subr.mxu0 0.0
        %4212 = vmatpush1.xpose.msra.mxu0 0.0
        %4213 = vmatprep.subr.mxu0 0.0
        %4214 = vmatpush1.xpose.msra.mxu0 0.0
        %4215 = vmatprep.subr.mxu0 0.0
        %4216 = vmatpush1.xpose.msra.mxu0 0.0
        %4217 = vmatprep.subr.mxu0 0.0
        %4218 = vmatpush1.xpose.msra.mxu0 0.0
        %4219 = vmatprep.subr.mxu0 0.0
        %4220 = vmatpush1.xpose.msra.mxu0 0.0
        %4221 = vmatprep.subr.mxu0 0.0
        %4222 = vmatpush1.xpose.msra.mxu0 0.0
        %4223 = vmatprep.subr.mxu0 0.0
        %4224 = vmatpush1.xpose.msra.mxu0 0.0
        %4225 = vmatprep.subr.mxu0 0.0
        %4226 = vmatpush1.xpose.msra.mxu0 0.0
        %4227 = vmatprep.subr.mxu0 0.0
        %4228 = vmatpush1.xpose.msra.mxu0 0.0
        %4229 = vmatprep.subr.mxu0 0.0
        %4230 = vmatpush1.xpose.msra.mxu0 0.0
        %4231 = vmatprep.subr.mxu0 0.0
        %4232 = vmatpush1.xpose.msra.mxu0 0.0
        %4233 = vmatprep.subr.mxu0 0.0
        %4234 = vmatpush1.xpose.msra.mxu0 0.0
        %4235 = vmatprep.subr.mxu0 0.0
        %4236 = vmatpush1.xpose.msra.mxu0 0.0
        %4237 = vmatprep.subr.mxu0 0.0
        %4238 = vmatpush1.xpose.msra.mxu0 0.0
        %4239 = vmatprep.subr.mxu0 0.0
        %4240 = vmatpush1.xpose.msra.mxu0 0.0
        %4241 = vmatprep.subr.mxu0 0.0
        %4242 = vmatpush1.xpose.msra.mxu0 0.0
        %4243 = vmatprep.subr.mxu0 0.0
        %4244 = vmatpush1.xpose.msra.mxu0 0.0
        %4245 = vmatprep.mubr.f32.mxu0 0.0
        %4246 = vmatmul.mubr.f32.gmra.mrb[0].mxu0 %v4176
        %v4247 = vpop.f32.mrb[0].mxu0
        %v4248 = vadd.f32 0.0, %v4247
        %v4249 = vpop.f32.mrb[0].mxu0
        %4250 = vdwg.mxu0
        %v4252 = vsel %vm2526, %v4097, 0
        %v4255 = vsel %vm2526, %v3890, 0
        %4257 = vmatprep.subr.mxu0 0.0
        %4258 = vmatpush1.xpose.msra.mxu0 %v4255
        %4259 = vmatprep.subr.mxu0 0.0
        %4260 = vmatpush1.xpose.msra.mxu0 0.0
        %4261 = vmatprep.subr.mxu0 0.0
        %4262 = vmatpush1.xpose.msra.mxu0 0.0
        %4263 = vmatprep.subr.mxu0 0.0
        %4264 = vmatpush1.xpose.msra.mxu0 0.0
        %4265 = vmatprep.subr.mxu0 0.0
        %4266 = vmatpush1.xpose.msra.mxu0 0.0
        %4267 = vmatprep.subr.mxu0 0.0
        %4268 = vmatpush1.xpose.msra.mxu0 0.0
        %4269 = vmatprep.subr.mxu0 0.0
        %4270 = vmatpush1.xpose.msra.mxu0 0.0
        %4271 = vmatprep.subr.mxu0 0.0
        %4272 = vmatpush1.xpose.msra.mxu0 0.0
        %4273 = vmatprep.subr.mxu0 0.0
        %4274 = vmatpush1.xpose.msra.mxu0 0.0
        %4275 = vmatprep.subr.mxu0 0.0
        %4276 = vmatpush1.xpose.msra.mxu0 0.0
        %4277 = vmatprep.subr.mxu0 0.0
        %4278 = vmatpush1.xpose.msra.mxu0 0.0
        %4279 = vmatprep.subr.mxu0 0.0
        %4280 = vmatpush1.xpose.msra.mxu0 0.0
        %4281 = vmatprep.subr.mxu0 0.0
        %4282 = vmatpush1.xpose.msra.mxu0 0.0
        %4283 = vmatprep.subr.mxu0 0.0
        %4284 = vmatpush1.xpose.msra.mxu0 0.0
        %4285 = vmatprep.subr.mxu0 0.0
        %4286 = vmatpush1.xpose.msra.mxu0 0.0
        %4287 = vmatprep.subr.mxu0 0.0
        %4288 = vmatpush1.xpose.msra.mxu0 0.0
        %4289 = vmatprep.subr.mxu0 0.0
        %4290 = vmatpush1.xpose.msra.mxu0 0.0
        %4291 = vmatprep.subr.mxu0 0.0
        %4292 = vmatpush1.xpose.msra.mxu0 0.0
        %4293 = vmatprep.subr.mxu0 0.0
        %4294 = vmatpush1.xpose.msra.mxu0 0.0
        %4295 = vmatprep.subr.mxu0 0.0
        %4296 = vmatpush1.xpose.msra.mxu0 0.0
        %4297 = vmatprep.subr.mxu0 0.0
        %4298 = vmatpush1.xpose.msra.mxu0 0.0
        %4299 = vmatprep.subr.mxu0 0.0
        %4300 = vmatpush1.xpose.msra.mxu0 0.0
        %4301 = vmatprep.subr.mxu0 0.0
        %4302 = vmatpush1.xpose.msra.mxu0 0.0
        %4303 = vmatprep.subr.mxu0 0.0
        %4304 = vmatpush1.xpose.msra.mxu0 0.0
        %4305 = vmatprep.subr.mxu0 0.0
        %4306 = vmatpush1.xpose.msra.mxu0 0.0
        %4307 = vmatprep.subr.mxu0 0.0
        %4308 = vmatpush1.xpose.msra.mxu0 0.0
        %4309 = vmatprep.subr.mxu0 0.0
        %4310 = vmatpush1.xpose.msra.mxu0 0.0
        %4311 = vmatprep.subr.mxu0 0.0
        %4312 = vmatpush1.xpose.msra.mxu0 0.0
        %4313 = vmatprep.subr.mxu0 0.0
        %4314 = vmatpush1.xpose.msra.mxu0 0.0
        %4315 = vmatprep.subr.mxu0 0.0
        %4316 = vmatpush1.xpose.msra.mxu0 0.0
        %4317 = vmatprep.subr.mxu0 0.0
        %4318 = vmatpush1.xpose.msra.mxu0 0.0
        %4319 = vmatprep.subr.mxu0 0.0
        %4320 = vmatpush1.xpose.msra.mxu0 0.0
        %4321 = vmatprep.mubr.f32.mxu0 0.0
        %4322 = vmatmul.mubr.f32.gmra.mrb[0].mxu0 %v4252
        %v4323 = vpop.f32.mrb[0].mxu0
        %v4324 = vadd.f32 0.0, %v4323
        %v4325 = vpop.f32.mrb[0].mxu0
        %4326 = vdwg.mxu0
        %v4328 = vsel %vm2526, %v4098, 0
        %v4331 = vsel %vm2526, %v3930, 0
        %4333 = vmatprep.subr.mxu0 0.0
        %4334 = vmatpush1.xpose.msra.mxu0 %v4331
        %4335 = vmatprep.subr.mxu0 0.0
        %4336 = vmatpush1.xpose.msra.mxu0 0.0
        %4337 = vmatprep.subr.mxu0 0.0
        %4338 = vmatpush1.xpose.msra.mxu0 0.0
        %4339 = vmatprep.subr.mxu0 0.0
        %4340 = vmatpush1.xpose.msra.mxu0 0.0
        %4341 = vmatprep.subr.mxu0 0.0
        %4342 = vmatpush1.xpose.msra.mxu0 0.0
        %4343 = vmatprep.subr.mxu0 0.0
        %4344 = vmatpush1.xpose.msra.mxu0 0.0
        %4345 = vmatprep.subr.mxu0 0.0
        %4346 = vmatpush1.xpose.msra.mxu0 0.0
        %4347 = vmatprep.subr.mxu0 0.0
        %4348 = vmatpush1.xpose.msra.mxu0 0.0
        %4349 = vmatprep.subr.mxu0 0.0
        %4350 = vmatpush1.xpose.msra.mxu0 0.0
        %4351 = vmatprep.subr.mxu0 0.0
        %4352 = vmatpush1.xpose.msra.mxu0 0.0
        %4353 = vmatprep.subr.mxu0 0.0
        %4354 = vmatpush1.xpose.msra.mxu0 0.0
        %4355 = vmatprep.subr.mxu0 0.0
        %4356 = vmatpush1.xpose.msra.mxu0 0.0
        %4357 = vmatprep.subr.mxu0 0.0
        %4358 = vmatpush1.xpose.msra.mxu0 0.0
        %4359 = vmatprep.subr.mxu0 0.0
        %4360 = vmatpush1.xpose.msra.mxu0 0.0
        %4361 = vmatprep.subr.mxu0 0.0
        %4362 = vmatpush1.xpose.msra.mxu0 0.0
        %4363 = vmatprep.subr.mxu0 0.0
        %4364 = vmatpush1.xpose.msra.mxu0 0.0
        %4365 = vmatprep.subr.mxu0 0.0
        %4366 = vmatpush1.xpose.msra.mxu0 0.0
        %4367 = vmatprep.subr.mxu0 0.0
        %4368 = vmatpush1.xpose.msra.mxu0 0.0
        %4369 = vmatprep.subr.mxu0 0.0
        %4370 = vmatpush1.xpose.msra.mxu0 0.0
        %4371 = vmatprep.subr.mxu0 0.0
        %4372 = vmatpush1.xpose.msra.mxu0 0.0
        %4373 = vmatprep.subr.mxu0 0.0
        %4374 = vmatpush1.xpose.msra.mxu0 0.0
        %4375 = vmatprep.subr.mxu0 0.0
        %4376 = vmatpush1.xpose.msra.mxu0 0.0
        %4377 = vmatprep.subr.mxu0 0.0
        %4378 = vmatpush1.xpose.msra.mxu0 0.0
        %4379 = vmatprep.subr.mxu0 0.0
        %4380 = vmatpush1.xpose.msra.mxu0 0.0
        %4381 = vmatprep.subr.mxu0 0.0
        %4382 = vmatpush1.xpose.msra.mxu0 0.0
        %4383 = vmatprep.subr.mxu0 0.0
        %4384 = vmatpush1.xpose.msra.mxu0 0.0
        %4385 = vmatprep.subr.mxu0 0.0
        %4386 = vmatpush1.xpose.msra.mxu0 0.0
        %4387 = vmatprep.subr.mxu0 0.0
        %4388 = vmatpush1.xpose.msra.mxu0 0.0
        %4389 = vmatprep.subr.mxu0 0.0
        %4390 = vmatpush1.xpose.msra.mxu0 0.0
        %4391 = vmatprep.subr.mxu0 0.0
        %4392 = vmatpush1.xpose.msra.mxu0 0.0
        %4393 = vmatprep.subr.mxu0 0.0
        %4394 = vmatpush1.xpose.msra.mxu0 0.0
        %4395 = vmatprep.subr.mxu0 0.0
        %4396 = vmatpush1.xpose.msra.mxu0 0.0
        %4397 = vmatprep.mubr.f32.mxu0 0.0
        %4398 = vmatmul.mubr.f32.gmra.mrb[0].mxu0 %v4328
        %v4399 = vpop.f32.mrb[0].mxu0
        %v4400 = vadd.f32 0.0, %v4399
        %v4401 = vpop.f32.mrb[0].mxu0
        %4402 = vdwg.mxu0
        %v4403 = vsel %vm2526, %v4172, -inf
        %4404 = vmax.xlane.f32.xlu0 %v4403
        %v4405 = vpop.xlane.xlu0 %4404
        %v4406 = vsel %vm2526, %v4248, -inf
        %4407 = vmax.xlane.f32.xlu0 %v4406
        %v4408 = vpop.xlane.xlu0 %4407
        %v4409 = vsel %vm2526, %v4324, -inf
        %4410 = vmax.xlane.f32.xlu0 %v4409
        %v4411 = vpop.xlane.xlu0 %4410
        %v4412 = vsel %vm2526, %v4400, -inf
        %4413 = vmax.xlane.f32.xlu0 %v4412
        %v4414 = vpop.xlane.xlu0 %4413
        %v4415 = vsub.f32 %v4172, %v4405
        %v4416 = vsub.f32 %v4248, %v4408
        %v4417 = vsub.f32 %v4324, %v4411
        %v4418 = vsub.f32 %v4400, %v4414
        %v4419 = vmul.f32 %v4415, 1.442695
        %v4420 = vpow.pop %v4419
        %v4421 = vmul.f32 %v4416, 1.442695
        %v4422 = vpow.pop %v4421
        %v4423 = vmul.f32 %v4417, 1.442695
        %v4424 = vpow.pop %v4423
        %v4425 = vmul.f32 %v4418, 1.442695
        %v4426 = vpow.pop %v4425
        %v4427 = vsel %vm2526, %v4420, 0.0
        %4428 = vadd.xlane.f32.xlu0 %v4427
        %v4429 = vpop.xlane.xlu0 %4428
        %v4430 = vsel %vm2526, %v4422, 0.0
        %4431 = vadd.xlane.f32.xlu0 %v4430
        %v4432 = vpop.xlane.xlu0 %4431
        %v4433 = vsel %vm2526, %v4424, 0.0
        %4434 = vadd.xlane.f32.xlu0 %v4433
        %v4435 = vpop.xlane.xlu0 %4434
        %v4436 = vsel %vm2526, %v4426, 0.0
        %4437 = vadd.xlane.f32.xlu0 %v4436
        %v4438 = vpop.xlane.xlu0 %4437
        %v4439 = vrcp.pop %v4429
        %v4440 = vrcp.pop %v4432
        %v4441 = vrcp.pop %v4435
        %v4442 = vrcp.pop %v4438
        %v4443 = vmul.f32 %v4420, %v4439
        %v4444 = vmul.f32 %v4422, %v4440
        %v4445 = vmul.f32 %v4424, %v4441
        %v4446 = vmul.f32 %v4426, %v4442
        %v4448 = vsel %vm2526, %v4443, 0
        %4450 = vmatprep.subr.mxu0 0.0
        %4451 = vmatpush1.msra.mxu0 %v3970
        %4452 = vmatprep.subr.mxu0 0.0
        %4453 = vmatpush1.msra.mxu0 0.0
        %4454 = vmatprep.subr.mxu0 0.0
        %4455 = vmatpush1.msra.mxu0 0.0
        %4456 = vmatprep.subr.mxu0 0.0
        %4457 = vmatpush1.msra.mxu0 0.0
        %4458 = vmatprep.subr.mxu0 0.0
        %4459 = vmatpush1.msra.mxu0 0.0
        %4460 = vmatprep.subr.mxu0 0.0
        %4461 = vmatpush1.msra.mxu0 0.0
        %4462 = vmatprep.subr.mxu0 0.0
        %4463 = vmatpush1.msra.mxu0 0.0
        %4464 = vmatprep.subr.mxu0 0.0
        %4465 = vmatpush1.msra.mxu0 0.0
        %4466 = vmatprep.subr.mxu0 0.0
        %4467 = vmatpush1.msra.mxu0 0.0
        %4468 = vmatprep.subr.mxu0 0.0
        %4469 = vmatpush1.msra.mxu0 0.0
        %4470 = vmatprep.subr.mxu0 0.0
        %4471 = vmatpush1.msra.mxu0 0.0
        %4472 = vmatprep.subr.mxu0 0.0
        %4473 = vmatpush1.msra.mxu0 0.0
        %4474 = vmatprep.subr.mxu0 0.0
        %4475 = vmatpush1.msra.mxu0 0.0
        %4476 = vmatprep.subr.mxu0 0.0
        %4477 = vmatpush1.msra.mxu0 0.0
        %4478 = vmatprep.subr.mxu0 0.0
        %4479 = vmatpush1.msra.mxu0 0.0
        %4480 = vmatprep.subr.mxu0 0.0
        %4481 = vmatpush1.msra.mxu0 0.0
        %4482 = vmatprep.subr.mxu0 0.0
        %4483 = vmatpush1.msra.mxu0 0.0
        %4484 = vmatprep.subr.mxu0 0.0
        %4485 = vmatpush1.msra.mxu0 0.0
        %4486 = vmatprep.subr.mxu0 0.0
        %4487 = vmatpush1.msra.mxu0 0.0
        %4488 = vmatprep.subr.mxu0 0.0
        %4489 = vmatpush1.msra.mxu0 0.0
        %4490 = vmatprep.subr.mxu0 0.0
        %4491 = vmatpush1.msra.mxu0 0.0
        %4492 = vmatprep.subr.mxu0 0.0
        %4493 = vmatpush1.msra.mxu0 0.0
        %4494 = vmatprep.subr.mxu0 0.0
        %4495 = vmatpush1.msra.mxu0 0.0
        %4496 = vmatprep.subr.mxu0 0.0
        %4497 = vmatpush1.msra.mxu0 0.0
        %4498 = vmatprep.subr.mxu0 0.0
        %4499 = vmatpush1.msra.mxu0 0.0
        %4500 = vmatprep.subr.mxu0 0.0
        %4501 = vmatpush1.msra.mxu0 0.0
        %4502 = vmatprep.subr.mxu0 0.0
        %4503 = vmatpush1.msra.mxu0 0.0
        %4504 = vmatprep.subr.mxu0 0.0
        %4505 = vmatpush1.msra.mxu0 0.0
        %4506 = vmatprep.subr.mxu0 0.0
        %4507 = vmatpush1.msra.mxu0 0.0
        %4508 = vmatprep.subr.mxu0 0.0
        %4509 = vmatpush1.msra.mxu0 0.0
        %4510 = vmatprep.subr.mxu0 0.0
        %4511 = vmatpush1.msra.mxu0 0.0
        %4512 = vmatprep.subr.mxu0 0.0
        %4513 = vmatpush1.msra.mxu0 0.0
        %4514 = vmatprep.mubr.f32.mxu0 0.0
        %4515 = vmatmul.mubr.f32.gmra.mrb[0].mxu0 %v4448
        %v4516 = vpop.f32.mrb[0].mxu0
        %v4517 = vadd.f32 0.0, %v4516
        %v4518 = vpop.f32.mrb[0].mxu0
        %4519 = vdwg.mxu0
        %v4521 = vsel %vm2526, %v4444, 0
        %4523 = vmatprep.subr.mxu0 0.0
        %4524 = vmatpush1.msra.mxu0 %v4010
        %4525 = vmatprep.subr.mxu0 0.0
        %4526 = vmatpush1.msra.mxu0 0.0
        %4527 = vmatprep.subr.mxu0 0.0
        %4528 = vmatpush1.msra.mxu0 0.0
        %4529 = vmatprep.subr.mxu0 0.0
        %4530 = vmatpush1.msra.mxu0 0.0
        %4531 = vmatprep.subr.mxu0 0.0
        %4532 = vmatpush1.msra.mxu0 0.0
        %4533 = vmatprep.subr.mxu0 0.0
        %4534 = vmatpush1.msra.mxu0 0.0
        %4535 = vmatprep.subr.mxu0 0.0
        %4536 = vmatpush1.msra.mxu0 0.0
        %4537 = vmatprep.subr.mxu0 0.0
        %4538 = vmatpush1.msra.mxu0 0.0
        %4539 = vmatprep.subr.mxu0 0.0
        %4540 = vmatpush1.msra.mxu0 0.0
        %4541 = vmatprep.subr.mxu0 0.0
        %4542 = vmatpush1.msra.mxu0 0.0
        %4543 = vmatprep.subr.mxu0 0.0
        %4544 = vmatpush1.msra.mxu0 0.0
        %4545 = vmatprep.subr.mxu0 0.0
        %4546 = vmatpush1.msra.mxu0 0.0
        %4547 = vmatprep.subr.mxu0 0.0
        %4548 = vmatpush1.msra.mxu0 0.0
        %4549 = vmatprep.subr.mxu0 0.0
        %4550 = vmatpush1.msra.mxu0 0.0
        %4551 = vmatprep.subr.mxu0 0.0
        %4552 = vmatpush1.msra.mxu0 0.0
        %4553 = vmatprep.subr.mxu0 0.0
        %4554 = vmatpush1.msra.mxu0 0.0
        %4555 = vmatprep.subr.mxu0 0.0
        %4556 = vmatpush1.msra.mxu0 0.0
        %4557 = vmatprep.subr.mxu0 0.0
        %4558 = vmatpush1.msra.mxu0 0.0
        %4559 = vmatprep.subr.mxu0 0.0
        %4560 = vmatpush1.msra.mxu0 0.0
        %4561 = vmatprep.subr.mxu0 0.0
        %4562 = vmatpush1.msra.mxu0 0.0
        %4563 = vmatprep.subr.mxu0 0.0
        %4564 = vmatpush1.msra.mxu0 0.0
        %4565 = vmatprep.subr.mxu0 0.0
        %4566 = vmatpush1.msra.mxu0 0.0
        %4567 = vmatprep.subr.mxu0 0.0
        %4568 = vmatpush1.msra.mxu0 0.0
        %4569 = vmatprep.subr.mxu0 0.0
        %4570 = vmatpush1.msra.mxu0 0.0
        %4571 = vmatprep.subr.mxu0 0.0
        %4572 = vmatpush1.msra.mxu0 0.0
        %4573 = vmatprep.subr.mxu0 0.0
        %4574 = vmatpush1.msra.mxu0 0.0
        %4575 = vmatprep.subr.mxu0 0.0
        %4576 = vmatpush1.msra.mxu0 0.0
        %4577 = vmatprep.subr.mxu0 0.0
        %4578 = vmatpush1.msra.mxu0 0.0
        %4579 = vmatprep.subr.mxu0 0.0
        %4580 = vmatpush1.msra.mxu0 0.0
        %4581 = vmatprep.subr.mxu0 0.0
        %4582 = vmatpush1.msra.mxu0 0.0
        %4583 = vmatprep.subr.mxu0 0.0
        %4584 = vmatpush1.msra.mxu0 0.0
        %4585 = vmatprep.subr.mxu0 0.0
        %4586 = vmatpush1.msra.mxu0 0.0
        %4587 = vmatprep.mubr.f32.mxu0 0.0
        %4588 = vmatmul.mubr.f32.gmra.mrb[0].mxu0 %v4521
        %v4589 = vpop.f32.mrb[0].mxu0
        %v4590 = vadd.f32 0.0, %v4589
        %v4591 = vpop.f32.mrb[0].mxu0
        %4592 = vdwg.mxu0
        %v4594 = vsel %vm2526, %v4445, 0
        %4596 = vmatprep.subr.mxu0 0.0
        %4597 = vmatpush1.msra.mxu0 %v4050
        %4598 = vmatprep.subr.mxu0 0.0
        %4599 = vmatpush1.msra.mxu0 0.0
        %4600 = vmatprep.subr.mxu0 0.0
        %4601 = vmatpush1.msra.mxu0 0.0
        %4602 = vmatprep.subr.mxu0 0.0
        %4603 = vmatpush1.msra.mxu0 0.0
        %4604 = vmatprep.subr.mxu0 0.0
        %4605 = vmatpush1.msra.mxu0 0.0
        %4606 = vmatprep.subr.mxu0 0.0
        %4607 = vmatpush1.msra.mxu0 0.0
        %4608 = vmatprep.subr.mxu0 0.0
        %4609 = vmatpush1.msra.mxu0 0.0
        %4610 = vmatprep.subr.mxu0 0.0
        %4611 = vmatpush1.msra.mxu0 0.0
        %4612 = vmatprep.subr.mxu0 0.0
        %4613 = vmatpush1.msra.mxu0 0.0
        %4614 = vmatprep.subr.mxu0 0.0
        %4615 = vmatpush1.msra.mxu0 0.0
        %4616 = vmatprep.subr.mxu0 0.0
        %4617 = vmatpush1.msra.mxu0 0.0
        %4618 = vmatprep.subr.mxu0 0.0
        %4619 = vmatpush1.msra.mxu0 0.0
        %4620 = vmatprep.subr.mxu0 0.0
        %4621 = vmatpush1.msra.mxu0 0.0
        %4622 = vmatprep.subr.mxu0 0.0
        %4623 = vmatpush1.msra.mxu0 0.0
        %4624 = vmatprep.subr.mxu0 0.0
        %4625 = vmatpush1.msra.mxu0 0.0
        %4626 = vmatprep.subr.mxu0 0.0
        %4627 = vmatpush1.msra.mxu0 0.0
        %4628 = vmatprep.subr.mxu0 0.0
        %4629 = vmatpush1.msra.mxu0 0.0
        %4630 = vmatprep.subr.mxu0 0.0
        %4631 = vmatpush1.msra.mxu0 0.0
        %4632 = vmatprep.subr.mxu0 0.0
        %4633 = vmatpush1.msra.mxu0 0.0
        %4634 = vmatprep.subr.mxu0 0.0
        %4635 = vmatpush1.msra.mxu0 0.0
        %4636 = vmatprep.subr.mxu0 0.0
        %4637 = vmatpush1.msra.mxu0 0.0
        %4638 = vmatprep.subr.mxu0 0.0
        %4639 = vmatpush1.msra.mxu0 0.0
        %4640 = vmatprep.subr.mxu0 0.0
        %4641 = vmatpush1.msra.mxu0 0.0
        %4642 = vmatprep.subr.mxu0 0.0
        %4643 = vmatpush1.msra.mxu0 0.0
        %4644 = vmatprep.subr.mxu0 0.0
        %4645 = vmatpush1.msra.mxu0 0.0
        %4646 = vmatprep.subr.mxu0 0.0
        %4647 = vmatpush1.msra.mxu0 0.0
        %4648 = vmatprep.subr.mxu0 0.0
        %4649 = vmatpush1.msra.mxu0 0.0
        %4650 = vmatprep.subr.mxu0 0.0
        %4651 = vmatpush1.msra.mxu0 0.0
        %4652 = vmatprep.subr.mxu0 0.0
        %4653 = vmatpush1.msra.mxu0 0.0
        %4654 = vmatprep.subr.mxu0 0.0
        %4655 = vmatpush1.msra.mxu0 0.0
        %4656 = vmatprep.subr.mxu0 0.0
        %4657 = vmatpush1.msra.mxu0 0.0
        %4658 = vmatprep.subr.mxu0 0.0
        %4659 = vmatpush1.msra.mxu0 0.0
        %4660 = vmatprep.mubr.f32.mxu0 0.0
        %4661 = vmatmul.mubr.f32.gmra.mrb[0].mxu0 %v4594
        %v4662 = vpop.f32.mrb[0].mxu0
        %v4663 = vadd.f32 0.0, %v4662
        %v4664 = vpop.f32.mrb[0].mxu0
        %4665 = vdwg.mxu0
        %v4667 = vsel %vm2526, %v4446, 0
        %4669 = vmatprep.subr.mxu0 0.0
        %4670 = vmatpush1.msra.mxu0 %v4090
        %4671 = vmatprep.subr.mxu0 0.0
        %4672 = vmatpush1.msra.mxu0 0.0
        %4673 = vmatprep.subr.mxu0 0.0
        %4674 = vmatpush1.msra.mxu0 0.0
        %4675 = vmatprep.subr.mxu0 0.0
        %4676 = vmatpush1.msra.mxu0 0.0
        %4677 = vmatprep.subr.mxu0 0.0
        %4678 = vmatpush1.msra.mxu0 0.0
        %4679 = vmatprep.subr.mxu0 0.0
        %4680 = vmatpush1.msra.mxu0 0.0
        %4681 = vmatprep.subr.mxu0 0.0
        %4682 = vmatpush1.msra.mxu0 0.0
        %4683 = vmatprep.subr.mxu0 0.0
        %4684 = vmatpush1.msra.mxu0 0.0
        %4685 = vmatprep.subr.mxu0 0.0
        %4686 = vmatpush1.msra.mxu0 0.0
        %4687 = vmatprep.subr.mxu0 0.0
        %4688 = vmatpush1.msra.mxu0 0.0
        %4689 = vmatprep.subr.mxu0 0.0
        %4690 = vmatpush1.msra.mxu0 0.0
        %4691 = vmatprep.subr.mxu0 0.0
        %4692 = vmatpush1.msra.mxu0 0.0
        %4693 = vmatprep.subr.mxu0 0.0
        %4694 = vmatpush1.msra.mxu0 0.0
        %4695 = vmatprep.subr.mxu0 0.0
        %4696 = vmatpush1.msra.mxu0 0.0
        %4697 = vmatprep.subr.mxu0 0.0
        %4698 = vmatpush1.msra.mxu0 0.0
        %4699 = vmatprep.subr.mxu0 0.0
        %4700 = vmatpush1.msra.mxu0 0.0
        %4701 = vmatprep.subr.mxu0 0.0
        %4702 = vmatpush1.msra.mxu0 0.0
        %4703 = vmatprep.subr.mxu0 0.0
        %4704 = vmatpush1.msra.mxu0 0.0
        %4705 = vmatprep.subr.mxu0 0.0
        %4706 = vmatpush1.msra.mxu0 0.0
        %4707 = vmatprep.subr.mxu0 0.0
        %4708 = vmatpush1.msra.mxu0 0.0
        %4709 = vmatprep.subr.mxu0 0.0
        %4710 = vmatpush1.msra.mxu0 0.0
        %4711 = vmatprep.subr.mxu0 0.0
        %4712 = vmatpush1.msra.mxu0 0.0
        %4713 = vmatprep.subr.mxu0 0.0
        %4714 = vmatpush1.msra.mxu0 0.0
        %4715 = vmatprep.subr.mxu0 0.0
        %4716 = vmatpush1.msra.mxu0 0.0
        %4717 = vmatprep.subr.mxu0 0.0
        %4718 = vmatpush1.msra.mxu0 0.0
        %4719 = vmatprep.subr.mxu0 0.0
        %4720 = vmatpush1.msra.mxu0 0.0
        %4721 = vmatprep.subr.mxu0 0.0
        %4722 = vmatpush1.msra.mxu0 0.0
        %4723 = vmatprep.subr.mxu0 0.0
        %4724 = vmatpush1.msra.mxu0 0.0
        %4725 = vmatprep.subr.mxu0 0.0
        %4726 = vmatpush1.msra.mxu0 0.0
        %4727 = vmatprep.subr.mxu0 0.0
        %4728 = vmatpush1.msra.mxu0 0.0
        %4729 = vmatprep.subr.mxu0 0.0
        %4730 = vmatpush1.msra.mxu0 0.0
        %4731 = vmatprep.subr.mxu0 0.0
        %4732 = vmatpush1.msra.mxu0 0.0
        %4733 = vmatprep.mubr.f32.mxu0 0.0
        %4734 = vmatmul.mubr.f32.gmra.mrb[0].mxu0 %v4667
        %v4735 = vpop.f32.mrb[0].mxu0
        %v4736 = vadd.f32 0.0, %v4735
        %v4737 = vpop.f32.mrb[0].mxu0
        %4738 = vdwg.mxu0
        %v4739 = vpack.c.bf16 %v4517, %v4517
        %v4740 = vpack.c.bf16 %v4590, %v4590
        %v4741 = vpack.c.bf16 %v4663, %v4663
        %v4742 = vpack.c.bf16 %v4736, %v4736
        %v4744 = vsel %vm2526, %v4739, 0
        %4746 = vmatprep.subr.bf16.mxu0 0
        %4747 = vmatpush1.bf16.msra.mxu0 %v3176
        %4748 = vmatprep.subr.bf16.mxu0 0
        %4749 = vmatpush1.bf16.msra.mxu0 0
        %4750 = vmatprep.subr.bf16.mxu0 0
        %4751 = vmatpush1.bf16.msra.mxu0 0
        %4752 = vmatprep.subr.bf16.mxu0 0
        %4753 = vmatpush1.bf16.msra.mxu0 0
        %4754 = vmatprep.subr.bf16.mxu0 0
        %4755 = vmatpush1.bf16.msra.mxu0 0
        %4756 = vmatprep.subr.bf16.mxu0 0
        %4757 = vmatpush1.bf16.msra.mxu0 0
        %4758 = vmatprep.subr.bf16.mxu0 0
        %4759 = vmatpush1.bf16.msra.mxu0 0
        %4760 = vmatprep.subr.bf16.mxu0 0
        %4761 = vmatpush1.bf16.msra.mxu0 0
        %4762 = vmatprep.subr.bf16.mxu0 0
        %4763 = vmatpush1.bf16.msra.mxu0 0
        %4764 = vmatprep.subr.bf16.mxu0 0
        %4765 = vmatpush1.bf16.msra.mxu0 0
        %4766 = vmatprep.subr.bf16.mxu0 0
        %4767 = vmatpush1.bf16.msra.mxu0 0
        %4768 = vmatprep.subr.bf16.mxu0 0
        %4769 = vmatpush1.bf16.msra.mxu0 0
        %4770 = vmatprep.subr.bf16.mxu0 0
        %4771 = vmatpush1.bf16.msra.mxu0 0
        %4772 = vmatprep.subr.bf16.mxu0 0
        %4773 = vmatpush1.bf16.msra.mxu0 0
        %4774 = vmatprep.subr.bf16.mxu0 0
        %4775 = vmatpush1.bf16.msra.mxu0 0
        %4776 = vmatprep.subr.bf16.mxu0 0
        %4777 = vmatpush1.bf16.msra.mxu0 0
        %4778 = vmatprep.mubr.bf16.mxu0 0
        %4779 = vmatmul.mubr.bf16.gmra.mrb[0].mxu0 %v4744
        %v4780 = vpop.f32.mrb[0].mxu0
        %v4781 = vadd.f32 0.0, %v4780
        %v4782 = vpop.f32.mrb[0].mxu0
        %v4783 = vpop.f32.mrb[0].mxu0
        %v4784 = vpop.f32.mrb[0].mxu0
        %4785 = vdwg.mxu0
        %v4787 = vsel %vm2526, %v4740, 0
        %4789 = vmatprep.subr.bf16.mxu0 0
        %4790 = vmatpush1.bf16.msra.mxu0 %v3222
        %4791 = vmatprep.subr.bf16.mxu0 0
        %4792 = vmatpush1.bf16.msra.mxu0 0
        %4793 = vmatprep.subr.bf16.mxu0 0
        %4794 = vmatpush1.bf16.msra.mxu0 0
        %4795 = vmatprep.subr.bf16.mxu0 0
        %4796 = vmatpush1.bf16.msra.mxu0 0
        %4797 = vmatprep.subr.bf16.mxu0 0
        %4798 = vmatpush1.bf16.msra.mxu0 0
        %4799 = vmatprep.subr.bf16.mxu0 0
        %4800 = vmatpush1.bf16.msra.mxu0 0
        %4801 = vmatprep.subr.bf16.mxu0 0
        %4802 = vmatpush1.bf16.msra.mxu0 0
        %4803 = vmatprep.subr.bf16.mxu0 0
        %4804 = vmatpush1.bf16.msra.mxu0 0
        %4805 = vmatprep.subr.bf16.mxu0 0
        %4806 = vmatpush1.bf16.msra.mxu0 0
        %4807 = vmatprep.subr.bf16.mxu0 0
        %4808 = vmatpush1.bf16.msra.mxu0 0
        %4809 = vmatprep.subr.bf16.mxu0 0
        %4810 = vmatpush1.bf16.msra.mxu0 0
        %4811 = vmatprep.subr.bf16.mxu0 0
        %4812 = vmatpush1.bf16.msra.mxu0 0
        %4813 = vmatprep.subr.bf16.mxu0 0
        %4814 = vmatpush1.bf16.msra.mxu0 0
        %4815 = vmatprep.subr.bf16.mxu0 0
        %4816 = vmatpush1.bf16.msra.mxu0 0
        %4817 = vmatprep.subr.bf16.mxu0 0
        %4818 = vmatpush1.bf16.msra.mxu0 0
        %4819 = vmatprep.subr.bf16.mxu0 0
        %4820 = vmatpush1.bf16.msra.mxu0 0
        %4821 = vmatprep.mubr.bf16.mxu0 0
        %4822 = vmatmul.mubr.bf16.gmra.mrb[0].mxu0 %v4787
        %v4823 = vpop.f32.mrb[0].mxu0
        %v4824 = vadd.f32 0.0, %v4823
        %v4825 = vpop.f32.mrb[0].mxu0
        %v4826 = vpop.f32.mrb[0].mxu0
        %v4827 = vpop.f32.mrb[0].mxu0
        %4828 = vdwg.mxu0
        %v4830 = vsel %vm2526, %v4741, 0
        %4832 = vmatprep.subr.bf16.mxu0 0
        %4833 = vmatpush1.bf16.msra.mxu0 %v3268
        %4834 = vmatprep.subr.bf16.mxu0 0
        %4835 = vmatpush1.bf16.msra.mxu0 0
        %4836 = vmatprep.subr.bf16.mxu0 0
        %4837 = vmatpush1.bf16.msra.mxu0 0
        %4838 = vmatprep.subr.bf16.mxu0 0
        %4839 = vmatpush1.bf16.msra.mxu0 0
        %4840 = vmatprep.subr.bf16.mxu0 0
        %4841 = vmatpush1.bf16.msra.mxu0 0
        %4842 = vmatprep.subr.bf16.mxu0 0
        %4843 = vmatpush1.bf16.msra.mxu0 0
        %4844 = vmatprep.subr.bf16.mxu0 0
        %4845 = vmatpush1.bf16.msra.mxu0 0
        %4846 = vmatprep.subr.bf16.mxu0 0
        %4847 = vmatpush1.bf16.msra.mxu0 0
        %4848 = vmatprep.subr.bf16.mxu0 0
        %4849 = vmatpush1.bf16.msra.mxu0 0
        %4850 = vmatprep.subr.bf16.mxu0 0
        %4851 = vmatpush1.bf16.msra.mxu0 0
        %4852 = vmatprep.subr.bf16.mxu0 0
        %4853 = vmatpush1.bf16.msra.mxu0 0
        %4854 = vmatprep.subr.bf16.mxu0 0
        %4855 = vmatpush1.bf16.msra.mxu0 0
        %4856 = vmatprep.subr.bf16.mxu0 0
        %4857 = vmatpush1.bf16.msra.mxu0 0
        %4858 = vmatprep.subr.bf16.mxu0 0
        %4859 = vmatpush1.bf16.msra.mxu0 0
        %4860 = vmatprep.subr.bf16.mxu0 0
        %4861 = vmatpush1.bf16.msra.mxu0 0
        %4862 = vmatprep.subr.bf16.mxu0 0
        %4863 = vmatpush1.bf16.msra.mxu0 0
        %4864 = vmatprep.mubr.bf16.mxu0 0
        %4865 = vmatmul.mubr.bf16.gmra.mrb[0].mxu0 %v4830
        %v4866 = vpop.f32.mrb[0].mxu0
        %v4867 = vadd.f32 0.0, %v4866
        %v4868 = vpop.f32.mrb[0].mxu0
        %v4869 = vpop.f32.mrb[0].mxu0
        %v4870 = vpop.f32.mrb[0].mxu0
        %4871 = vdwg.mxu0
        %v4873 = vsel %vm2526, %v4742, 0
        %4875 = vmatprep.subr.bf16.mxu0 0
        %4876 = vmatpush1.bf16.msra.mxu0 %v3314
        %4877 = vmatprep.subr.bf16.mxu0 0
        %4878 = vmatpush1.bf16.msra.mxu0 0
        %4879 = vmatprep.subr.bf16.mxu0 0
        %4880 = vmatpush1.bf16.msra.mxu0 0
        %4881 = vmatprep.subr.bf16.mxu0 0
        %4882 = vmatpush1.bf16.msra.mxu0 0
        %4883 = vmatprep.subr.bf16.mxu0 0
        %4884 = vmatpush1.bf16.msra.mxu0 0
        %4885 = vmatprep.subr.bf16.mxu0 0
        %4886 = vmatpush1.bf16.msra.mxu0 0
        %4887 = vmatprep.subr.bf16.mxu0 0
        %4888 = vmatpush1.bf16.msra.mxu0 0
        %4889 = vmatprep.subr.bf16.mxu0 0
        %4890 = vmatpush1.bf16.msra.mxu0 0
        %4891 = vmatprep.subr.bf16.mxu0 0
        %4892 = vmatpush1.bf16.msra.mxu0 0
        %4893 = vmatprep.subr.bf16.mxu0 0
        %4894 = vmatpush1.bf16.msra.mxu0 0
        %4895 = vmatprep.subr.bf16.mxu0 0
        %4896 = vmatpush1.bf16.msra.mxu0 0
        %4897 = vmatprep.subr.bf16.mxu0 0
        %4898 = vmatpush1.bf16.msra.mxu0 0
        %4899 = vmatprep.subr.bf16.mxu0 0
        %4900 = vmatpush1.bf16.msra.mxu0 0
        %4901 = vmatprep.subr.bf16.mxu0 0
        %4902 = vmatpush1.bf16.msra.mxu0 0
        %4903 = vmatprep.subr.bf16.mxu0 0
        %4904 = vmatpush1.bf16.msra.mxu0 0
        %4905 = vmatprep.subr.bf16.mxu0 0
        %4906 = vmatpush1.bf16.msra.mxu0 0
        %4907 = vmatprep.mubr.bf16.mxu0 0
        %4908 = vmatmul.mubr.bf16.gmra.mrb[0].mxu0 %v4873
        %v4909 = vpop.f32.mrb[0].mxu0
        %v4910 = vadd.f32 0.0, %v4909
        %v4911 = vpop.f32.mrb[0].mxu0
        %v4912 = vpop.f32.mrb[0].mxu0
        %v4913 = vpop.f32.mrb[0].mxu0
        %4914 = vdwg.mxu0
        %v4915 = vadd.f32 %v4781, %v4824
        %v4916 = vadd.f32 %v4915, %v4867
        %v4917 = vadd.f32 %v4916, %v4910
        %v4918 = vadd.f32 %v4917, %v3363
        %v4919 = vadd.f32 %v4918, %v3613
        %4920 = vadd.xlane.f32.xlu0 %v4919
        %v4921 = vpop.xlane.xlu0 %4920
        %v4922 = vmul.f32 %v4921, 0.03125
        %v4923 = vsub.f32 %v4919, %v4922
        %v4924 = vmul.f32 %v4923, %v1391
        %v4925 = vmul.f32 %v4924, %v4924
        %4926 = vadd.xlane.f32.xlu0 %v4925
        %v4927 = vpop.xlane.xlu0 %4926
        %v4928 = vmul.f32 %v4927, 0.03125
        %v4929 = vadd.f32 %v4928, 1e-06
        %v4930 = vrsqrt.pop %v4929
        %v4931 = vmul.f32 %v4924, %v4930
        %v4932 = vmul.f32 %v4931, %v3383
        %v4933 = vadd.f32 %v4932, %v3390
        %v4934 = vpack.c.bf16 %v4933, %v4933
        %4935 = vmatprep.subr.bf16.mxu0 0
        %4936 = vmatpush1.bf16.msra.mxu0 %v3432
        %4937 = vmatprep.subr.bf16.mxu0 0
        %4938 = vmatpush1.bf16.msra.mxu0 %v3433
        %4939 = vmatprep.subr.bf16.mxu0 0
        %4940 = vmatpush1.bf16.msra.mxu0 %v3434
        %4941 = vmatprep.subr.bf16.mxu0 0
        %4942 = vmatpush1.bf16.msra.mxu0 %v3435
        %4943 = vmatprep.subr.bf16.mxu0 0
        %4944 = vmatpush1.bf16.msra.mxu0 %v3436
        %4945 = vmatprep.subr.bf16.mxu0 0
        %4946 = vmatpush1.bf16.msra.mxu0 %v3437
        %4947 = vmatprep.subr.bf16.mxu0 0
        %4948 = vmatpush1.bf16.msra.mxu0 %v3438
        %4949 = vmatprep.subr.bf16.mxu0 0
        %4950 = vmatpush1.bf16.msra.mxu0 %v3439
        %4951 = vmatprep.subr.bf16.mxu0 0
        %4952 = vmatpush1.bf16.msra.mxu0 0
        %4953 = vmatprep.subr.bf16.mxu0 0
        %4954 = vmatpush1.bf16.msra.mxu0 0
        %4955 = vmatprep.subr.bf16.mxu0 0
        %4956 = vmatpush1.bf16.msra.mxu0 0
        %4957 = vmatprep.subr.bf16.mxu0 0
        %4958 = vmatpush1.bf16.msra.mxu0 0
        %4959 = vmatprep.subr.bf16.mxu0 0
        %4960 = vmatpush1.bf16.msra.mxu0 0
        %4961 = vmatprep.subr.bf16.mxu0 0
        %4962 = vmatpush1.bf16.msra.mxu0 0
        %4963 = vmatprep.subr.bf16.mxu0 0
        %4964 = vmatpush1.bf16.msra.mxu0 0
        %4965 = vmatprep.subr.bf16.mxu0 0
        %4966 = vmatpush1.bf16.msra.mxu0 0
        %4967 = vmatprep.mubr.bf16.mxu0 0
        %4968 = vmatmul.mubr.bf16.gmra.mrb[0].mxu0 %v4934
        %v4969 = vpop.f32.mrb[0].mxu0
        %v4970 = vadd.f32 %v3398, %v4969
        %v4971 = vpop.f32.mrb[0].mxu0
        %v4972 = vpop.f32.mrb[0].mxu0
        %v4973 = vpop.f32.mrb[0].mxu0
        %4974 = vdwg.mxu0
        %v4975 = vmax.f32 %v4970, 0.0
        %v4976 = vpack.c.bf16 %v4975, %v4975
        %4977 = vmatprep.subr.bf16.mxu0 0
        %4978 = vmatpush1.bf16.msra.mxu0 %v3528
        %4979 = vmatprep.subr.bf16.mxu0 0
        %4980 = vmatpush1.bf16.msra.mxu0 %v3529
        %4981 = vmatprep.subr.bf16.mxu0 0
        %4982 = vmatpush1.bf16.msra.mxu0 %v3530
        %4983 = vmatprep.subr.bf16.mxu0 0
        %4984 = vmatpush1.bf16.msra.mxu0 %v3531
        %4985 = vmatprep.subr.bf16.mxu0 0
        %4986 = vmatpush1.bf16.msra.mxu0 %v3532
        %4987 = vmatprep.subr.bf16.mxu0 0
        %4988 = vmatpush1.bf16.msra.mxu0 %v3533
        %4989 = vmatprep.subr.bf16.mxu0 0
        %4990 = vmatpush1.bf16.msra.mxu0 %v3534
        %4991 = vmatprep.subr.bf16.mxu0 0
        %4992 = vmatpush1.bf16.msra.mxu0 %v3535
        %4993 = vmatprep.subr.bf16.mxu0 0
        %4994 = vmatpush1.bf16.msra.mxu0 0
        %4995 = vmatprep.subr.bf16.mxu0 0
        %4996 = vmatpush1.bf16.msra.mxu0 0
        %4997 = vmatprep.subr.bf16.mxu0 0
        %4998 = vmatpush1.bf16.msra.mxu0 0
        %4999 = vmatprep.subr.bf16.mxu0 0
        %5000 = vmatpush1.bf16.msra.mxu0 0
        %5001 = vmatprep.subr.bf16.mxu0 0
        %5002 = vmatpush1.bf16.msra.mxu0 0
        %5003 = vmatprep.subr.bf16.mxu0 0
        %5004 = vmatpush1.bf16.msra.mxu0 0
        %5005 = vmatprep.subr.bf16.mxu0 0
        %5006 = vmatpush1.bf16.msra.mxu0 0
        %5007 = vmatprep.subr.bf16.mxu0 0
        %5008 = vmatpush1.bf16.msra.mxu0 0
        %5009 = vmatprep.mubr.bf16.mxu0 0
        %5010 = vmatmul.mubr.bf16.gmra.mrb[0].mxu0 %v4976
        %v5011 = vpop.f32.mrb[0].mxu0
        %v5012 = vadd.f32 %v3494, %v5011
        %v5013 = vpop.f32.mrb[0].mxu0
        %v5014 = vpop.f32.mrb[0].mxu0
        %v5015 = vpop.f32.mrb[0].mxu0
        %5016 = vdwg.mxu0
        %v5017 = vadd.f32 %v5012, %v4933
        %5018 = vadd.xlane.f32.xlu0 %v5017
        %v5019 = vpop.xlane.xlu0 %5018
        %v5020 = vmul.f32 %v5019, 0.03125
        %v5021 = vsub.f32 %v5017, %v5020
        %v5022 = vmul.f32 %v5021, %v1391
        %v5023 = vmul.f32 %v5022, %v5022
        %5024 = vadd.xlane.f32.xlu0 %v5023
        %v5025 = vpop.xlane.xlu0 %5024
        %v5026 = vmul.f32 %v5025, 0.03125
        %v5027 = vadd.f32 %v5026, 1e-06
        %v5028 = vrsqrt.pop %v5027
        %v5029 = vmul.f32 %v5022, %v5028
        %v5030 = vmul.f32 %v5029, %v3601
        %v5031 = vadd.f32 %v5030, %v3608
        %5032 = vst [vmem:[%s3612] sm:$0xff] %v5031
        // Predicated region
        $region161: #{tpu_custom_call.1} parent=87 // pred_check
          %p5033 = pneg %p526
        $region162: #{tpu_custom_call.1} parent=87 // pred_check_branch
          %5035 = sbr.rel (%p5033) target = $region164
        $region163: #{tpu_custom_call.1} parent=87 // pred_region
          %s5036 = smul.u32 2, %s58
          %s5038 = ssub.s32 256, 256
          %5039 = vsyncadd [#allocation4], %s5038
          %s5040 = smul.addr %s5036, 128
          %s5041 = scalar_lea.hbm %s17, %s5040
          %s5042 = sshll.u32 [#allocation29], 4
          %s5043 = int_to_ptr.vmem [resolvable:$true] %s5042
          %5048 = dma.vmem_to_hbm [thread:$0]  %s5043, 256, %s5041, [#allocation4], 128, 128, 8
        $region164: #{tpu_custom_call.1} parent=87 // pred_fallthru
          _
        // Predicated region
        $region165: #{tpu_custom_call.1} parent=87 // pred_check
          %p5049 = pneg %p526
        $region166: #{tpu_custom_call.1} parent=87 // pred_check_branch
          %5051 = sbr.rel (%p5049) target = $region168
        $region167: #{tpu_custom_call.1} parent=87 // pred_region
          %5052 = dma.done [#allocation4], 256
        $region168: #{tpu_custom_call.1} parent=87 // pred_fallthru
          _
      $region88: #{tpu_custom_call.1} parent=5 // pred_fallthru
        _
      %p5053 = scmp.le.s32.totalorder 2, %s49
      // Predicated region
      $region169: #{tpu_custom_call.1} parent=5 // pred_check
        %p5054 = pneg %p5053
      $region170: #{tpu_custom_call.1} parent=5 // pred_check_branch
        %5056 = sbr.rel (%p5054) target = $region172
      $region171: #{tpu_custom_call.1} parent=5 // pred_region
        %s5057 = ssub.s32 %s49, 2
      $region172: #{tpu_custom_call.1} parent=5 // pred_fallthru
        _
    $region6: #{tpu_custom_call.1} parent=1 // loop_footer
      %s53 = sadd.s32 1, %s49
    $region7: #{tpu_custom_call.1} parent=1 // loop_footer_branch
      %48 = sbr.rel target = $region3
    $region8: #{tpu_custom_call.1} parent=1 // loop_exit
      _
    %5058 = vsyncpa [#allocation3], 1
    %s5059 = scalar_lea.sflag [#allocation3], 1
    %5060 = vsyncpa %s5059, 1
    %5061 = vsyncpa [#allocation6], 1
    %s5062 = scalar_lea.sflag [#allocation6], 1
    %5063 = vsyncpa %s5062, 1
    %5064 = vsyncpa [#allocation9], 1
    %s5065 = scalar_lea.sflag [#allocation9], 1
    %5066 = vsyncpa %s5065, 1
    %5067 = vsyncpa [#allocation12], 1
    %s5068 = scalar_lea.sflag [#allocation12], 1
    %5069 = vsyncpa %s5068, 1
    %5070 = vsyncpa [#allocation15], 1
    %s5071 = scalar_lea.sflag [#allocation15], 1
    %5072 = vsyncpa %s5071, 1
    %5073 = vsyncpa [#allocation18], 1
    %s5074 = scalar_lea.sflag [#allocation18], 1
    %5075 = vsyncpa %s5074, 1
    %5076 = vsyncpa [#allocation21], 1
    %s5077 = scalar_lea.sflag [#allocation21], 1
    %5078 = vsyncpa %s5077, 1
    %5079 = vsyncpa [#allocation24], 1
    %s5080 = scalar_lea.sflag [#allocation24], 1
    %5081 = vsyncpa %s5080, 1
    %5082 = vsyncpa [#allocation27], 1
    %s5083 = scalar_lea.sflag [#allocation27], 1
    %5084 = vsyncpa %s5083, 1
    %5085 = vsyncpa [#allocation4], 1
    %s5086 = scalar_lea.sflag [#allocation4], 1
    %5087 = vsyncpa %s5086, 1

</llo_original>
